<compile_context>
chip_gen: v7x
topology: tpu7x:2x2x1
jax: 0.10.0
libtpu: 0.0.40
codegen_flags: <defaults>
</compile_context>

<pallas_src>
import functools

import jax
import jax.numpy as jnp
from jax.experimental import pallas as pl
from jax.experimental.pallas import tpu as pltpu

K_IN = 784        # original feature dim
K_PAD = 896       # padded to a multiple of 128 for lane-dense MXU pass
H1, H2, N_CLS = 512, 256, 10
TB = 128          # batch tile: fills the MXU M dimension


def mlp_kernel(x_ref, w1_ref, b1_ref, w2_ref, b2_ref, w3_ref, b3_ref, o_ref):
    # x tile: (TB, K_PAD) f32 -> bf16 at the MXU input only
    x = x_ref[...].astype(jnp.bfloat16)

    # fc1 + relu (f32 accumulation, f32 bias/activation math)
    h1 = jnp.dot(x, w1_ref[...], preferred_element_type=jnp.float32) + b1_ref[...]
    h1 = jnp.maximum(h1, 0.0)
    # dropout(p=0.2): identity in inference mode
    # TODO(synk): training-mode dropout (Bernoulli mask via pltpu.prng_*) not
    # emitted; forward matches model.eval() semantics.

    # fc2 + relu
    h2 = jnp.dot(h1.astype(jnp.bfloat16), w2_ref[...],
                 preferred_element_type=jnp.float32) + b2_ref[...]
    h2 = jnp.maximum(h2, 0.0)

    # fc3
    logits = jnp.dot(h2.astype(jnp.bfloat16), w3_ref[...],
                     preferred_element_type=jnp.float32) + b3_ref[...]

    # log_softmax over dim=1 (last dim), max-shifted for stability
    m = jnp.max(logits, axis=-1, keepdims=True)
    shifted = logits - m
    lse = jnp.log(jnp.sum(jnp.exp(shifted), axis=-1, keepdims=True))
    o_ref[...] = shifted - lse


@functools.partial(jax.jit, static_argnames=("tb",))
def net_forward(x, w1, b1, w2, b2, w3, b3, tb=TB):
    B = x.shape[0]
    n_tiles = pl.cdiv(B, tb)
    B_pad = n_tiles * tb

    # Pad features 784 -> 896 and batch up to a multiple of tb (zeros).
    x_p = jnp.pad(x, ((0, B_pad - B), (0, K_PAD - K_IN)))

    weight_bytes = (K_PAD * H1 + H1 * H2 + H2 * N_CLS) * 2   # bf16
    bias_bytes = (H1 + H2 + N_CLS) * 4
    cost = pl.CostEstimate(
        flops=2 * B_pad * (K_PAD * H1 + H1 * H2 + H2 * N_CLS),
        transcendentals=B_pad * (N_CLS + 1),                 # exp + log per row
        bytes_accessed=B_pad * K_PAD * 4 + weight_bytes + bias_bytes
                       + B_pad * N_CLS * 4,
    )

    out_p = pl.pallas_call(
        mlp_kernel,
        out_shape=jax.ShapeDtypeStruct((B_pad, N_CLS), jnp.float32),
        grid=(n_tiles,),
        in_specs=[
            pl.BlockSpec((tb, K_PAD), lambda i: (i, 0)),     # x: walks batch
            pl.BlockSpec((K_PAD, H1), lambda i: (0, 0)),     # weights/biases:
            pl.BlockSpec((1, H1), lambda i: (0, 0)),         #   constant block,
            pl.BlockSpec((H1, H2), lambda i: (0, 0)),        #   VMEM-resident
            pl.BlockSpec((1, H2), lambda i: (0, 0)),         #   across tiles
            pl.BlockSpec((H2, N_CLS), lambda i: (0, 0)),
            pl.BlockSpec((1, N_CLS), lambda i: (0, 0)),
        ],
        out_specs=pl.BlockSpec((tb, N_CLS), lambda i: (i, 0)),
        compiler_params=pltpu.CompilerParams(
            dimension_semantics=("parallel",),               # v7x: both TCs
            vmem_limit_bytes=32 * 1024 * 1024,
        ),
        cost_estimate=cost,
    )(x_p, w1, b1, w2, b2, w3, b3)

    return out_p[:B]


def init_params(key):
    """Deterministic init mimicking PyTorch's uniform(-1/sqrt(fan_in), +...).

    Weights are stored pre-transposed as (in, out) and in bfloat16; W1 is
    zero-padded along its input dim to K_PAD. Biases stay f32 as (1, out).
    """
    def linear(k, fan_in, fan_out, pad_in=None):
        kw, kb = jax.random.split(k)
        bound = 1.0 / jnp.sqrt(fan_in)
        w = jax.random.uniform(kw, (fan_in, fan_out), jnp.float32, -bound, bound)
        if pad_in is not None and pad_in > fan_in:
            w = jnp.pad(w, ((0, pad_in - fan_in), (0, 0)))
        b = jax.random.uniform(kb, (1, fan_out), jnp.float32, -bound, bound)
        return w.astype(jnp.bfloat16), b

    k1, k2, k3 = jax.random.split(key, 3)
    w1, b1 = linear(k1, K_IN, H1, pad_in=K_PAD)
    w2, b2 = linear(k2, H1, H2)
    w3, b3 = linear(k3, H2, N_CLS)
    return w1, b1, w2, b2, w3, b3


if __name__ == "__main__":
    key = jax.random.PRNGKey(0)
    kx, kp = jax.random.split(key)

    B = 8
    x = jax.random.normal(kx, (B, K_IN), jnp.float32)
    params = init_params(kp)

    out = net_forward(x, *params)
    jax.block_until_ready(out)

    # sanity: log_softmax rows should sum (in prob space) to ~1
    row_sums = jnp.sum(jnp.exp(out), axis=-1)
    assert out.shape == (B, N_CLS)
    assert bool(jnp.allclose(row_sums, 1.0, atol=1e-4))
    assert bool(jnp.all(jnp.isfinite(out)))

    print("KERNEL_OK")
</pallas_src>

<mosaic_0001>
module attributes {stable_mosaic.version = 11 : i64} {
  func.func @mlp_kernel(%arg0: i32, %arg1: memref<128x896xf32, #tpu.memory_space<vmem>>, %arg2: memref<896x512xbf16, #tpu.memory_space<vmem>>, %arg3: memref<1x512xf32, #tpu.memory_space<vmem>>, %arg4: memref<512x256xbf16, #tpu.memory_space<vmem>>, %arg5: memref<1x256xf32, #tpu.memory_space<vmem>>, %arg6: memref<256x10xbf16, #tpu.memory_space<vmem>>, %arg7: memref<1x10xf32, #tpu.memory_space<vmem>>, %arg8: memref<128x10xf32, #tpu.memory_space<vmem>>) attributes {dimension_semantics = [#tpu.dimension_semantics<parallel>], iteration_bounds = array<i64: 1>, scalar_prefetch = 0 : i64, scratch_operands = 0 : i64, tpu.core_type = #tpu.core_type<tc>, window_params = [{transform_indices = @transform_0, window_bounds = array<i64: 128, 896>}, {pipeline_mode = #tpu.pipeline_mode<synchronous>, transform_indices = @transform_1, window_bounds = array<i64: 896, 512>}, {pipeline_mode = #tpu.pipeline_mode<synchronous>, transform_indices = @transform_2, window_bounds = array<i64: 1, 512>}, {pipeline_mode = #tpu.pipeline_mode<synchronous>, transform_indices = @transform_3, window_bounds = array<i64: 512, 256>}, {pipeline_mode = #tpu.pipeline_mode<synchronous>, transform_indices = @transform_4, window_bounds = array<i64: 1, 256>}, {pipeline_mode = #tpu.pipeline_mode<synchronous>, transform_indices = @transform_5, window_bounds = array<i64: 256, 10>}, {pipeline_mode = #tpu.pipeline_mode<synchronous>, transform_indices = @transform_6, window_bounds = array<i64: 1, 10>}, {transform_indices = @transform_7, window_bounds = array<i64: 128, 10>}]} {
    %c0 = arith.constant 0 : index
    %c0_0 = arith.constant 0 : index
    %0 = vector.load %arg1[%c0, %c0_0] : memref<128x896xf32, #tpu.memory_space<vmem>>, vector<128x896xf32>
    %1 = arith.truncf %0 : vector<128x896xf32> to vector<128x896xbf16>
    %c0_1 = arith.constant 0 : index
    %c0_2 = arith.constant 0 : index
    %2 = vector.load %arg2[%c0_1, %c0_2] : memref<896x512xbf16, #tpu.memory_space<vmem>>, vector<896x512xbf16>
    %cst = arith.constant dense<0.000000e+00> : vector<128x512xf32>
    %3 = tpu.matmul %1, %2, %cst {dimension_numbers = #tpu.dot_dimension_numbers<[1], [0], [0], [1], [0, 0, 1, 1], [], []>} : vector<128x896xbf16>, vector<896x512xbf16>, vector<128x512xf32> -> vector<128x512xf32>
    %c0_3 = arith.constant 0 : index
    %c0_4 = arith.constant 0 : index
    %4 = vector.load %arg3[%c0_3, %c0_4] : memref<1x512xf32, #tpu.memory_space<vmem>>, vector<1x512xf32>
    %5 = vector.broadcast %4 : vector<1x512xf32> to vector<128x512xf32>
    %6 = arith.addf %3, %5 : vector<128x512xf32>
    %cst_5 = arith.constant 0.000000e+00 : f32
    %7 = vector.broadcast %cst_5 : f32 to vector<128x512xf32>
    %8 = arith.maximumf %6, %7 : vector<128x512xf32>
    %9 = arith.truncf %8 : vector<128x512xf32> to vector<128x512xbf16>
    %c0_6 = arith.constant 0 : index
    %c0_7 = arith.constant 0 : index
    %10 = vector.load %arg4[%c0_6, %c0_7] : memref<512x256xbf16, #tpu.memory_space<vmem>>, vector<512x256xbf16>
    %cst_8 = arith.constant dense<0.000000e+00> : vector<128x256xf32>
    %11 = tpu.matmul %9, %10, %cst_8 {dimension_numbers = #tpu.dot_dimension_numbers<[1], [0], [0], [1], [0, 0, 1, 1], [], []>} : vector<128x512xbf16>, vector<512x256xbf16>, vector<128x256xf32> -> vector<128x256xf32>
    %c0_9 = arith.constant 0 : index
    %c0_10 = arith.constant 0 : index
    %12 = vector.load %arg5[%c0_9, %c0_10] : memref<1x256xf32, #tpu.memory_space<vmem>>, vector<1x256xf32>
    %13 = vector.broadcast %12 : vector<1x256xf32> to vector<128x256xf32>
    %14 = arith.addf %11, %13 : vector<128x256xf32>
    %cst_11 = arith.constant 0.000000e+00 : f32
    %15 = vector.broadcast %cst_11 : f32 to vector<128x256xf32>
    %16 = arith.maximumf %14, %15 : vector<128x256xf32>
    %17 = arith.truncf %16 : vector<128x256xf32> to vector<128x256xbf16>
    %c0_12 = arith.constant 0 : index
    %c0_13 = arith.constant 0 : index
    %18 = vector.load %arg6[%c0_12, %c0_13] : memref<256x10xbf16, #tpu.memory_space<vmem>>, vector<256x10xbf16>
    %cst_14 = arith.constant dense<0.000000e+00> : vector<128x10xf32>
    %19 = tpu.matmul %17, %18, %cst_14 {dimension_numbers = #tpu.dot_dimension_numbers<[1], [0], [0], [1], [0, 0, 1, 1], [], []>} : vector<128x256xbf16>, vector<256x10xbf16>, vector<128x10xf32> -> vector<128x10xf32>
    %c0_15 = arith.constant 0 : index
    %c0_16 = arith.constant 0 : index
    %20 = vector.load %arg7[%c0_15, %c0_16] : memref<1x10xf32, #tpu.memory_space<vmem>>, vector<1x10xf32>
    %21 = vector.broadcast %20 : vector<1x10xf32> to vector<128x10xf32>
    %22 = arith.addf %19, %21 : vector<128x10xf32>
    %cst_17 = arith.constant dense<0xFF800000> : vector<128xf32>
    %23 = vector.multi_reduction <maximumf>, %22, %cst_17 [1] : vector<128x10xf32> to vector<128xf32>
    %24 = vector.shape_cast %23 : vector<128xf32> to vector<128x1xf32>
    %25 = vector.broadcast %24 : vector<128x1xf32> to vector<128x10xf32>
    %26 = arith.subf %22, %25 : vector<128x10xf32>
    %27 = math.exp %26 : vector<128x10xf32>
    %cst_18 = arith.constant dense<0.000000e+00> : vector<128xf32>
    %28 = vector.multi_reduction <add>, %27, %cst_18 [1] : vector<128x10xf32> to vector<128xf32>
    %29 = vector.shape_cast %28 : vector<128xf32> to vector<128x1xf32>
    %30 = math.log %29 : vector<128x1xf32>
    %31 = vector.broadcast %30 : vector<128x1xf32> to vector<128x10xf32>
    %32 = arith.subf %26, %31 : vector<128x10xf32>
    %c0_19 = arith.constant 0 : index
    %c0_20 = arith.constant 0 : index
    %33 = vector.load %arg8[%c0_19, %c0_20] : memref<128x10xf32, #tpu.memory_space<vmem>>, vector<128x10xf32>
    tpu.vector_store %arg8[%c0_19, %c0_20], %32 {strides = array<i32>} : memref<128x10xf32, #tpu.memory_space<vmem>>, vector<128x10xf32>,
    return
  }
  func.func @transform_0(%arg0: i32) -> (i32, i32) {
    %c0_i32 = arith.constant 0 : i32
    %c0_i32_0 = arith.constant 0 : i32
    return %arg0, %c0_i32 : i32, i32
  }
  func.func @transform_1(%arg0: i32) -> (i32, i32) {
    %c0_i32 = arith.constant 0 : i32
    %c0_i32_0 = arith.constant 0 : i32
    %c0_i32_1 = arith.constant 0 : i32
    return %c0_i32, %c0_i32_0 : i32, i32
  }
  func.func @transform_2(%arg0: i32) -> (i32, i32) {
    %c0_i32 = arith.constant 0 : i32
    %c0_i32_0 = arith.constant 0 : i32
    %c0_i32_1 = arith.constant 0 : i32
    return %c0_i32, %c0_i32_0 : i32, i32
  }
  func.func @transform_3(%arg0: i32) -> (i32, i32) {
    %c0_i32 = arith.constant 0 : i32
    %c0_i32_0 = arith.constant 0 : i32
    %c0_i32_1 = arith.constant 0 : i32
    return %c0_i32, %c0_i32_0 : i32, i32
  }
  func.func @transform_4(%arg0: i32) -> (i32, i32) {
    %c0_i32 = arith.constant 0 : i32
    %c0_i32_0 = arith.constant 0 : i32
    %c0_i32_1 = arith.constant 0 : i32
    return %c0_i32, %c0_i32_0 : i32, i32
  }
  func.func @transform_5(%arg0: i32) -> (i32, i32) {
    %c0_i32 = arith.constant 0 : i32
    %c0_i32_0 = arith.constant 0 : i32
    %c0_i32_1 = arith.constant 0 : i32
    return %c0_i32, %c0_i32_0 : i32, i32
  }
  func.func @transform_6(%arg0: i32) -> (i32, i32) {
    %c0_i32 = arith.constant 0 : i32
    %c0_i32_0 = arith.constant 0 : i32
    %c0_i32_1 = arith.constant 0 : i32
    return %c0_i32, %c0_i32_0 : i32, i32
  }
  func.func @transform_7(%arg0: i32) -> (i32, i32) {
    %c0_i32 = arith.constant 0 : i32
    %c0_i32_0 = arith.constant 0 : i32
    return %arg0, %c0_i32 : i32, i32
  }
}

</mosaic_0001>

<llo_original>
// kernel: net_forward.1
$region0: #{net_forward.1}
  #allocation0 [shape = 'u32[]', space=smem, size = 0x4, offset = 0x4, fixed_abs, tag = 'smem constant byte address 0x4 - core index']
  #allocation1 [shape = 'u32[144,128]{1,0:T(1,128)}', space=vmem, size = 0x12000, scoped, tag = 'internal scratch']
  %s0 = inlined_call_operand.vmem [shape: f32[128,896], index: 0, kind: input, shape index: {}]
  %s1 = inlined_call_operand.hbm [shape: bf16[896,512], index: 1, kind: input, shape index: {}]
  %s2 = inlined_call_operand.vmem [shape: f32[1,512], index: 2, kind: input, shape index: {}]
  %s3 = inlined_call_operand.vmem [shape: bf16[512,256], index: 3, kind: input, shape index: {}]
  %s4 = inlined_call_operand.vmem [shape: f32[1,256], index: 4, kind: input, shape index: {}]
  %s5 = inlined_call_operand.vmem [shape: bf16[256,10], index: 5, kind: input, shape index: {}]
  %s6 = inlined_call_operand.vmem [shape: f32[1,10], index: 6, kind: input, shape index: {}]
  %s7 = inlined_call_operand.vmem [shape: f32[128,10], index: 7, kind: output, shape index: {}]
  %s8 = sld [smem:[#allocation0]]
  $region42: #{net_forward.1} parent=0
    _
  %s10 = ssub.s32 1, %s8
  %s11 = scalar_select 0, %s10, %s8
  $region1: #{net_forward.1} parent=0
    #allocation2 [shape = 'u8[917504]{0}', space=vmem, size = 0xe0000, scoped, tag = 'input window, operand 1, single buffered']
    #allocation3 [shape = 's32[1]{0}', space=sflag, size = 0x4, scoped, tag = 'scoped memory for net_forward.1']
    %12 = vsyncpa [#allocation3], 0
    // Predicated region
    $region2: #{net_forward.1} parent=1 // pred_check
      _
    $region3: #{net_forward.1} parent=1 // pred_check_branch
      %14 = sbr.rel (0) target = $region5
    $region4: #{net_forward.1} parent=1 // pred_region
      _
    $region5: #{net_forward.1} parent=1 // pred_fallthru
      _
    // Predicated region
    $region6: #{net_forward.1} parent=1 // pred_check
      _
    $region7: #{net_forward.1} parent=1 // pred_check_branch
      %16 = sbr.rel (0) target = $region9
    $region8: #{net_forward.1} parent=1 // pred_region
      %s18 = ssub.s32 28672, 28672
      %19 = vsyncadd [#allocation3], %s18
      %s20 = sshll.u32 [#allocation2], 4
      %s21 = int_to_ptr.vmem [resolvable:$true] %s20
      %26 = dma.hbm_to_vmem [thread:$0]  %s1, 28672, %s21, [#allocation3], 256, 256, 16
    $region9: #{net_forward.1} parent=1 // pred_fallthru
      _
    // Predicated region
    $region10: #{net_forward.1} parent=1 // pred_check
      _
    $region11: #{net_forward.1} parent=1 // pred_check_branch
      %28 = sbr.rel (0) target = $region13
    $region12: #{net_forward.1} parent=1 // pred_region
      _
    $region13: #{net_forward.1} parent=1 // pred_fallthru
      _
    // Predicated region
    $region14: #{net_forward.1} parent=1 // pred_check
      _
    $region15: #{net_forward.1} parent=1 // pred_check_branch
      %30 = sbr.rel (0) target = $region17
    $region16: #{net_forward.1} parent=1 // pred_region
      _
    $region17: #{net_forward.1} parent=1 // pred_fallthru
      _
    // Predicated region
    $region18: #{net_forward.1} parent=1 // pred_check
      _
    $region19: #{net_forward.1} parent=1 // pred_check_branch
      %32 = sbr.rel (0) target = $region21
    $region20: #{net_forward.1} parent=1 // pred_region
      _
    $region21: #{net_forward.1} parent=1 // pred_fallthru
      _
    // Predicated region
    $region22: #{net_forward.1} parent=1 // pred_check
      _
    $region23: #{net_forward.1} parent=1 // pred_check_branch
      %34 = sbr.rel (0) target = $region25
    $region24: #{net_forward.1} parent=1 // pred_region
      _
    $region25: #{net_forward.1} parent=1 // pred_fallthru
      _
    // Predicated region
    $region26: #{net_forward.1} parent=1 // pred_check
      _
    $region27: #{net_forward.1} parent=1 // pred_check_branch
      %36 = sbr.rel (0) target = $region29
    $region28: #{net_forward.1} parent=1 // pred_region
      _
    $region29: #{net_forward.1} parent=1 // pred_fallthru
      _
    // Predicated region
    $region30: #{net_forward.1} parent=1 // pred_check
      _
    $region31: #{net_forward.1} parent=1 // pred_check_branch
      %38 = sbr.rel (0) target = $region33
    $region32: #{net_forward.1} parent=1 // pred_region
      %39 = dma.done [#allocation3], 28672
    $region33: #{net_forward.1} parent=1 // pred_fallthru
      _
    %v41 = vld [vmem:[%s0] sm:$0xff]
    %v42 = vld [vmem:[%s0 + $0x8] sm:$0xff]
    %v43 = vld [vmem:[%s0 + $0x10] sm:$0xff]
    %v44 = vld [vmem:[%s0 + $0x18] sm:$0xff]
    %v45 = vld [vmem:[%s0 + $0x20] sm:$0xff]
    %v46 = vld [vmem:[%s0 + $0x28] sm:$0xff]
    %v47 = vld [vmem:[%s0 + $0x30] sm:$0xff]
    %v48 = vld [vmem:[%s0 + $0x38] sm:$0xff]
    %v49 = vld [vmem:[%s0 + $0x40] sm:$0xff]
    %v50 = vld [vmem:[%s0 + $0x48] sm:$0xff]
    %v51 = vld [vmem:[%s0 + $0x50] sm:$0xff]
    %v52 = vld [vmem:[%s0 + $0x58] sm:$0xff]
    %v53 = vld [vmem:[%s0 + $0x60] sm:$0xff]
    %v54 = vld [vmem:[%s0 + $0x68] sm:$0xff]
    %v55 = vld [vmem:[%s0 + $0x70] sm:$0xff]
    %v56 = vld [vmem:[%s0 + $0x78] sm:$0xff]
    %v57 = vld [vmem:[%s0 + $0x80] sm:$0xff]
    %v58 = vld [vmem:[%s0 + $0x88] sm:$0xff]
    %v59 = vld [vmem:[%s0 + $0x90] sm:$0xff]
    %v60 = vld [vmem:[%s0 + $0x98] sm:$0xff]
    %v61 = vld [vmem:[%s0 + $0xa0] sm:$0xff]
    %v62 = vld [vmem:[%s0 + $0xa8] sm:$0xff]
    %v63 = vld [vmem:[%s0 + $0xb0] sm:$0xff]
    %v64 = vld [vmem:[%s0 + $0xb8] sm:$0xff]
    %v65 = vld [vmem:[%s0 + $0xc0] sm:$0xff]
    %v66 = vld [vmem:[%s0 + $0xc8] sm:$0xff]
    %v67 = vld [vmem:[%s0 + $0xd0] sm:$0xff]
    %v68 = vld [vmem:[%s0 + $0xd8] sm:$0xff]
    %v69 = vld [vmem:[%s0 + $0xe0] sm:$0xff]
    %v70 = vld [vmem:[%s0 + $0xe8] sm:$0xff]
    %v71 = vld [vmem:[%s0 + $0xf0] sm:$0xff]
    %v72 = vld [vmem:[%s0 + $0xf8] sm:$0xff]
    %v73 = vld [vmem:[%s0 + $0x100] sm:$0xff]
    %v74 = vld [vmem:[%s0 + $0x108] sm:$0xff]
    %v75 = vld [vmem:[%s0 + $0x110] sm:$0xff]
    %v76 = vld [vmem:[%s0 + $0x118] sm:$0xff]
    %v77 = vld [vmem:[%s0 + $0x120] sm:$0xff]
    %v78 = vld [vmem:[%s0 + $0x128] sm:$0xff]
    %v79 = vld [vmem:[%s0 + $0x130] sm:$0xff]
    %v80 = vld [vmem:[%s0 + $0x138] sm:$0xff]
    %v81 = vld [vmem:[%s0 + $0x140] sm:$0xff]
    %v82 = vld [vmem:[%s0 + $0x148] sm:$0xff]
    %v83 = vld [vmem:[%s0 + $0x150] sm:$0xff]
    %v84 = vld [vmem:[%s0 + $0x158] sm:$0xff]
    %v85 = vld [vmem:[%s0 + $0x160] sm:$0xff]
    %v86 = vld [vmem:[%s0 + $0x168] sm:$0xff]
    %v87 = vld [vmem:[%s0 + $0x170] sm:$0xff]
    %v88 = vld [vmem:[%s0 + $0x178] sm:$0xff]
    %v89 = vld [vmem:[%s0 + $0x180] sm:$0xff]
    %v90 = vld [vmem:[%s0 + $0x188] sm:$0xff]
    %v91 = vld [vmem:[%s0 + $0x190] sm:$0xff]
    %v92 = vld [vmem:[%s0 + $0x198] sm:$0xff]
    %v93 = vld [vmem:[%s0 + $0x1a0] sm:$0xff]
    %v94 = vld [vmem:[%s0 + $0x1a8] sm:$0xff]
    %v95 = vld [vmem:[%s0 + $0x1b0] sm:$0xff]
    %v96 = vld [vmem:[%s0 + $0x1b8] sm:$0xff]
    %v97 = vld [vmem:[%s0 + $0x1c0] sm:$0xff]
    %v98 = vld [vmem:[%s0 + $0x1c8] sm:$0xff]
    %v99 = vld [vmem:[%s0 + $0x1d0] sm:$0xff]
    %v100 = vld [vmem:[%s0 + $0x1d8] sm:$0xff]
    %v101 = vld [vmem:[%s0 + $0x1e0] sm:$0xff]
    %v102 = vld [vmem:[%s0 + $0x1e8] sm:$0xff]
    %v103 = vld [vmem:[%s0 + $0x1f0] sm:$0xff]
    %v104 = vld [vmem:[%s0 + $0x1f8] sm:$0xff]
    %v105 = vld [vmem:[%s0 + $0x200] sm:$0xff]
    %v106 = vld [vmem:[%s0 + $0x208] sm:$0xff]
    %v107 = vld [vmem:[%s0 + $0x210] sm:$0xff]
    %v108 = vld [vmem:[%s0 + $0x218] sm:$0xff]
    %v109 = vld [vmem:[%s0 + $0x220] sm:$0xff]
    %v110 = vld [vmem:[%s0 + $0x228] sm:$0xff]
    %v111 = vld [vmem:[%s0 + $0x230] sm:$0xff]
    %v112 = vld [vmem:[%s0 + $0x238] sm:$0xff]
    %v113 = vld [vmem:[%s0 + $0x240] sm:$0xff]
    %v114 = vld [vmem:[%s0 + $0x248] sm:$0xff]
    %v115 = vld [vmem:[%s0 + $0x250] sm:$0xff]
    %v116 = vld [vmem:[%s0 + $0x258] sm:$0xff]
    %v117 = vld [vmem:[%s0 + $0x260] sm:$0xff]
    %v118 = vld [vmem:[%s0 + $0x268] sm:$0xff]
    %v119 = vld [vmem:[%s0 + $0x270] sm:$0xff]
    %v120 = vld [vmem:[%s0 + $0x278] sm:$0xff]
    %v121 = vld [vmem:[%s0 + $0x280] sm:$0xff]
    %v122 = vld [vmem:[%s0 + $0x288] sm:$0xff]
    %v123 = vld [vmem:[%s0 + $0x290] sm:$0xff]
    %v124 = vld [vmem:[%s0 + $0x298] sm:$0xff]
    %v125 = vld [vmem:[%s0 + $0x2a0] sm:$0xff]
    %v126 = vld [vmem:[%s0 + $0x2a8] sm:$0xff]
    %v127 = vld [vmem:[%s0 + $0x2b0] sm:$0xff]
    %v128 = vld [vmem:[%s0 + $0x2b8] sm:$0xff]
    %v129 = vld [vmem:[%s0 + $0x2c0] sm:$0xff]
    %v130 = vld [vmem:[%s0 + $0x2c8] sm:$0xff]
    %v131 = vld [vmem:[%s0 + $0x2d0] sm:$0xff]
    %v132 = vld [vmem:[%s0 + $0x2d8] sm:$0xff]
    %v133 = vld [vmem:[%s0 + $0x2e0] sm:$0xff]
    %v134 = vld [vmem:[%s0 + $0x2e8] sm:$0xff]
    %v135 = vld [vmem:[%s0 + $0x2f0] sm:$0xff]
    %v136 = vld [vmem:[%s0 + $0x2f8] sm:$0xff]
    %v137 = vld [vmem:[%s0 + $0x300] sm:$0xff]
    %v138 = vld [vmem:[%s0 + $0x308] sm:$0xff]
    %v139 = vld [vmem:[%s0 + $0x310] sm:$0xff]
    %v140 = vld [vmem:[%s0 + $0x318] sm:$0xff]
    %v141 = vld [vmem:[%s0 + $0x320] sm:$0xff]
    %v142 = vld [vmem:[%s0 + $0x328] sm:$0xff]
    %v143 = vld [vmem:[%s0 + $0x330] sm:$0xff]
    %v144 = vld [vmem:[%s0 + $0x338] sm:$0xff]
    %v145 = vld [vmem:[%s0 + $0x340] sm:$0xff]
    %v146 = vld [vmem:[%s0 + $0x348] sm:$0xff]
    %v147 = vld [vmem:[%s0 + $0x350] sm:$0xff]
    %v148 = vld [vmem:[%s0 + $0x358] sm:$0xff]
    %v149 = vld [vmem:[%s0 + $0x360] sm:$0xff]
    %v150 = vld [vmem:[%s0 + $0x368] sm:$0xff]
    %v151 = vld [vmem:[%s0 + $0x370] sm:$0xff]
    %v152 = vld [vmem:[%s0 + $0x378] sm:$0xff]
    %v153 = vpack.c.bf16 %v48, %v41
    %v154 = vpack.c.bf16 %v49, %v42
    %v155 = vpack.c.bf16 %v50, %v43
    %v156 = vpack.c.bf16 %v51, %v44
    %v157 = vpack.c.bf16 %v52, %v45
    %v158 = vpack.c.bf16 %v53, %v46
    %v159 = vpack.c.bf16 %v54, %v47
    %v160 = vpack.c.bf16 %v62, %v55
    %v161 = vpack.c.bf16 %v63, %v56
    %v162 = vpack.c.bf16 %v64, %v57
    %v163 = vpack.c.bf16 %v65, %v58
    %v164 = vpack.c.bf16 %v66, %v59
    %v165 = vpack.c.bf16 %v67, %v60
    %v166 = vpack.c.bf16 %v68, %v61
    %v167 = vpack.c.bf16 %v76, %v69
    %v168 = vpack.c.bf16 %v77, %v70
    %v169 = vpack.c.bf16 %v78, %v71
    %v170 = vpack.c.bf16 %v79, %v72
    %v171 = vpack.c.bf16 %v80, %v73
    %v172 = vpack.c.bf16 %v81, %v74
    %v173 = vpack.c.bf16 %v82, %v75
    %v174 = vpack.c.bf16 %v90, %v83
    %v175 = vpack.c.bf16 %v91, %v84
    %v176 = vpack.c.bf16 %v92, %v85
    %v177 = vpack.c.bf16 %v93, %v86
    %v178 = vpack.c.bf16 %v94, %v87
    %v179 = vpack.c.bf16 %v95, %v88
    %v180 = vpack.c.bf16 %v96, %v89
    %v181 = vpack.c.bf16 %v104, %v97
    %v182 = vpack.c.bf16 %v105, %v98
    %v183 = vpack.c.bf16 %v106, %v99
    %v184 = vpack.c.bf16 %v107, %v100
    %v185 = vpack.c.bf16 %v108, %v101
    %v186 = vpack.c.bf16 %v109, %v102
    %v187 = vpack.c.bf16 %v110, %v103
    %v188 = vpack.c.bf16 %v118, %v111
    %v189 = vpack.c.bf16 %v119, %v112
    %v190 = vpack.c.bf16 %v120, %v113
    %v191 = vpack.c.bf16 %v121, %v114
    %v192 = vpack.c.bf16 %v122, %v115
    %v193 = vpack.c.bf16 %v123, %v116
    %v194 = vpack.c.bf16 %v124, %v117
    %v195 = vpack.c.bf16 %v132, %v125
    %v196 = vpack.c.bf16 %v133, %v126
    %v197 = vpack.c.bf16 %v134, %v127
    %v198 = vpack.c.bf16 %v135, %v128
    %v199 = vpack.c.bf16 %v136, %v129
    %v200 = vpack.c.bf16 %v137, %v130
    %v201 = vpack.c.bf16 %v138, %v131
    %v202 = vpack.c.bf16 %v146, %v139
    %v203 = vpack.c.bf16 %v147, %v140
    %v204 = vpack.c.bf16 %v148, %v141
    %v205 = vpack.c.bf16 %v149, %v142
    %v206 = vpack.c.bf16 %v150, %v143
    %v207 = vpack.c.bf16 %v151, %v144
    %v208 = vpack.c.bf16 %v152, %v145
    %v209 = vld [vmem:[#allocation2] sm:$0xff]
    %v210 = vld [vmem:[#allocation2 + $0x8] sm:$0xff]
    %v211 = vld [vmem:[#allocation2 + $0x10] sm:$0xff]
    %v212 = vld [vmem:[#allocation2 + $0x18] sm:$0xff]
    %v213 = vld [vmem:[#allocation2 + $0x20] sm:$0xff]
    %v214 = vld [vmem:[#allocation2 + $0x28] sm:$0xff]
    %v215 = vld [vmem:[#allocation2 + $0x30] sm:$0xff]
    %v216 = vld [vmem:[#allocation2 + $0x38] sm:$0xff]
    %v217 = vld [vmem:[#allocation2 + $0x40] sm:$0xff]
    %v218 = vld [vmem:[#allocation2 + $0x48] sm:$0xff]
    %v219 = vld [vmem:[#allocation2 + $0x50] sm:$0xff]
    %v220 = vld [vmem:[#allocation2 + $0x58] sm:$0xff]
    %v221 = vld [vmem:[#allocation2 + $0x60] sm:$0xff]
    %v222 = vld [vmem:[#allocation2 + $0x68] sm:$0xff]
    %v223 = vld [vmem:[#allocation2 + $0x70] sm:$0xff]
    %v224 = vld [vmem:[#allocation2 + $0x78] sm:$0xff]
    %v225 = vld [vmem:[#allocation2 + $0x80] sm:$0xff]
    %v226 = vld [vmem:[#allocation2 + $0x88] sm:$0xff]
    %v227 = vld [vmem:[#allocation2 + $0x90] sm:$0xff]
    %v228 = vld [vmem:[#allocation2 + $0x98] sm:$0xff]
    %v229 = vld [vmem:[#allocation2 + $0xa0] sm:$0xff]
    %v230 = vld [vmem:[#allocation2 + $0xa8] sm:$0xff]
    %v231 = vld [vmem:[#allocation2 + $0xb0] sm:$0xff]
    %v232 = vld [vmem:[#allocation2 + $0xb8] sm:$0xff]
    %v233 = vld [vmem:[#allocation2 + $0xc0] sm:$0xff]
    %v234 = vld [vmem:[#allocation2 + $0xc8] sm:$0xff]
    %v235 = vld [vmem:[#allocation2 + $0xd0] sm:$0xff]
    %v236 = vld [vmem:[#allocation2 + $0xd8] sm:$0xff]
    %v237 = vld [vmem:[#allocation2 + $0xe0] sm:$0xff]
    %v238 = vld [vmem:[#allocation2 + $0xe8] sm:$0xff]
    %v239 = vld [vmem:[#allocation2 + $0xf0] sm:$0xff]
    %v240 = vld [vmem:[#allocation2 + $0xf8] sm:$0xff]
    %v241 = vld [vmem:[#allocation2 + $0x100] sm:$0xff]
    %v242 = vld [vmem:[#allocation2 + $0x108] sm:$0xff]
    %v243 = vld [vmem:[#allocation2 + $0x110] sm:$0xff]
    %v244 = vld [vmem:[#allocation2 + $0x118] sm:$0xff]
    %v245 = vld [vmem:[#allocation2 + $0x120] sm:$0xff]
    %v246 = vld [vmem:[#allocation2 + $0x128] sm:$0xff]
    %v247 = vld [vmem:[#allocation2 + $0x130] sm:$0xff]
    %v248 = vld [vmem:[#allocation2 + $0x138] sm:$0xff]
    %v249 = vld [vmem:[#allocation2 + $0x140] sm:$0xff]
    %v250 = vld [vmem:[#allocation2 + $0x148] sm:$0xff]
    %v251 = vld [vmem:[#allocation2 + $0x150] sm:$0xff]
    %v252 = vld [vmem:[#allocation2 + $0x158] sm:$0xff]
    %v253 = vld [vmem:[#allocation2 + $0x160] sm:$0xff]
    %v254 = vld [vmem:[#allocation2 + $0x168] sm:$0xff]
    %v255 = vld [vmem:[#allocation2 + $0x170] sm:$0xff]
    %v256 = vld [vmem:[#allocation2 + $0x178] sm:$0xff]
    %v257 = vld [vmem:[#allocation2 + $0x180] sm:$0xff]
    %v258 = vld [vmem:[#allocation2 + $0x188] sm:$0xff]
    %v259 = vld [vmem:[#allocation2 + $0x190] sm:$0xff]
    %v260 = vld [vmem:[#allocation2 + $0x198] sm:$0xff]
    %v261 = vld [vmem:[#allocation2 + $0x1a0] sm:$0xff]
    %v262 = vld [vmem:[#allocation2 + $0x1a8] sm:$0xff]
    %v263 = vld [vmem:[#allocation2 + $0x1b0] sm:$0xff]
    %v264 = vld [vmem:[#allocation2 + $0x1b8] sm:$0xff]
    %v265 = vld [vmem:[#allocation2 + $0x1c0] sm:$0xff]
    %v266 = vld [vmem:[#allocation2 + $0x1c8] sm:$0xff]
    %v267 = vld [vmem:[#allocation2 + $0x1d0] sm:$0xff]
    %v268 = vld [vmem:[#allocation2 + $0x1d8] sm:$0xff]
    %v269 = vld [vmem:[#allocation2 + $0x1e0] sm:$0xff]
    %v270 = vld [vmem:[#allocation2 + $0x1e8] sm:$0xff]
    %v271 = vld [vmem:[#allocation2 + $0x1f0] sm:$0xff]
    %v272 = vld [vmem:[#allocation2 + $0x1f8] sm:$0xff]
    %v273 = vld [vmem:[#allocation2 + $0x200] sm:$0xff]
    %v274 = vld [vmem:[#allocation2 + $0x208] sm:$0xff]
    %v275 = vld [vmem:[#allocation2 + $0x210] sm:$0xff]
    %v276 = vld [vmem:[#allocation2 + $0x218] sm:$0xff]
    %v277 = vld [vmem:[#allocation2 + $0x220] sm:$0xff]
    %v278 = vld [vmem:[#allocation2 + $0x228] sm:$0xff]
    %v279 = vld [vmem:[#allocation2 + $0x230] sm:$0xff]
    %v280 = vld [vmem:[#allocation2 + $0x238] sm:$0xff]
    %v281 = vld [vmem:[#allocation2 + $0x240] sm:$0xff]
    %v282 = vld [vmem:[#allocation2 + $0x248] sm:$0xff]
    %v283 = vld [vmem:[#allocation2 + $0x250] sm:$0xff]
    %v284 = vld [vmem:[#allocation2 + $0x258] sm:$0xff]
    %v285 = vld [vmem:[#allocation2 + $0x260] sm:$0xff]
    %v286 = vld [vmem:[#allocation2 + $0x268] sm:$0xff]
    %v287 = vld [vmem:[#allocation2 + $0x270] sm:$0xff]
    %v288 = vld [vmem:[#allocation2 + $0x278] sm:$0xff]
    %v289 = vld [vmem:[#allocation2 + $0x280] sm:$0xff]
    %v290 = vld [vmem:[#allocation2 + $0x288] sm:$0xff]
    %v291 = vld [vmem:[#allocation2 + $0x290] sm:$0xff]
    %v292 = vld [vmem:[#allocation2 + $0x298] sm:$0xff]
    %v293 = vld [vmem:[#allocation2 + $0x2a0] sm:$0xff]
    %v294 = vld [vmem:[#allocation2 + $0x2a8] sm:$0xff]
    %v295 = vld [vmem:[#allocation2 + $0x2b0] sm:$0xff]
    %v296 = vld [vmem:[#allocation2 + $0x2b8] sm:$0xff]
    %v297 = vld [vmem:[#allocation2 + $0x2c0] sm:$0xff]
    %v298 = vld [vmem:[#allocation2 + $0x2c8] sm:$0xff]
    %v299 = vld [vmem:[#allocation2 + $0x2d0] sm:$0xff]
    %v300 = vld [vmem:[#allocation2 + $0x2d8] sm:$0xff]
    %v301 = vld [vmem:[#allocation2 + $0x2e0] sm:$0xff]
    %v302 = vld [vmem:[#allocation2 + $0x2e8] sm:$0xff]
    %v303 = vld [vmem:[#allocation2 + $0x2f0] sm:$0xff]
    %v304 = vld [vmem:[#allocation2 + $0x2f8] sm:$0xff]
    %v305 = vld [vmem:[#allocation2 + $0x300] sm:$0xff]
    %v306 = vld [vmem:[#allocation2 + $0x308] sm:$0xff]
    %v307 = vld [vmem:[#allocation2 + $0x310] sm:$0xff]
    %v308 = vld [vmem:[#allocation2 + $0x318] sm:$0xff]
    %v309 = vld [vmem:[#allocation2 + $0x320] sm:$0xff]
    %v310 = vld [vmem:[#allocation2 + $0x328] sm:$0xff]
    %v311 = vld [vmem:[#allocation2 + $0x330] sm:$0xff]
    %v312 = vld [vmem:[#allocation2 + $0x338] sm:$0xff]
    %v313 = vld [vmem:[#allocation2 + $0x340] sm:$0xff]
    %v314 = vld [vmem:[#allocation2 + $0x348] sm:$0xff]
    %v315 = vld [vmem:[#allocation2 + $0x350] sm:$0xff]
    %v316 = vld [vmem:[#allocation2 + $0x358] sm:$0xff]
    %v317 = vld [vmem:[#allocation2 + $0x360] sm:$0xff]
    %v318 = vld [vmem:[#allocation2 + $0x368] sm:$0xff]
    %v319 = vld [vmem:[#allocation2 + $0x370] sm:$0xff]
    %v320 = vld [vmem:[#allocation2 + $0x378] sm:$0xff]
    %v321 = vld [vmem:[#allocation2 + $0x380] sm:$0xff]
    %v322 = vld [vmem:[#allocation2 + $0x388] sm:$0xff]
    %v323 = vld [vmem:[#allocation2 + $0x390] sm:$0xff]
    %v324 = vld [vmem:[#allocation2 + $0x398] sm:$0xff]
    %v325 = vld [vmem:[#allocation2 + $0x3a0] sm:$0xff]
    %v326 = vld [vmem:[#allocation2 + $0x3a8] sm:$0xff]
    %v327 = vld [vmem:[#allocation2 + $0x3b0] sm:$0xff]
    %v328 = vld [vmem:[#allocation2 + $0x3b8] sm:$0xff]
    %v329 = vld [vmem:[#allocation2 + $0x3c0] sm:$0xff]
    %v330 = vld [vmem:[#allocation2 + $0x3c8] sm:$0xff]
    %v331 = vld [vmem:[#allocation2 + $0x3d0] sm:$0xff]
    %v332 = vld [vmem:[#allocation2 + $0x3d8] sm:$0xff]
    %v333 = vld [vmem:[#allocation2 + $0x3e0] sm:$0xff]
    %v334 = vld [vmem:[#allocation2 + $0x3e8] sm:$0xff]
    %v335 = vld [vmem:[#allocation2 + $0x3f0] sm:$0xff]
    %v336 = vld [vmem:[#allocation2 + $0x3f8] sm:$0xff]
    %v337 = vld [vmem:[#allocation2 + $0x400] sm:$0xff]
    %v338 = vld [vmem:[#allocation2 + $0x408] sm:$0xff]
    %v339 = vld [vmem:[#allocation2 + $0x410] sm:$0xff]
    %v340 = vld [vmem:[#allocation2 + $0x418] sm:$0xff]
    %v341 = vld [vmem:[#allocation2 + $0x420] sm:$0xff]
    %v342 = vld [vmem:[#allocation2 + $0x428] sm:$0xff]
    %v343 = vld [vmem:[#allocation2 + $0x430] sm:$0xff]
    %v344 = vld [vmem:[#allocation2 + $0x438] sm:$0xff]
    %v345 = vld [vmem:[#allocation2 + $0x440] sm:$0xff]
    %v346 = vld [vmem:[#allocation2 + $0x448] sm:$0xff]
    %v347 = vld [vmem:[#allocation2 + $0x450] sm:$0xff]
    %v348 = vld [vmem:[#allocation2 + $0x458] sm:$0xff]
    %v349 = vld [vmem:[#allocation2 + $0x460] sm:$0xff]
    %v350 = vld [vmem:[#allocation2 + $0x468] sm:$0xff]
    %v351 = vld [vmem:[#allocation2 + $0x470] sm:$0xff]
    %v352 = vld [vmem:[#allocation2 + $0x478] sm:$0xff]
    %v353 = vld [vmem:[#allocation2 + $0x480] sm:$0xff]
    %v354 = vld [vmem:[#allocation2 + $0x488] sm:$0xff]
    %v355 = vld [vmem:[#allocation2 + $0x490] sm:$0xff]
    %v356 = vld [vmem:[#allocation2 + $0x498] sm:$0xff]
    %v357 = vld [vmem:[#allocation2 + $0x4a0] sm:$0xff]
    %v358 = vld [vmem:[#allocation2 + $0x4a8] sm:$0xff]
    %v359 = vld [vmem:[#allocation2 + $0x4b0] sm:$0xff]
    %v360 = vld [vmem:[#allocation2 + $0x4b8] sm:$0xff]
    %v361 = vld [vmem:[#allocation2 + $0x4c0] sm:$0xff]
    %v362 = vld [vmem:[#allocation2 + $0x4c8] sm:$0xff]
    %v363 = vld [vmem:[#allocation2 + $0x4d0] sm:$0xff]
    %v364 = vld [vmem:[#allocation2 + $0x4d8] sm:$0xff]
    %v365 = vld [vmem:[#allocation2 + $0x4e0] sm:$0xff]
    %v366 = vld [vmem:[#allocation2 + $0x4e8] sm:$0xff]
    %v367 = vld [vmem:[#allocation2 + $0x4f0] sm:$0xff]
    %v368 = vld [vmem:[#allocation2 + $0x4f8] sm:$0xff]
    %v369 = vld [vmem:[#allocation2 + $0x500] sm:$0xff]
    %v370 = vld [vmem:[#allocation2 + $0x508] sm:$0xff]
    %v371 = vld [vmem:[#allocation2 + $0x510] sm:$0xff]
    %v372 = vld [vmem:[#allocation2 + $0x518] sm:$0xff]
    %v373 = vld [vmem:[#allocation2 + $0x520] sm:$0xff]
    %v374 = vld [vmem:[#allocation2 + $0x528] sm:$0xff]
    %v375 = vld [vmem:[#allocation2 + $0x530] sm:$0xff]
    %v376 = vld [vmem:[#allocation2 + $0x538] sm:$0xff]
    %v377 = vld [vmem:[#allocation2 + $0x540] sm:$0xff]
    %v378 = vld [vmem:[#allocation2 + $0x548] sm:$0xff]
    %v379 = vld [vmem:[#allocation2 + $0x550] sm:$0xff]
    %v380 = vld [vmem:[#allocation2 + $0x558] sm:$0xff]
    %v381 = vld [vmem:[#allocation2 + $0x560] sm:$0xff]
    %v382 = vld [vmem:[#allocation2 + $0x568] sm:$0xff]
    %v383 = vld [vmem:[#allocation2 + $0x570] sm:$0xff]
    %v384 = vld [vmem:[#allocation2 + $0x578] sm:$0xff]
    %v385 = vld [vmem:[#allocation2 + $0x580] sm:$0xff]
    %v386 = vld [vmem:[#allocation2 + $0x588] sm:$0xff]
    %v387 = vld [vmem:[#allocation2 + $0x590] sm:$0xff]
    %v388 = vld [vmem:[#allocation2 + $0x598] sm:$0xff]
    %v389 = vld [vmem:[#allocation2 + $0x5a0] sm:$0xff]
    %v390 = vld [vmem:[#allocation2 + $0x5a8] sm:$0xff]
    %v391 = vld [vmem:[#allocation2 + $0x5b0] sm:$0xff]
    %v392 = vld [vmem:[#allocation2 + $0x5b8] sm:$0xff]
    %v393 = vld [vmem:[#allocation2 + $0x5c0] sm:$0xff]
    %v394 = vld [vmem:[#allocation2 + $0x5c8] sm:$0xff]
    %v395 = vld [vmem:[#allocation2 + $0x5d0] sm:$0xff]
    %v396 = vld [vmem:[#allocation2 + $0x5d8] sm:$0xff]
    %v397 = vld [vmem:[#allocation2 + $0x5e0] sm:$0xff]
    %v398 = vld [vmem:[#allocation2 + $0x5e8] sm:$0xff]
    %v399 = vld [vmem:[#allocation2 + $0x5f0] sm:$0xff]
    %v400 = vld [vmem:[#allocation2 + $0x5f8] sm:$0xff]
    %v401 = vld [vmem:[#allocation2 + $0x600] sm:$0xff]
    %v402 = vld [vmem:[#allocation2 + $0x608] sm:$0xff]
    %v403 = vld [vmem:[#allocation2 + $0x610] sm:$0xff]
    %v404 = vld [vmem:[#allocation2 + $0x618] sm:$0xff]
    %v405 = vld [vmem:[#allocation2 + $0x620] sm:$0xff]
    %v406 = vld [vmem:[#allocation2 + $0x628] sm:$0xff]
    %v407 = vld [vmem:[#allocation2 + $0x630] sm:$0xff]
    %v408 = vld [vmem:[#allocation2 + $0x638] sm:$0xff]
    %v409 = vld [vmem:[#allocation2 + $0x640] sm:$0xff]
    %v410 = vld [vmem:[#allocation2 + $0x648] sm:$0xff]
    %v411 = vld [vmem:[#allocation2 + $0x650] sm:$0xff]
    %v412 = vld [vmem:[#allocation2 + $0x658] sm:$0xff]
    %v413 = vld [vmem:[#allocation2 + $0x660] sm:$0xff]
    %v414 = vld [vmem:[#allocation2 + $0x668] sm:$0xff]
    %v415 = vld [vmem:[#allocation2 + $0x670] sm:$0xff]
    %v416 = vld [vmem:[#allocation2 + $0x678] sm:$0xff]
    %v417 = vld [vmem:[#allocation2 + $0x680] sm:$0xff]
    %v418 = vld [vmem:[#allocation2 + $0x688] sm:$0xff]
    %v419 = vld [vmem:[#allocation2 + $0x690] sm:$0xff]
    %v420 = vld [vmem:[#allocation2 + $0x698] sm:$0xff]
    %v421 = vld [vmem:[#allocation2 + $0x6a0] sm:$0xff]
    %v422 = vld [vmem:[#allocation2 + $0x6a8] sm:$0xff]
    %v423 = vld [vmem:[#allocation2 + $0x6b0] sm:$0xff]
    %v424 = vld [vmem:[#allocation2 + $0x6b8] sm:$0xff]
    %v425 = vld [vmem:[#allocation2 + $0x6c0] sm:$0xff]
    %v426 = vld [vmem:[#allocation2 + $0x6c8] sm:$0xff]
    %v427 = vld [vmem:[#allocation2 + $0x6d0] sm:$0xff]
    %v428 = vld [vmem:[#allocation2 + $0x6d8] sm:$0xff]
    %v429 = vld [vmem:[#allocation2 + $0x6e0] sm:$0xff]
    %v430 = vld [vmem:[#allocation2 + $0x6e8] sm:$0xff]
    %v431 = vld [vmem:[#allocation2 + $0x6f0] sm:$0xff]
    %v432 = vld [vmem:[#allocation2 + $0x6f8] sm:$0xff]
    %v433 = vld [vmem:[%s2] sm:$0xf]
    %v435 = vlaneseq
    %v436 = vshrl.u32 %v435, 7
    %v437 = vsub.s32 0, %v436
    %v438 = vrot.slane %v433, %v437
    %v439 = vlaneseq
    %v440 = vshrl.u32 %v439, 7
    %v441 = vsub.s32 1, %v440
    %v442 = vrot.slane %v433, %v441
    %v443 = vlaneseq
    %v444 = vshrl.u32 %v443, 7
    %v445 = vsub.s32 2, %v444
    %v446 = vrot.slane %v433, %v445
    %v447 = vlaneseq
    %v448 = vshrl.u32 %v447, 7
    %v449 = vsub.s32 3, %v448
    %v450 = vrot.slane %v433, %v449
    %v679 = vunpack.c.l.b16 %v209
    %v680 = vunpack.c.h.b16 %v209
    %v681 = vunpack.c.l.b16 %v210
    %v682 = vunpack.c.h.b16 %v210
    %v683 = vunpack.c.l.b16 %v211
    %v684 = vunpack.c.h.b16 %v211
    %v685 = vunpack.c.l.b16 %v212
    %v686 = vunpack.c.h.b16 %v212
    %v687 = vunpack.c.l.b16 %v213
    %v688 = vunpack.c.h.b16 %v213
    %v689 = vunpack.c.l.b16 %v214
    %v690 = vunpack.c.h.b16 %v214
    %v691 = vunpack.c.l.b16 %v215
    %v692 = vunpack.c.h.b16 %v215
    %v693 = vunpack.c.l.b16 %v216
    %v694 = vunpack.c.h.b16 %v216
    %v695 = vunpack.c.l.b16 %v217
    %v696 = vunpack.c.h.b16 %v217
    %v697 = vunpack.c.l.b16 %v218
    %v698 = vunpack.c.h.b16 %v218
    %v699 = vunpack.c.l.b16 %v219
    %v700 = vunpack.c.h.b16 %v219
    %v701 = vunpack.c.l.b16 %v220
    %v702 = vunpack.c.h.b16 %v220
    %v703 = vunpack.c.l.b16 %v221
    %v704 = vunpack.c.h.b16 %v221
    %v705 = vunpack.c.l.b16 %v222
    %v706 = vunpack.c.h.b16 %v222
    %v707 = vunpack.c.l.b16 %v223
    %v708 = vunpack.c.h.b16 %v223
    %v709 = vunpack.c.l.b16 %v224
    %v710 = vunpack.c.h.b16 %v224
    %v711 = vunpack.c.l.b16 %v225
    %v712 = vunpack.c.h.b16 %v225
    %v713 = vunpack.c.l.b16 %v226
    %v714 = vunpack.c.h.b16 %v226
    %v715 = vunpack.c.l.b16 %v227
    %v716 = vunpack.c.h.b16 %v227
    %v717 = vunpack.c.l.b16 %v228
    %v718 = vunpack.c.h.b16 %v228
    %v719 = vunpack.c.l.b16 %v229
    %v720 = vunpack.c.h.b16 %v229
    %v721 = vunpack.c.l.b16 %v230
    %v722 = vunpack.c.h.b16 %v230
    %v723 = vunpack.c.l.b16 %v231
    %v724 = vunpack.c.h.b16 %v231
    %v725 = vunpack.c.l.b16 %v232
    %v726 = vunpack.c.h.b16 %v232
    %v727 = vunpack.c.l.b16 %v233
    %v728 = vunpack.c.h.b16 %v233
    %v729 = vunpack.c.l.b16 %v234
    %v730 = vunpack.c.h.b16 %v234
    %v731 = vunpack.c.l.b16 %v235
    %v732 = vunpack.c.h.b16 %v235
    %v733 = vunpack.c.l.b16 %v236
    %v734 = vunpack.c.h.b16 %v236
    %v735 = vunpack.c.l.b16 %v237
    %v736 = vunpack.c.h.b16 %v237
    %v737 = vunpack.c.l.b16 %v238
    %v738 = vunpack.c.h.b16 %v238
    %v739 = vunpack.c.l.b16 %v239
    %v740 = vunpack.c.h.b16 %v239
    %v741 = vunpack.c.l.b16 %v240
    %v742 = vunpack.c.h.b16 %v240
    %v743 = vunpack.c.l.b16 %v241
    %v744 = vunpack.c.h.b16 %v241
    %v745 = vunpack.c.l.b16 %v242
    %v746 = vunpack.c.h.b16 %v242
    %v747 = vunpack.c.l.b16 %v243
    %v748 = vunpack.c.h.b16 %v243
    %v749 = vunpack.c.l.b16 %v244
    %v750 = vunpack.c.h.b16 %v244
    %v751 = vunpack.c.l.b16 %v245
    %v752 = vunpack.c.h.b16 %v245
    %v753 = vunpack.c.l.b16 %v246
    %v754 = vunpack.c.h.b16 %v246
    %v755 = vunpack.c.l.b16 %v247
    %v756 = vunpack.c.h.b16 %v247
    %v757 = vunpack.c.l.b16 %v248
    %v758 = vunpack.c.h.b16 %v248
    %v759 = vunpack.c.l.b16 %v249
    %v760 = vunpack.c.h.b16 %v249
    %v761 = vunpack.c.l.b16 %v250
    %v762 = vunpack.c.h.b16 %v250
    %v763 = vunpack.c.l.b16 %v251
    %v764 = vunpack.c.h.b16 %v251
    %v765 = vunpack.c.l.b16 %v252
    %v766 = vunpack.c.h.b16 %v252
    %v767 = vunpack.c.l.b16 %v253
    %v768 = vunpack.c.h.b16 %v253
    %v769 = vunpack.c.l.b16 %v254
    %v770 = vunpack.c.h.b16 %v254
    %v771 = vunpack.c.l.b16 %v255
    %v772 = vunpack.c.h.b16 %v255
    %v773 = vunpack.c.l.b16 %v256
    %v774 = vunpack.c.h.b16 %v256
    %v775 = vunpack.c.l.b16 %v257
    %v776 = vunpack.c.h.b16 %v257
    %v777 = vunpack.c.l.b16 %v258
    %v778 = vunpack.c.h.b16 %v258
    %v779 = vunpack.c.l.b16 %v259
    %v780 = vunpack.c.h.b16 %v259
    %v781 = vunpack.c.l.b16 %v260
    %v782 = vunpack.c.h.b16 %v260
    %v783 = vunpack.c.l.b16 %v261
    %v784 = vunpack.c.h.b16 %v261
    %v785 = vunpack.c.l.b16 %v262
    %v786 = vunpack.c.h.b16 %v262
    %v787 = vunpack.c.l.b16 %v263
    %v788 = vunpack.c.h.b16 %v263
    %v789 = vunpack.c.l.b16 %v264
    %v790 = vunpack.c.h.b16 %v264
    %v791 = vunpack.c.l.b16 %v265
    %v792 = vunpack.c.h.b16 %v265
    %v793 = vunpack.c.l.b16 %v266
    %v794 = vunpack.c.h.b16 %v266
    %v795 = vunpack.c.l.b16 %v267
    %v796 = vunpack.c.h.b16 %v267
    %v797 = vunpack.c.l.b16 %v268
    %v798 = vunpack.c.h.b16 %v268
    %v799 = vunpack.c.l.b16 %v269
    %v800 = vunpack.c.h.b16 %v269
    %v801 = vunpack.c.l.b16 %v270
    %v802 = vunpack.c.h.b16 %v270
    %v803 = vunpack.c.l.b16 %v271
    %v804 = vunpack.c.h.b16 %v271
    %v805 = vunpack.c.l.b16 %v272
    %v806 = vunpack.c.h.b16 %v272
    %v807 = vunpack.c.l.b16 %v273
    %v808 = vunpack.c.h.b16 %v273
    %v809 = vunpack.c.l.b16 %v274
    %v810 = vunpack.c.h.b16 %v274
    %v811 = vunpack.c.l.b16 %v275
    %v812 = vunpack.c.h.b16 %v275
    %v813 = vunpack.c.l.b16 %v276
    %v814 = vunpack.c.h.b16 %v276
    %v815 = vunpack.c.l.b16 %v277
    %v816 = vunpack.c.h.b16 %v277
    %v817 = vunpack.c.l.b16 %v278
    %v818 = vunpack.c.h.b16 %v278
    %v819 = vunpack.c.l.b16 %v279
    %v820 = vunpack.c.h.b16 %v279
    %v821 = vunpack.c.l.b16 %v280
    %v822 = vunpack.c.h.b16 %v280
    %v823 = vunpack.c.l.b16 %v281
    %v824 = vunpack.c.h.b16 %v281
    %v825 = vunpack.c.l.b16 %v282
    %v826 = vunpack.c.h.b16 %v282
    %v827 = vunpack.c.l.b16 %v283
    %v828 = vunpack.c.h.b16 %v283
    %v829 = vunpack.c.l.b16 %v284
    %v830 = vunpack.c.h.b16 %v284
    %v831 = vunpack.c.l.b16 %v285
    %v832 = vunpack.c.h.b16 %v285
    %v833 = vunpack.c.l.b16 %v286
    %v834 = vunpack.c.h.b16 %v286
    %v835 = vunpack.c.l.b16 %v287
    %v836 = vunpack.c.h.b16 %v287
    %v837 = vunpack.c.l.b16 %v288
    %v838 = vunpack.c.h.b16 %v288
    %v839 = vunpack.c.l.b16 %v289
    %v840 = vunpack.c.h.b16 %v289
    %v841 = vunpack.c.l.b16 %v290
    %v842 = vunpack.c.h.b16 %v290
    %v843 = vunpack.c.l.b16 %v291
    %v844 = vunpack.c.h.b16 %v291
    %v845 = vunpack.c.l.b16 %v292
    %v846 = vunpack.c.h.b16 %v292
    %v847 = vunpack.c.l.b16 %v293
    %v848 = vunpack.c.h.b16 %v293
    %v849 = vunpack.c.l.b16 %v294
    %v850 = vunpack.c.h.b16 %v294
    %v851 = vunpack.c.l.b16 %v295
    %v852 = vunpack.c.h.b16 %v295
    %v853 = vunpack.c.l.b16 %v296
    %v854 = vunpack.c.h.b16 %v296
    %v855 = vunpack.c.l.b16 %v297
    %v856 = vunpack.c.h.b16 %v297
    %v857 = vunpack.c.l.b16 %v298
    %v858 = vunpack.c.h.b16 %v298
    %v859 = vunpack.c.l.b16 %v299
    %v860 = vunpack.c.h.b16 %v299
    %v861 = vunpack.c.l.b16 %v300
    %v862 = vunpack.c.h.b16 %v300
    %v863 = vunpack.c.l.b16 %v301
    %v864 = vunpack.c.h.b16 %v301
    %v865 = vunpack.c.l.b16 %v302
    %v866 = vunpack.c.h.b16 %v302
    %v867 = vunpack.c.l.b16 %v303
    %v868 = vunpack.c.h.b16 %v303
    %v869 = vunpack.c.l.b16 %v304
    %v870 = vunpack.c.h.b16 %v304
    %v871 = vunpack.c.l.b16 %v305
    %v872 = vunpack.c.h.b16 %v305
    %v873 = vunpack.c.l.b16 %v306
    %v874 = vunpack.c.h.b16 %v306
    %v875 = vunpack.c.l.b16 %v307
    %v876 = vunpack.c.h.b16 %v307
    %v877 = vunpack.c.l.b16 %v308
    %v878 = vunpack.c.h.b16 %v308
    %v879 = vunpack.c.l.b16 %v309
    %v880 = vunpack.c.h.b16 %v309
    %v881 = vunpack.c.l.b16 %v310
    %v882 = vunpack.c.h.b16 %v310
    %v883 = vunpack.c.l.b16 %v311
    %v884 = vunpack.c.h.b16 %v311
    %v885 = vunpack.c.l.b16 %v312
    %v886 = vunpack.c.h.b16 %v312
    %v887 = vunpack.c.l.b16 %v313
    %v888 = vunpack.c.h.b16 %v313
    %v889 = vunpack.c.l.b16 %v314
    %v890 = vunpack.c.h.b16 %v314
    %v891 = vunpack.c.l.b16 %v315
    %v892 = vunpack.c.h.b16 %v315
    %v893 = vunpack.c.l.b16 %v316
    %v894 = vunpack.c.h.b16 %v316
    %v895 = vunpack.c.l.b16 %v317
    %v896 = vunpack.c.h.b16 %v317
    %v897 = vunpack.c.l.b16 %v318
    %v898 = vunpack.c.h.b16 %v318
    %v899 = vunpack.c.l.b16 %v319
    %v900 = vunpack.c.h.b16 %v319
    %v901 = vunpack.c.l.b16 %v320
    %v902 = vunpack.c.h.b16 %v320
    %v903 = vunpack.c.l.b16 %v321
    %v904 = vunpack.c.h.b16 %v321
    %v905 = vunpack.c.l.b16 %v322
    %v906 = vunpack.c.h.b16 %v322
    %v907 = vunpack.c.l.b16 %v323
    %v908 = vunpack.c.h.b16 %v323
    %v909 = vunpack.c.l.b16 %v324
    %v910 = vunpack.c.h.b16 %v324
    %v911 = vunpack.c.l.b16 %v325
    %v912 = vunpack.c.h.b16 %v325
    %v913 = vunpack.c.l.b16 %v326
    %v914 = vunpack.c.h.b16 %v326
    %v915 = vunpack.c.l.b16 %v327
    %v916 = vunpack.c.h.b16 %v327
    %v917 = vunpack.c.l.b16 %v328
    %v918 = vunpack.c.h.b16 %v328
    %v919 = vunpack.c.l.b16 %v329
    %v920 = vunpack.c.h.b16 %v329
    %v921 = vunpack.c.l.b16 %v330
    %v922 = vunpack.c.h.b16 %v330
    %v923 = vunpack.c.l.b16 %v331
    %v924 = vunpack.c.h.b16 %v331
    %v925 = vunpack.c.l.b16 %v332
    %v926 = vunpack.c.h.b16 %v332
    %v927 = vunpack.c.l.b16 %v333
    %v928 = vunpack.c.h.b16 %v333
    %v929 = vunpack.c.l.b16 %v334
    %v930 = vunpack.c.h.b16 %v334
    %v931 = vunpack.c.l.b16 %v335
    %v932 = vunpack.c.h.b16 %v335
    %v933 = vunpack.c.l.b16 %v336
    %v934 = vunpack.c.h.b16 %v336
    %v935 = vunpack.c.l.b16 %v337
    %v936 = vunpack.c.h.b16 %v337
    %v937 = vunpack.c.l.b16 %v338
    %v938 = vunpack.c.h.b16 %v338
    %v939 = vunpack.c.l.b16 %v339
    %v940 = vunpack.c.h.b16 %v339
    %v941 = vunpack.c.l.b16 %v340
    %v942 = vunpack.c.h.b16 %v340
    %v943 = vunpack.c.l.b16 %v341
    %v944 = vunpack.c.h.b16 %v341
    %v945 = vunpack.c.l.b16 %v342
    %v946 = vunpack.c.h.b16 %v342
    %v947 = vunpack.c.l.b16 %v343
    %v948 = vunpack.c.h.b16 %v343
    %v949 = vunpack.c.l.b16 %v344
    %v950 = vunpack.c.h.b16 %v344
    %v951 = vunpack.c.l.b16 %v345
    %v952 = vunpack.c.h.b16 %v345
    %v953 = vunpack.c.l.b16 %v346
    %v954 = vunpack.c.h.b16 %v346
    %v955 = vunpack.c.l.b16 %v347
    %v956 = vunpack.c.h.b16 %v347
    %v957 = vunpack.c.l.b16 %v348
    %v958 = vunpack.c.h.b16 %v348
    %v959 = vunpack.c.l.b16 %v349
    %v960 = vunpack.c.h.b16 %v349
    %v961 = vunpack.c.l.b16 %v350
    %v962 = vunpack.c.h.b16 %v350
    %v963 = vunpack.c.l.b16 %v351
    %v964 = vunpack.c.h.b16 %v351
    %v965 = vunpack.c.l.b16 %v352
    %v966 = vunpack.c.h.b16 %v352
    %v967 = vunpack.c.l.b16 %v353
    %v968 = vunpack.c.h.b16 %v353
    %v969 = vunpack.c.l.b16 %v354
    %v970 = vunpack.c.h.b16 %v354
    %v971 = vunpack.c.l.b16 %v355
    %v972 = vunpack.c.h.b16 %v355
    %v973 = vunpack.c.l.b16 %v356
    %v974 = vunpack.c.h.b16 %v356
    %v975 = vunpack.c.l.b16 %v357
    %v976 = vunpack.c.h.b16 %v357
    %v977 = vunpack.c.l.b16 %v358
    %v978 = vunpack.c.h.b16 %v358
    %v979 = vunpack.c.l.b16 %v359
    %v980 = vunpack.c.h.b16 %v359
    %v981 = vunpack.c.l.b16 %v360
    %v982 = vunpack.c.h.b16 %v360
    %v983 = vunpack.c.l.b16 %v361
    %v984 = vunpack.c.h.b16 %v361
    %v985 = vunpack.c.l.b16 %v362
    %v986 = vunpack.c.h.b16 %v362
    %v987 = vunpack.c.l.b16 %v363
    %v988 = vunpack.c.h.b16 %v363
    %v989 = vunpack.c.l.b16 %v364
    %v990 = vunpack.c.h.b16 %v364
    %v991 = vunpack.c.l.b16 %v365
    %v992 = vunpack.c.h.b16 %v365
    %v993 = vunpack.c.l.b16 %v366
    %v994 = vunpack.c.h.b16 %v366
    %v995 = vunpack.c.l.b16 %v367
    %v996 = vunpack.c.h.b16 %v367
    %v997 = vunpack.c.l.b16 %v368
    %v998 = vunpack.c.h.b16 %v368
    %v999 = vunpack.c.l.b16 %v369
    %v1000 = vunpack.c.h.b16 %v369
    %v1001 = vunpack.c.l.b16 %v370
    %v1002 = vunpack.c.h.b16 %v370
    %v1003 = vunpack.c.l.b16 %v371
    %v1004 = vunpack.c.h.b16 %v371
    %v1005 = vunpack.c.l.b16 %v372
    %v1006 = vunpack.c.h.b16 %v372
    %v1007 = vunpack.c.l.b16 %v373
    %v1008 = vunpack.c.h.b16 %v373
    %v1009 = vunpack.c.l.b16 %v374
    %v1010 = vunpack.c.h.b16 %v374
    %v1011 = vunpack.c.l.b16 %v375
    %v1012 = vunpack.c.h.b16 %v375
    %v1013 = vunpack.c.l.b16 %v376
    %v1014 = vunpack.c.h.b16 %v376
    %v1015 = vunpack.c.l.b16 %v377
    %v1016 = vunpack.c.h.b16 %v377
    %v1017 = vunpack.c.l.b16 %v378
    %v1018 = vunpack.c.h.b16 %v378
    %v1019 = vunpack.c.l.b16 %v379
    %v1020 = vunpack.c.h.b16 %v379
    %v1021 = vunpack.c.l.b16 %v380
    %v1022 = vunpack.c.h.b16 %v380
    %v1023 = vunpack.c.l.b16 %v381
    %v1024 = vunpack.c.h.b16 %v381
    %v1025 = vunpack.c.l.b16 %v382
    %v1026 = vunpack.c.h.b16 %v382
    %v1027 = vunpack.c.l.b16 %v383
    %v1028 = vunpack.c.h.b16 %v383
    %v1029 = vunpack.c.l.b16 %v384
    %v1030 = vunpack.c.h.b16 %v384
    %v1031 = vunpack.c.l.b16 %v385
    %v1032 = vunpack.c.h.b16 %v385
    %v1033 = vunpack.c.l.b16 %v386
    %v1034 = vunpack.c.h.b16 %v386
    %v1035 = vunpack.c.l.b16 %v387
    %v1036 = vunpack.c.h.b16 %v387
    %v1037 = vunpack.c.l.b16 %v388
    %v1038 = vunpack.c.h.b16 %v388
    %v1039 = vunpack.c.l.b16 %v389
    %v1040 = vunpack.c.h.b16 %v389
    %v1041 = vunpack.c.l.b16 %v390
    %v1042 = vunpack.c.h.b16 %v390
    %v1043 = vunpack.c.l.b16 %v391
    %v1044 = vunpack.c.h.b16 %v391
    %v1045 = vunpack.c.l.b16 %v392
    %v1046 = vunpack.c.h.b16 %v392
    %v1047 = vunpack.c.l.b16 %v393
    %v1048 = vunpack.c.h.b16 %v393
    %v1049 = vunpack.c.l.b16 %v394
    %v1050 = vunpack.c.h.b16 %v394
    %v1051 = vunpack.c.l.b16 %v395
    %v1052 = vunpack.c.h.b16 %v395
    %v1053 = vunpack.c.l.b16 %v396
    %v1054 = vunpack.c.h.b16 %v396
    %v1055 = vunpack.c.l.b16 %v397
    %v1056 = vunpack.c.h.b16 %v397
    %v1057 = vunpack.c.l.b16 %v398
    %v1058 = vunpack.c.h.b16 %v398
    %v1059 = vunpack.c.l.b16 %v399
    %v1060 = vunpack.c.h.b16 %v399
    %v1061 = vunpack.c.l.b16 %v400
    %v1062 = vunpack.c.h.b16 %v400
    %v1063 = vunpack.c.l.b16 %v401
    %v1064 = vunpack.c.h.b16 %v401
    %v1065 = vunpack.c.l.b16 %v402
    %v1066 = vunpack.c.h.b16 %v402
    %v1067 = vunpack.c.l.b16 %v403
    %v1068 = vunpack.c.h.b16 %v403
    %v1069 = vunpack.c.l.b16 %v404
    %v1070 = vunpack.c.h.b16 %v404
    %v1071 = vunpack.c.l.b16 %v405
    %v1072 = vunpack.c.h.b16 %v405
    %v1073 = vunpack.c.l.b16 %v406
    %v1074 = vunpack.c.h.b16 %v406
    %v1075 = vunpack.c.l.b16 %v407
    %v1076 = vunpack.c.h.b16 %v407
    %v1077 = vunpack.c.l.b16 %v408
    %v1078 = vunpack.c.h.b16 %v408
    %v1079 = vunpack.c.l.b16 %v409
    %v1080 = vunpack.c.h.b16 %v409
    %v1081 = vunpack.c.l.b16 %v410
    %v1082 = vunpack.c.h.b16 %v410
    %v1083 = vunpack.c.l.b16 %v411
    %v1084 = vunpack.c.h.b16 %v411
    %v1085 = vunpack.c.l.b16 %v412
    %v1086 = vunpack.c.h.b16 %v412
    %v1087 = vunpack.c.l.b16 %v413
    %v1088 = vunpack.c.h.b16 %v413
    %v1089 = vunpack.c.l.b16 %v414
    %v1090 = vunpack.c.h.b16 %v414
    %v1091 = vunpack.c.l.b16 %v415
    %v1092 = vunpack.c.h.b16 %v415
    %v1093 = vunpack.c.l.b16 %v416
    %v1094 = vunpack.c.h.b16 %v416
    %v1095 = vunpack.c.l.b16 %v417
    %v1096 = vunpack.c.h.b16 %v417
    %v1097 = vunpack.c.l.b16 %v418
    %v1098 = vunpack.c.h.b16 %v418
    %v1099 = vunpack.c.l.b16 %v419
    %v1100 = vunpack.c.h.b16 %v419
    %v1101 = vunpack.c.l.b16 %v420
    %v1102 = vunpack.c.h.b16 %v420
    %v1103 = vunpack.c.l.b16 %v421
    %v1104 = vunpack.c.h.b16 %v421
    %v1105 = vunpack.c.l.b16 %v422
    %v1106 = vunpack.c.h.b16 %v422
    %v1107 = vunpack.c.l.b16 %v423
    %v1108 = vunpack.c.h.b16 %v423
    %v1109 = vunpack.c.l.b16 %v424
    %v1110 = vunpack.c.h.b16 %v424
    %v1111 = vunpack.c.l.b16 %v425
    %v1112 = vunpack.c.h.b16 %v425
    %v1113 = vunpack.c.l.b16 %v426
    %v1114 = vunpack.c.h.b16 %v426
    %v1115 = vunpack.c.l.b16 %v427
    %v1116 = vunpack.c.h.b16 %v427
    %v1117 = vunpack.c.l.b16 %v428
    %v1118 = vunpack.c.h.b16 %v428
    %v1119 = vunpack.c.l.b16 %v429
    %v1120 = vunpack.c.h.b16 %v429
    %v1121 = vunpack.c.l.b16 %v430
    %v1122 = vunpack.c.h.b16 %v430
    %v1123 = vunpack.c.l.b16 %v431
    %v1124 = vunpack.c.h.b16 %v431
    %v1125 = vunpack.c.l.b16 %v432
    %v1126 = vunpack.c.h.b16 %v432
    %v1127 = vpack.c.b16 %v683, %v679
    %v1128 = vpack.c.b16 %v684, %v680
    %v1129 = vpack.c.b16 %v685, %v681
    %v1130 = vpack.c.b16 %v686, %v682
    %v1131 = vpack.c.b16 %v691, %v687
    %v1132 = vpack.c.b16 %v692, %v688
    %v1133 = vpack.c.b16 %v693, %v689
    %v1134 = vpack.c.b16 %v694, %v690
    %v1135 = vpack.c.b16 %v699, %v695
    %v1136 = vpack.c.b16 %v700, %v696
    %v1137 = vpack.c.b16 %v701, %v697
    %v1138 = vpack.c.b16 %v702, %v698
    %v1139 = vpack.c.b16 %v707, %v703
    %v1140 = vpack.c.b16 %v708, %v704
    %v1141 = vpack.c.b16 %v709, %v705
    %v1142 = vpack.c.b16 %v710, %v706
    %v1143 = vpack.c.b16 %v715, %v711
    %v1144 = vpack.c.b16 %v716, %v712
    %v1145 = vpack.c.b16 %v717, %v713
    %v1146 = vpack.c.b16 %v718, %v714
    %v1147 = vpack.c.b16 %v723, %v719
    %v1148 = vpack.c.b16 %v724, %v720
    %v1149 = vpack.c.b16 %v725, %v721
    %v1150 = vpack.c.b16 %v726, %v722
    %v1151 = vpack.c.b16 %v731, %v727
    %v1152 = vpack.c.b16 %v732, %v728
    %v1153 = vpack.c.b16 %v733, %v729
    %v1154 = vpack.c.b16 %v734, %v730
    %v1155 = vpack.c.b16 %v739, %v735
    %v1156 = vpack.c.b16 %v740, %v736
    %v1157 = vpack.c.b16 %v741, %v737
    %v1158 = vpack.c.b16 %v742, %v738
    %v1159 = vpack.c.b16 %v747, %v743
    %v1160 = vpack.c.b16 %v748, %v744
    %v1161 = vpack.c.b16 %v749, %v745
    %v1162 = vpack.c.b16 %v750, %v746
    %v1163 = vpack.c.b16 %v755, %v751
    %v1164 = vpack.c.b16 %v756, %v752
    %v1165 = vpack.c.b16 %v757, %v753
    %v1166 = vpack.c.b16 %v758, %v754
    %v1167 = vpack.c.b16 %v763, %v759
    %v1168 = vpack.c.b16 %v764, %v760
    %v1169 = vpack.c.b16 %v765, %v761
    %v1170 = vpack.c.b16 %v766, %v762
    %v1171 = vpack.c.b16 %v771, %v767
    %v1172 = vpack.c.b16 %v772, %v768
    %v1173 = vpack.c.b16 %v773, %v769
    %v1174 = vpack.c.b16 %v774, %v770
    %v1175 = vpack.c.b16 %v779, %v775
    %v1176 = vpack.c.b16 %v780, %v776
    %v1177 = vpack.c.b16 %v781, %v777
    %v1178 = vpack.c.b16 %v782, %v778
    %v1179 = vpack.c.b16 %v787, %v783
    %v1180 = vpack.c.b16 %v788, %v784
    %v1181 = vpack.c.b16 %v789, %v785
    %v1182 = vpack.c.b16 %v790, %v786
    %v1183 = vpack.c.b16 %v795, %v791
    %v1184 = vpack.c.b16 %v796, %v792
    %v1185 = vpack.c.b16 %v797, %v793
    %v1186 = vpack.c.b16 %v798, %v794
    %v1187 = vpack.c.b16 %v803, %v799
    %v1188 = vpack.c.b16 %v804, %v800
    %v1189 = vpack.c.b16 %v805, %v801
    %v1190 = vpack.c.b16 %v806, %v802
    %v1191 = vpack.c.b16 %v811, %v807
    %v1192 = vpack.c.b16 %v812, %v808
    %v1193 = vpack.c.b16 %v813, %v809
    %v1194 = vpack.c.b16 %v814, %v810
    %v1195 = vpack.c.b16 %v819, %v815
    %v1196 = vpack.c.b16 %v820, %v816
    %v1197 = vpack.c.b16 %v821, %v817
    %v1198 = vpack.c.b16 %v822, %v818
    %v1199 = vpack.c.b16 %v827, %v823
    %v1200 = vpack.c.b16 %v828, %v824
    %v1201 = vpack.c.b16 %v829, %v825
    %v1202 = vpack.c.b16 %v830, %v826
    %v1203 = vpack.c.b16 %v835, %v831
    %v1204 = vpack.c.b16 %v836, %v832
    %v1205 = vpack.c.b16 %v837, %v833
    %v1206 = vpack.c.b16 %v838, %v834
    %v1207 = vpack.c.b16 %v843, %v839
    %v1208 = vpack.c.b16 %v844, %v840
    %v1209 = vpack.c.b16 %v845, %v841
    %v1210 = vpack.c.b16 %v846, %v842
    %v1211 = vpack.c.b16 %v851, %v847
    %v1212 = vpack.c.b16 %v852, %v848
    %v1213 = vpack.c.b16 %v853, %v849
    %v1214 = vpack.c.b16 %v854, %v850
    %v1215 = vpack.c.b16 %v859, %v855
    %v1216 = vpack.c.b16 %v860, %v856
    %v1217 = vpack.c.b16 %v861, %v857
    %v1218 = vpack.c.b16 %v862, %v858
    %v1219 = vpack.c.b16 %v867, %v863
    %v1220 = vpack.c.b16 %v868, %v864
    %v1221 = vpack.c.b16 %v869, %v865
    %v1222 = vpack.c.b16 %v870, %v866
    %v1223 = vpack.c.b16 %v875, %v871
    %v1224 = vpack.c.b16 %v876, %v872
    %v1225 = vpack.c.b16 %v877, %v873
    %v1226 = vpack.c.b16 %v878, %v874
    %v1227 = vpack.c.b16 %v883, %v879
    %v1228 = vpack.c.b16 %v884, %v880
    %v1229 = vpack.c.b16 %v885, %v881
    %v1230 = vpack.c.b16 %v886, %v882
    %v1231 = vpack.c.b16 %v891, %v887
    %v1232 = vpack.c.b16 %v892, %v888
    %v1233 = vpack.c.b16 %v893, %v889
    %v1234 = vpack.c.b16 %v894, %v890
    %v1235 = vpack.c.b16 %v899, %v895
    %v1236 = vpack.c.b16 %v900, %v896
    %v1237 = vpack.c.b16 %v901, %v897
    %v1238 = vpack.c.b16 %v902, %v898
    %v1239 = vpack.c.b16 %v907, %v903
    %v1240 = vpack.c.b16 %v908, %v904
    %v1241 = vpack.c.b16 %v909, %v905
    %v1242 = vpack.c.b16 %v910, %v906
    %v1243 = vpack.c.b16 %v915, %v911
    %v1244 = vpack.c.b16 %v916, %v912
    %v1245 = vpack.c.b16 %v917, %v913
    %v1246 = vpack.c.b16 %v918, %v914
    %v1247 = vpack.c.b16 %v923, %v919
    %v1248 = vpack.c.b16 %v924, %v920
    %v1249 = vpack.c.b16 %v925, %v921
    %v1250 = vpack.c.b16 %v926, %v922
    %v1251 = vpack.c.b16 %v931, %v927
    %v1252 = vpack.c.b16 %v932, %v928
    %v1253 = vpack.c.b16 %v933, %v929
    %v1254 = vpack.c.b16 %v934, %v930
    %v1255 = vpack.c.b16 %v939, %v935
    %v1256 = vpack.c.b16 %v940, %v936
    %v1257 = vpack.c.b16 %v941, %v937
    %v1258 = vpack.c.b16 %v942, %v938
    %v1259 = vpack.c.b16 %v947, %v943
    %v1260 = vpack.c.b16 %v948, %v944
    %v1261 = vpack.c.b16 %v949, %v945
    %v1262 = vpack.c.b16 %v950, %v946
    %v1263 = vpack.c.b16 %v955, %v951
    %v1264 = vpack.c.b16 %v956, %v952
    %v1265 = vpack.c.b16 %v957, %v953
    %v1266 = vpack.c.b16 %v958, %v954
    %v1267 = vpack.c.b16 %v963, %v959
    %v1268 = vpack.c.b16 %v964, %v960
    %v1269 = vpack.c.b16 %v965, %v961
    %v1270 = vpack.c.b16 %v966, %v962
    %v1271 = vpack.c.b16 %v971, %v967
    %v1272 = vpack.c.b16 %v972, %v968
    %v1273 = vpack.c.b16 %v973, %v969
    %v1274 = vpack.c.b16 %v974, %v970
    %v1275 = vpack.c.b16 %v979, %v975
    %v1276 = vpack.c.b16 %v980, %v976
    %v1277 = vpack.c.b16 %v981, %v977
    %v1278 = vpack.c.b16 %v982, %v978
    %v1279 = vpack.c.b16 %v987, %v983
    %v1280 = vpack.c.b16 %v988, %v984
    %v1281 = vpack.c.b16 %v989, %v985
    %v1282 = vpack.c.b16 %v990, %v986
    %v1283 = vpack.c.b16 %v995, %v991
    %v1284 = vpack.c.b16 %v996, %v992
    %v1285 = vpack.c.b16 %v997, %v993
    %v1286 = vpack.c.b16 %v998, %v994
    %v1287 = vpack.c.b16 %v1003, %v999
    %v1288 = vpack.c.b16 %v1004, %v1000
    %v1289 = vpack.c.b16 %v1005, %v1001
    %v1290 = vpack.c.b16 %v1006, %v1002
    %v1291 = vpack.c.b16 %v1011, %v1007
    %v1292 = vpack.c.b16 %v1012, %v1008
    %v1293 = vpack.c.b16 %v1013, %v1009
    %v1294 = vpack.c.b16 %v1014, %v1010
    %v1295 = vpack.c.b16 %v1019, %v1015
    %v1296 = vpack.c.b16 %v1020, %v1016
    %v1297 = vpack.c.b16 %v1021, %v1017
    %v1298 = vpack.c.b16 %v1022, %v1018
    %v1299 = vpack.c.b16 %v1027, %v1023
    %v1300 = vpack.c.b16 %v1028, %v1024
    %v1301 = vpack.c.b16 %v1029, %v1025
    %v1302 = vpack.c.b16 %v1030, %v1026
    %v1303 = vpack.c.b16 %v1035, %v1031
    %v1304 = vpack.c.b16 %v1036, %v1032
    %v1305 = vpack.c.b16 %v1037, %v1033
    %v1306 = vpack.c.b16 %v1038, %v1034
    %v1307 = vpack.c.b16 %v1043, %v1039
    %v1308 = vpack.c.b16 %v1044, %v1040
    %v1309 = vpack.c.b16 %v1045, %v1041
    %v1310 = vpack.c.b16 %v1046, %v1042
    %v1311 = vpack.c.b16 %v1051, %v1047
    %v1312 = vpack.c.b16 %v1052, %v1048
    %v1313 = vpack.c.b16 %v1053, %v1049
    %v1314 = vpack.c.b16 %v1054, %v1050
    %v1315 = vpack.c.b16 %v1059, %v1055
    %v1316 = vpack.c.b16 %v1060, %v1056
    %v1317 = vpack.c.b16 %v1061, %v1057
    %v1318 = vpack.c.b16 %v1062, %v1058
    %v1319 = vpack.c.b16 %v1067, %v1063
    %v1320 = vpack.c.b16 %v1068, %v1064
    %v1321 = vpack.c.b16 %v1069, %v1065
    %v1322 = vpack.c.b16 %v1070, %v1066
    %v1323 = vpack.c.b16 %v1075, %v1071
    %v1324 = vpack.c.b16 %v1076, %v1072
    %v1325 = vpack.c.b16 %v1077, %v1073
    %v1326 = vpack.c.b16 %v1078, %v1074
    %v1327 = vpack.c.b16 %v1083, %v1079
    %v1328 = vpack.c.b16 %v1084, %v1080
    %v1329 = vpack.c.b16 %v1085, %v1081
    %v1330 = vpack.c.b16 %v1086, %v1082
    %v1331 = vpack.c.b16 %v1091, %v1087
    %v1332 = vpack.c.b16 %v1092, %v1088
    %v1333 = vpack.c.b16 %v1093, %v1089
    %v1334 = vpack.c.b16 %v1094, %v1090
    %v1335 = vpack.c.b16 %v1099, %v1095
    %v1336 = vpack.c.b16 %v1100, %v1096
    %v1337 = vpack.c.b16 %v1101, %v1097
    %v1338 = vpack.c.b16 %v1102, %v1098
    %v1339 = vpack.c.b16 %v1107, %v1103
    %v1340 = vpack.c.b16 %v1108, %v1104
    %v1341 = vpack.c.b16 %v1109, %v1105
    %v1342 = vpack.c.b16 %v1110, %v1106
    %v1343 = vpack.c.b16 %v1115, %v1111
    %v1344 = vpack.c.b16 %v1116, %v1112
    %v1345 = vpack.c.b16 %v1117, %v1113
    %v1346 = vpack.c.b16 %v1118, %v1114
    %v1347 = vpack.c.b16 %v1123, %v1119
    %v1348 = vpack.c.b16 %v1124, %v1120
    %v1349 = vpack.c.b16 %v1125, %v1121
    %v1350 = vpack.c.b16 %v1126, %v1122
    %1575 = vmatprep.subr.bf16.mxu0 %v1128
    %1576 = vmatpush1.bf16.msra.mxu0 %v1127
    %1577 = vmatprep.subr.bf16.mxu0 %v1132
    %1578 = vmatpush1.bf16.msra.mxu0 %v1131
    %1579 = vmatprep.subr.bf16.mxu0 %v1136
    %1580 = vmatpush1.bf16.msra.mxu0 %v1135
    %1581 = vmatprep.subr.bf16.mxu0 %v1140
    %1582 = vmatpush1.bf16.msra.mxu0 %v1139
    %1583 = vmatprep.subr.bf16.mxu0 %v1144
    %1584 = vmatpush1.bf16.msra.mxu0 %v1143
    %1585 = vmatprep.subr.bf16.mxu0 %v1148
    %1586 = vmatpush1.bf16.msra.mxu0 %v1147
    %1587 = vmatprep.subr.bf16.mxu0 %v1152
    %1588 = vmatpush1.bf16.msra.mxu0 %v1151
    %1589 = vmatprep.subr.bf16.mxu0 %v1156
    %1590 = vmatpush1.bf16.msra.mxu0 %v1155
    %1591 = vmatprep.subr.bf16.mxu0 %v1160
    %1592 = vmatpush1.bf16.msra.mxu0 %v1159
    %1593 = vmatprep.subr.bf16.mxu0 %v1164
    %1594 = vmatpush1.bf16.msra.mxu0 %v1163
    %1595 = vmatprep.subr.bf16.mxu0 %v1168
    %1596 = vmatpush1.bf16.msra.mxu0 %v1167
    %1597 = vmatprep.subr.bf16.mxu0 %v1172
    %1598 = vmatpush1.bf16.msra.mxu0 %v1171
    %1599 = vmatprep.subr.bf16.mxu0 %v1176
    %1600 = vmatpush1.bf16.msra.mxu0 %v1175
    %1601 = vmatprep.subr.bf16.mxu0 %v1180
    %1602 = vmatpush1.bf16.msra.mxu0 %v1179
    %1603 = vmatprep.subr.bf16.mxu0 %v1184
    %1604 = vmatpush1.bf16.msra.mxu0 %v1183
    %1605 = vmatprep.subr.bf16.mxu0 %v1188
    %1606 = vmatpush1.bf16.msra.mxu0 %v1187
    %1607 = vmatprep.mubr.bf16.mxu0 %v154
    %1608 = vmatmul.mubr.bf16.gmra.mrb[0].mxu0 %v153
    %v1609 = vpop.f32.mrb[0].mxu0
    %v1610 = vadd.f32 %v438, %v1609
    %v1611 = vpop.f32.mrb[0].mxu0
    %v1612 = vadd.f32 %v442, %v1611
    %v1613 = vpop.f32.mrb[0].mxu0
    %v1614 = vadd.f32 %v438, %v1613
    %v1615 = vpop.f32.mrb[0].mxu0
    %v1616 = vadd.f32 %v442, %v1615
    %1617 = vmatprep.mubr.bf16.mxu0 %v161
    %1618 = vmatmul.mubr.bf16.gmra.mrb[0].mxu0 %v160
    %v1619 = vpop.f32.mrb[0].mxu0
    %v1620 = vadd.f32 %v438, %v1619
    %v1621 = vpop.f32.mrb[0].mxu0
    %v1622 = vadd.f32 %v442, %v1621
    %v1623 = vpop.f32.mrb[0].mxu0
    %v1624 = vadd.f32 %v438, %v1623
    %v1625 = vpop.f32.mrb[0].mxu0
    %v1626 = vadd.f32 %v442, %v1625
    %1627 = vmatprep.mubr.bf16.mxu0 %v168
    %1628 = vmatmul.mubr.bf16.gmra.mrb[0].mxu0 %v167
    %v1629 = vpop.f32.mrb[0].mxu0
    %v1630 = vadd.f32 %v438, %v1629
    %v1631 = vpop.f32.mrb[0].mxu0
    %v1632 = vadd.f32 %v442, %v1631
    %v1633 = vpop.f32.mrb[0].mxu0
    %v1634 = vadd.f32 %v438, %v1633
    %v1635 = vpop.f32.mrb[0].mxu0
    %v1636 = vadd.f32 %v442, %v1635
    %1637 = vmatprep.mubr.bf16.mxu0 %v175
    %1638 = vmatmul.mubr.bf16.gmra.mrb[0].mxu0 %v174
    %v1639 = vpop.f32.mrb[0].mxu0
    %v1640 = vadd.f32 %v438, %v1639
    %v1641 = vpop.f32.mrb[0].mxu0
    %v1642 = vadd.f32 %v442, %v1641
    %v1643 = vpop.f32.mrb[0].mxu0
    %v1644 = vadd.f32 %v438, %v1643
    %v1645 = vpop.f32.mrb[0].mxu0
    %v1646 = vadd.f32 %v442, %v1645
    %1647 = vmatprep.mubr.bf16.mxu0 %v182
    %1648 = vmatmul.mubr.bf16.gmra.mrb[0].mxu0 %v181
    %v1649 = vpop.f32.mrb[0].mxu0
    %v1650 = vadd.f32 %v438, %v1649
    %v1651 = vpop.f32.mrb[0].mxu0
    %v1652 = vadd.f32 %v442, %v1651
    %v1653 = vpop.f32.mrb[0].mxu0
    %v1654 = vadd.f32 %v438, %v1653
    %v1655 = vpop.f32.mrb[0].mxu0
    %v1656 = vadd.f32 %v442, %v1655
    %1657 = vmatprep.mubr.bf16.mxu0 %v189
    %1658 = vmatmul.mubr.bf16.gmra.mrb[0].mxu0 %v188
    %v1659 = vpop.f32.mrb[0].mxu0
    %v1660 = vadd.f32 %v438, %v1659
    %v1661 = vpop.f32.mrb[0].mxu0
    %v1662 = vadd.f32 %v442, %v1661
    %v1663 = vpop.f32.mrb[0].mxu0
    %v1664 = vadd.f32 %v438, %v1663
    %v1665 = vpop.f32.mrb[0].mxu0
    %v1666 = vadd.f32 %v442, %v1665
    %1667 = vmatprep.mubr.bf16.mxu0 %v196
    %1668 = vmatmul.mubr.bf16.gmra.mrb[0].mxu0 %v195
    %v1669 = vpop.f32.mrb[0].mxu0
    %v1670 = vadd.f32 %v438, %v1669
    %v1671 = vpop.f32.mrb[0].mxu0
    %v1672 = vadd.f32 %v442, %v1671
    %v1673 = vpop.f32.mrb[0].mxu0
    %v1674 = vadd.f32 %v438, %v1673
    %v1675 = vpop.f32.mrb[0].mxu0
    %v1676 = vadd.f32 %v442, %v1675
    %1677 = vmatprep.mubr.bf16.mxu0 %v203
    %1678 = vmatmul.mubr.bf16.gmra.mrb[0].mxu0 %v202
    %v1679 = vpop.f32.mrb[0].mxu0
    %v1680 = vadd.f32 %v438, %v1679
    %v1681 = vpop.f32.mrb[0].mxu0
    %v1682 = vadd.f32 %v442, %v1681
    %v1683 = vpop.f32.mrb[0].mxu0
    %v1684 = vadd.f32 %v438, %v1683
    %v1685 = vpop.f32.mrb[0].mxu0
    %v1686 = vadd.f32 %v442, %v1685
    %1687 = vdwg.mxu0
    %1688 = vmatprep.subr.bf16.mxu0 %v1192
    %1689 = vmatpush1.bf16.msra.mxu0 %v1191
    %1690 = vmatprep.subr.bf16.mxu0 %v1196
    %1691 = vmatpush1.bf16.msra.mxu0 %v1195
    %1692 = vmatprep.subr.bf16.mxu0 %v1200
    %1693 = vmatpush1.bf16.msra.mxu0 %v1199
    %1694 = vmatprep.subr.bf16.mxu0 %v1204
    %1695 = vmatpush1.bf16.msra.mxu0 %v1203
    %1696 = vmatprep.subr.bf16.mxu0 %v1208
    %1697 = vmatpush1.bf16.msra.mxu0 %v1207
    %1698 = vmatprep.subr.bf16.mxu0 %v1212
    %1699 = vmatpush1.bf16.msra.mxu0 %v1211
    %1700 = vmatprep.subr.bf16.mxu0 %v1216
    %1701 = vmatpush1.bf16.msra.mxu0 %v1215
    %1702 = vmatprep.subr.bf16.mxu0 %v1220
    %1703 = vmatpush1.bf16.msra.mxu0 %v1219
    %1704 = vmatprep.subr.bf16.mxu0 %v1224
    %1705 = vmatpush1.bf16.msra.mxu0 %v1223
    %1706 = vmatprep.subr.bf16.mxu0 %v1228
    %1707 = vmatpush1.bf16.msra.mxu0 %v1227
    %1708 = vmatprep.subr.bf16.mxu0 %v1232
    %1709 = vmatpush1.bf16.msra.mxu0 %v1231
    %1710 = vmatprep.subr.bf16.mxu0 %v1236
    %1711 = vmatpush1.bf16.msra.mxu0 %v1235
    %1712 = vmatprep.subr.bf16.mxu0 %v1240
    %1713 = vmatpush1.bf16.msra.mxu0 %v1239
    %1714 = vmatprep.subr.bf16.mxu0 %v1244
    %1715 = vmatpush1.bf16.msra.mxu0 %v1243
    %1716 = vmatprep.subr.bf16.mxu0 %v1248
    %1717 = vmatpush1.bf16.msra.mxu0 %v1247
    %1718 = vmatprep.subr.bf16.mxu0 %v1252
    %1719 = vmatpush1.bf16.msra.mxu0 %v1251
    %1720 = vmatprep.mubr.bf16.mxu0 %v156
    %1721 = vmatmul.mubr.bf16.gmra.mrb[0].mxu0 %v155
    %v1722 = vpop.f32.mrb[0].mxu0
    %v1723 = vadd.f32 %v1610, %v1722
    %v1724 = vpop.f32.mrb[0].mxu0
    %v1725 = vadd.f32 %v1612, %v1724
    %v1726 = vpop.f32.mrb[0].mxu0
    %v1727 = vadd.f32 %v1614, %v1726
    %v1728 = vpop.f32.mrb[0].mxu0
    %v1729 = vadd.f32 %v1616, %v1728
    %1730 = vmatprep.mubr.bf16.mxu0 %v163
    %1731 = vmatmul.mubr.bf16.gmra.mrb[0].mxu0 %v162
    %v1732 = vpop.f32.mrb[0].mxu0
    %v1733 = vadd.f32 %v1620, %v1732
    %v1734 = vpop.f32.mrb[0].mxu0
    %v1735 = vadd.f32 %v1622, %v1734
    %v1736 = vpop.f32.mrb[0].mxu0
    %v1737 = vadd.f32 %v1624, %v1736
    %v1738 = vpop.f32.mrb[0].mxu0
    %v1739 = vadd.f32 %v1626, %v1738
    %1740 = vmatprep.mubr.bf16.mxu0 %v170
    %1741 = vmatmul.mubr.bf16.gmra.mrb[0].mxu0 %v169
    %v1742 = vpop.f32.mrb[0].mxu0
    %v1743 = vadd.f32 %v1630, %v1742
    %v1744 = vpop.f32.mrb[0].mxu0
    %v1745 = vadd.f32 %v1632, %v1744
    %v1746 = vpop.f32.mrb[0].mxu0
    %v1747 = vadd.f32 %v1634, %v1746
    %v1748 = vpop.f32.mrb[0].mxu0
    %v1749 = vadd.f32 %v1636, %v1748
    %1750 = vmatprep.mubr.bf16.mxu0 %v177
    %1751 = vmatmul.mubr.bf16.gmra.mrb[0].mxu0 %v176
    %v1752 = vpop.f32.mrb[0].mxu0
    %v1753 = vadd.f32 %v1640, %v1752
    %v1754 = vpop.f32.mrb[0].mxu0
    %v1755 = vadd.f32 %v1642, %v1754
    %v1756 = vpop.f32.mrb[0].mxu0
    %v1757 = vadd.f32 %v1644, %v1756
    %v1758 = vpop.f32.mrb[0].mxu0
    %v1759 = vadd.f32 %v1646, %v1758
    %1760 = vmatprep.mubr.bf16.mxu0 %v184
    %1761 = vmatmul.mubr.bf16.gmra.mrb[0].mxu0 %v183
    %v1762 = vpop.f32.mrb[0].mxu0
    %v1763 = vadd.f32 %v1650, %v1762
    %v1764 = vpop.f32.mrb[0].mxu0
    %v1765 = vadd.f32 %v1652, %v1764
    %v1766 = vpop.f32.mrb[0].mxu0
    %v1767 = vadd.f32 %v1654, %v1766
    %v1768 = vpop.f32.mrb[0].mxu0
    %v1769 = vadd.f32 %v1656, %v1768
    %1770 = vmatprep.mubr.bf16.mxu0 %v191
    %1771 = vmatmul.mubr.bf16.gmra.mrb[0].mxu0 %v190
    %v1772 = vpop.f32.mrb[0].mxu0
    %v1773 = vadd.f32 %v1660, %v1772
    %v1774 = vpop.f32.mrb[0].mxu0
    %v1775 = vadd.f32 %v1662, %v1774
    %v1776 = vpop.f32.mrb[0].mxu0
    %v1777 = vadd.f32 %v1664, %v1776
    %v1778 = vpop.f32.mrb[0].mxu0
    %v1779 = vadd.f32 %v1666, %v1778
    %1780 = vmatprep.mubr.bf16.mxu0 %v198
    %1781 = vmatmul.mubr.bf16.gmra.mrb[0].mxu0 %v197
    %v1782 = vpop.f32.mrb[0].mxu0
    %v1783 = vadd.f32 %v1670, %v1782
    %v1784 = vpop.f32.mrb[0].mxu0
    %v1785 = vadd.f32 %v1672, %v1784
    %v1786 = vpop.f32.mrb[0].mxu0
    %v1787 = vadd.f32 %v1674, %v1786
    %v1788 = vpop.f32.mrb[0].mxu0
    %v1789 = vadd.f32 %v1676, %v1788
    %1790 = vmatprep.mubr.bf16.mxu0 %v205
    %1791 = vmatmul.mubr.bf16.gmra.mrb[0].mxu0 %v204
    %v1792 = vpop.f32.mrb[0].mxu0
    %v1793 = vadd.f32 %v1680, %v1792
    %v1794 = vpop.f32.mrb[0].mxu0
    %v1795 = vadd.f32 %v1682, %v1794
    %v1796 = vpop.f32.mrb[0].mxu0
    %v1797 = vadd.f32 %v1684, %v1796
    %v1798 = vpop.f32.mrb[0].mxu0
    %v1799 = vadd.f32 %v1686, %v1798
    %1800 = vdwg.mxu0
    %1801 = vmatprep.subr.bf16.mxu0 %v1256
    %1802 = vmatpush1.bf16.msra.mxu0 %v1255
    %1803 = vmatprep.subr.bf16.mxu0 %v1260
    %1804 = vmatpush1.bf16.msra.mxu0 %v1259
    %1805 = vmatprep.subr.bf16.mxu0 %v1264
    %1806 = vmatpush1.bf16.msra.mxu0 %v1263
    %1807 = vmatprep.subr.bf16.mxu0 %v1268
    %1808 = vmatpush1.bf16.msra.mxu0 %v1267
    %1809 = vmatprep.subr.bf16.mxu0 %v1272
    %1810 = vmatpush1.bf16.msra.mxu0 %v1271
    %1811 = vmatprep.subr.bf16.mxu0 %v1276
    %1812 = vmatpush1.bf16.msra.mxu0 %v1275
    %1813 = vmatprep.subr.bf16.mxu0 %v1280
    %1814 = vmatpush1.bf16.msra.mxu0 %v1279
    %1815 = vmatprep.subr.bf16.mxu0 %v1284
    %1816 = vmatpush1.bf16.msra.mxu0 %v1283
    %1817 = vmatprep.subr.bf16.mxu0 %v1288
    %1818 = vmatpush1.bf16.msra.mxu0 %v1287
    %1819 = vmatprep.subr.bf16.mxu0 %v1292
    %1820 = vmatpush1.bf16.msra.mxu0 %v1291
    %1821 = vmatprep.subr.bf16.mxu0 %v1296
    %1822 = vmatpush1.bf16.msra.mxu0 %v1295
    %1823 = vmatprep.subr.bf16.mxu0 %v1300
    %1824 = vmatpush1.bf16.msra.mxu0 %v1299
    %1825 = vmatprep.subr.bf16.mxu0 %v1304
    %1826 = vmatpush1.bf16.msra.mxu0 %v1303
    %1827 = vmatprep.subr.bf16.mxu0 %v1308
    %1828 = vmatpush1.bf16.msra.mxu0 %v1307
    %1829 = vmatprep.subr.bf16.mxu0 %v1312
    %1830 = vmatpush1.bf16.msra.mxu0 %v1311
    %1831 = vmatprep.subr.bf16.mxu0 %v1316
    %1832 = vmatpush1.bf16.msra.mxu0 %v1315
    %1833 = vmatprep.mubr.bf16.mxu0 %v158
    %1834 = vmatmul.mubr.bf16.gmra.mrb[0].mxu0 %v157
    %v1835 = vpop.f32.mrb[0].mxu0
    %v1836 = vadd.f32 %v1723, %v1835
    %v1837 = vpop.f32.mrb[0].mxu0
    %v1838 = vadd.f32 %v1725, %v1837
    %v1839 = vpop.f32.mrb[0].mxu0
    %v1840 = vadd.f32 %v1727, %v1839
    %v1841 = vpop.f32.mrb[0].mxu0
    %v1842 = vadd.f32 %v1729, %v1841
    %1843 = vmatprep.mubr.bf16.mxu0 %v165
    %1844 = vmatmul.mubr.bf16.gmra.mrb[0].mxu0 %v164
    %v1845 = vpop.f32.mrb[0].mxu0
    %v1846 = vadd.f32 %v1733, %v1845
    %v1847 = vpop.f32.mrb[0].mxu0
    %v1848 = vadd.f32 %v1735, %v1847
    %v1849 = vpop.f32.mrb[0].mxu0
    %v1850 = vadd.f32 %v1737, %v1849
    %v1851 = vpop.f32.mrb[0].mxu0
    %v1852 = vadd.f32 %v1739, %v1851
    %1853 = vmatprep.mubr.bf16.mxu0 %v172
    %1854 = vmatmul.mubr.bf16.gmra.mrb[0].mxu0 %v171
    %v1855 = vpop.f32.mrb[0].mxu0
    %v1856 = vadd.f32 %v1743, %v1855
    %v1857 = vpop.f32.mrb[0].mxu0
    %v1858 = vadd.f32 %v1745, %v1857
    %v1859 = vpop.f32.mrb[0].mxu0
    %v1860 = vadd.f32 %v1747, %v1859
    %v1861 = vpop.f32.mrb[0].mxu0
    %v1862 = vadd.f32 %v1749, %v1861
    %1863 = vmatprep.mubr.bf16.mxu0 %v179
    %1864 = vmatmul.mubr.bf16.gmra.mrb[0].mxu0 %v178
    %v1865 = vpop.f32.mrb[0].mxu0
    %v1866 = vadd.f32 %v1753, %v1865
    %v1867 = vpop.f32.mrb[0].mxu0
    %v1868 = vadd.f32 %v1755, %v1867
    %v1869 = vpop.f32.mrb[0].mxu0
    %v1870 = vadd.f32 %v1757, %v1869
    %v1871 = vpop.f32.mrb[0].mxu0
    %v1872 = vadd.f32 %v1759, %v1871
    %1873 = vmatprep.mubr.bf16.mxu0 %v186
    %1874 = vmatmul.mubr.bf16.gmra.mrb[0].mxu0 %v185
    %v1875 = vpop.f32.mrb[0].mxu0
    %v1876 = vadd.f32 %v1763, %v1875
    %v1877 = vpop.f32.mrb[0].mxu0
    %v1878 = vadd.f32 %v1765, %v1877
    %v1879 = vpop.f32.mrb[0].mxu0
    %v1880 = vadd.f32 %v1767, %v1879
    %v1881 = vpop.f32.mrb[0].mxu0
    %v1882 = vadd.f32 %v1769, %v1881
    %1883 = vmatprep.mubr.bf16.mxu0 %v193
    %1884 = vmatmul.mubr.bf16.gmra.mrb[0].mxu0 %v192
    %v1885 = vpop.f32.mrb[0].mxu0
    %v1886 = vadd.f32 %v1773, %v1885
    %v1887 = vpop.f32.mrb[0].mxu0
    %v1888 = vadd.f32 %v1775, %v1887
    %v1889 = vpop.f32.mrb[0].mxu0
    %v1890 = vadd.f32 %v1777, %v1889
    %v1891 = vpop.f32.mrb[0].mxu0
    %v1892 = vadd.f32 %v1779, %v1891
    %1893 = vmatprep.mubr.bf16.mxu0 %v200
    %1894 = vmatmul.mubr.bf16.gmra.mrb[0].mxu0 %v199
    %v1895 = vpop.f32.mrb[0].mxu0
    %v1896 = vadd.f32 %v1783, %v1895
    %v1897 = vpop.f32.mrb[0].mxu0
    %v1898 = vadd.f32 %v1785, %v1897
    %v1899 = vpop.f32.mrb[0].mxu0
    %v1900 = vadd.f32 %v1787, %v1899
    %v1901 = vpop.f32.mrb[0].mxu0
    %v1902 = vadd.f32 %v1789, %v1901
    %1903 = vmatprep.mubr.bf16.mxu0 %v207
    %1904 = vmatmul.mubr.bf16.gmra.mrb[0].mxu0 %v206
    %v1905 = vpop.f32.mrb[0].mxu0
    %v1906 = vadd.f32 %v1793, %v1905
    %v1907 = vpop.f32.mrb[0].mxu0
    %v1908 = vadd.f32 %v1795, %v1907
    %v1909 = vpop.f32.mrb[0].mxu0
    %v1910 = vadd.f32 %v1797, %v1909
    %v1911 = vpop.f32.mrb[0].mxu0
    %v1912 = vadd.f32 %v1799, %v1911
    %1913 = vdwg.mxu0
    %1914 = vmatprep.subr.bf16.mxu0 %v1320
    %1915 = vmatpush1.bf16.msra.mxu0 %v1319
    %1916 = vmatprep.subr.bf16.mxu0 %v1324
    %1917 = vmatpush1.bf16.msra.mxu0 %v1323
    %1918 = vmatprep.subr.bf16.mxu0 %v1328
    %1919 = vmatpush1.bf16.msra.mxu0 %v1327
    %1920 = vmatprep.subr.bf16.mxu0 %v1332
    %1921 = vmatpush1.bf16.msra.mxu0 %v1331
    %1922 = vmatprep.subr.bf16.mxu0 %v1336
    %1923 = vmatpush1.bf16.msra.mxu0 %v1335
    %1924 = vmatprep.subr.bf16.mxu0 %v1340
    %1925 = vmatpush1.bf16.msra.mxu0 %v1339
    %1926 = vmatprep.subr.bf16.mxu0 %v1344
    %1927 = vmatpush1.bf16.msra.mxu0 %v1343
    %1928 = vmatprep.subr.bf16.mxu0 %v1348
    %1929 = vmatpush1.bf16.msra.mxu0 %v1347
    %1930 = vmatprep.subr.bf16.mxu0 0
    %1931 = vmatpush1.bf16.msra.mxu0 0
    %1932 = vmatprep.subr.bf16.mxu0 0
    %1933 = vmatpush1.bf16.msra.mxu0 0
    %1934 = vmatprep.subr.bf16.mxu0 0
    %1935 = vmatpush1.bf16.msra.mxu0 0
    %1936 = vmatprep.subr.bf16.mxu0 0
    %1937 = vmatpush1.bf16.msra.mxu0 0
    %1938 = vmatprep.subr.bf16.mxu0 0
    %1939 = vmatpush1.bf16.msra.mxu0 0
    %1940 = vmatprep.subr.bf16.mxu0 0
    %1941 = vmatpush1.bf16.msra.mxu0 0
    %1942 = vmatprep.subr.bf16.mxu0 0
    %1943 = vmatpush1.bf16.msra.mxu0 0
    %1944 = vmatprep.subr.bf16.mxu0 0
    %1945 = vmatpush1.bf16.msra.mxu0 0
    %1946 = vmatprep.mubr.bf16.mxu0 0
    %1947 = vmatmul.mubr.bf16.gmra.mrb[0].mxu0 %v159
    %v1948 = vpop.f32.mrb[0].mxu0
    %v1949 = vadd.f32 %v1836, %v1948
    %v1950 = vpop.f32.mrb[0].mxu0
    %v1951 = vadd.f32 %v1838, %v1950
    %v1952 = vpop.f32.mrb[0].mxu0
    %v1953 = vadd.f32 %v1840, %v1952
    %v1954 = vpop.f32.mrb[0].mxu0
    %v1955 = vadd.f32 %v1842, %v1954
    %1956 = vmatprep.mubr.bf16.mxu0 0
    %1957 = vmatmul.mubr.bf16.gmra.mrb[0].mxu0 %v166
    %v1958 = vpop.f32.mrb[0].mxu0
    %v1959 = vadd.f32 %v1846, %v1958
    %v1960 = vpop.f32.mrb[0].mxu0
    %v1961 = vadd.f32 %v1848, %v1960
    %v1962 = vpop.f32.mrb[0].mxu0
    %v1963 = vadd.f32 %v1850, %v1962
    %v1964 = vpop.f32.mrb[0].mxu0
    %v1965 = vadd.f32 %v1852, %v1964
    %1966 = vmatprep.mubr.bf16.mxu0 0
    %1967 = vmatmul.mubr.bf16.gmra.mrb[0].mxu0 %v173
    %v1968 = vpop.f32.mrb[0].mxu0
    %v1969 = vadd.f32 %v1856, %v1968
    %v1970 = vpop.f32.mrb[0].mxu0
    %v1971 = vadd.f32 %v1858, %v1970
    %v1972 = vpop.f32.mrb[0].mxu0
    %v1973 = vadd.f32 %v1860, %v1972
    %v1974 = vpop.f32.mrb[0].mxu0
    %v1975 = vadd.f32 %v1862, %v1974
    %1976 = vmatprep.mubr.bf16.mxu0 0
    %1977 = vmatmul.mubr.bf16.gmra.mrb[0].mxu0 %v180
    %v1978 = vpop.f32.mrb[0].mxu0
    %v1979 = vadd.f32 %v1866, %v1978
    %v1980 = vpop.f32.mrb[0].mxu0
    %v1981 = vadd.f32 %v1868, %v1980
    %v1982 = vpop.f32.mrb[0].mxu0
    %v1983 = vadd.f32 %v1870, %v1982
    %v1984 = vpop.f32.mrb[0].mxu0
    %v1985 = vadd.f32 %v1872, %v1984
    %1986 = vmatprep.mubr.bf16.mxu0 0
    %1987 = vmatmul.mubr.bf16.gmra.mrb[0].mxu0 %v187
    %v1988 = vpop.f32.mrb[0].mxu0
    %v1989 = vadd.f32 %v1876, %v1988
    %v1990 = vpop.f32.mrb[0].mxu0
    %v1991 = vadd.f32 %v1878, %v1990
    %v1992 = vpop.f32.mrb[0].mxu0
    %v1993 = vadd.f32 %v1880, %v1992
    %v1994 = vpop.f32.mrb[0].mxu0
    %v1995 = vadd.f32 %v1882, %v1994
    %1996 = vmatprep.mubr.bf16.mxu0 0
    %1997 = vmatmul.mubr.bf16.gmra.mrb[0].mxu0 %v194
    %v1998 = vpop.f32.mrb[0].mxu0
    %v1999 = vadd.f32 %v1886, %v1998
    %v2000 = vpop.f32.mrb[0].mxu0
    %v2001 = vadd.f32 %v1888, %v2000
    %v2002 = vpop.f32.mrb[0].mxu0
    %v2003 = vadd.f32 %v1890, %v2002
    %v2004 = vpop.f32.mrb[0].mxu0
    %v2005 = vadd.f32 %v1892, %v2004
    %2006 = vmatprep.mubr.bf16.mxu0 0
    %2007 = vmatmul.mubr.bf16.gmra.mrb[0].mxu0 %v201
    %v2008 = vpop.f32.mrb[0].mxu0
    %v2009 = vadd.f32 %v1896, %v2008
    %v2010 = vpop.f32.mrb[0].mxu0
    %v2011 = vadd.f32 %v1898, %v2010
    %v2012 = vpop.f32.mrb[0].mxu0
    %v2013 = vadd.f32 %v1900, %v2012
    %v2014 = vpop.f32.mrb[0].mxu0
    %v2015 = vadd.f32 %v1902, %v2014
    %2016 = vmatprep.mubr.bf16.mxu0 0
    %2017 = vmatmul.mubr.bf16.gmra.mrb[0].mxu0 %v208
    %v2018 = vpop.f32.mrb[0].mxu0
    %v2019 = vadd.f32 %v1906, %v2018
    %v2020 = vpop.f32.mrb[0].mxu0
    %v2021 = vadd.f32 %v1908, %v2020
    %v2022 = vpop.f32.mrb[0].mxu0
    %v2023 = vadd.f32 %v1910, %v2022
    %v2024 = vpop.f32.mrb[0].mxu0
    %v2025 = vadd.f32 %v1912, %v2024
    %2026 = vdwg.mxu0
    %2027 = vmatprep.subr.bf16.mxu0 %v1130
    %2028 = vmatpush1.bf16.msra.mxu0 %v1129
    %2029 = vmatprep.subr.bf16.mxu0 %v1134
    %2030 = vmatpush1.bf16.msra.mxu0 %v1133
    %2031 = vmatprep.subr.bf16.mxu0 %v1138
    %2032 = vmatpush1.bf16.msra.mxu0 %v1137
    %2033 = vmatprep.subr.bf16.mxu0 %v1142
    %2034 = vmatpush1.bf16.msra.mxu0 %v1141
    %2035 = vmatprep.subr.bf16.mxu0 %v1146
    %2036 = vmatpush1.bf16.msra.mxu0 %v1145
    %2037 = vmatprep.subr.bf16.mxu0 %v1150
    %2038 = vmatpush1.bf16.msra.mxu0 %v1149
    %2039 = vmatprep.subr.bf16.mxu0 %v1154
    %2040 = vmatpush1.bf16.msra.mxu0 %v1153
    %2041 = vmatprep.subr.bf16.mxu0 %v1158
    %2042 = vmatpush1.bf16.msra.mxu0 %v1157
    %2043 = vmatprep.subr.bf16.mxu0 %v1162
    %2044 = vmatpush1.bf16.msra.mxu0 %v1161
    %2045 = vmatprep.subr.bf16.mxu0 %v1166
    %2046 = vmatpush1.bf16.msra.mxu0 %v1165
    %2047 = vmatprep.subr.bf16.mxu0 %v1170
    %2048 = vmatpush1.bf16.msra.mxu0 %v1169
    %2049 = vmatprep.subr.bf16.mxu0 %v1174
    %2050 = vmatpush1.bf16.msra.mxu0 %v1173
    %2051 = vmatprep.subr.bf16.mxu0 %v1178
    %2052 = vmatpush1.bf16.msra.mxu0 %v1177
    %2053 = vmatprep.subr.bf16.mxu0 %v1182
    %2054 = vmatpush1.bf16.msra.mxu0 %v1181
    %2055 = vmatprep.subr.bf16.mxu0 %v1186
    %2056 = vmatpush1.bf16.msra.mxu0 %v1185
    %2057 = vmatprep.subr.bf16.mxu0 %v1190
    %2058 = vmatpush1.bf16.msra.mxu0 %v1189
    %2059 = vmatprep.mubr.bf16.mxu0 %v154
    %2060 = vmatmul.mubr.bf16.gmra.mrb[0].mxu0 %v153
    %v2061 = vpop.f32.mrb[0].mxu0
    %v2062 = vadd.f32 %v446, %v2061
    %v2063 = vpop.f32.mrb[0].mxu0
    %v2064 = vadd.f32 %v450, %v2063
    %v2065 = vpop.f32.mrb[0].mxu0
    %v2066 = vadd.f32 %v446, %v2065
    %v2067 = vpop.f32.mrb[0].mxu0
    %v2068 = vadd.f32 %v450, %v2067
    %2069 = vmatprep.mubr.bf16.mxu0 %v161
    %2070 = vmatmul.mubr.bf16.gmra.mrb[0].mxu0 %v160
    %v2071 = vpop.f32.mrb[0].mxu0
    %v2072 = vadd.f32 %v446, %v2071
    %v2073 = vpop.f32.mrb[0].mxu0
    %v2074 = vadd.f32 %v450, %v2073
    %v2075 = vpop.f32.mrb[0].mxu0
    %v2076 = vadd.f32 %v446, %v2075
    %v2077 = vpop.f32.mrb[0].mxu0
    %v2078 = vadd.f32 %v450, %v2077
    %2079 = vmatprep.mubr.bf16.mxu0 %v168
    %2080 = vmatmul.mubr.bf16.gmra.mrb[0].mxu0 %v167
    %v2081 = vpop.f32.mrb[0].mxu0
    %v2082 = vadd.f32 %v446, %v2081
    %v2083 = vpop.f32.mrb[0].mxu0
    %v2084 = vadd.f32 %v450, %v2083
    %v2085 = vpop.f32.mrb[0].mxu0
    %v2086 = vadd.f32 %v446, %v2085
    %v2087 = vpop.f32.mrb[0].mxu0
    %v2088 = vadd.f32 %v450, %v2087
    %2089 = vmatprep.mubr.bf16.mxu0 %v175
    %2090 = vmatmul.mubr.bf16.gmra.mrb[0].mxu0 %v174
    %v2091 = vpop.f32.mrb[0].mxu0
    %v2092 = vadd.f32 %v446, %v2091
    %v2093 = vpop.f32.mrb[0].mxu0
    %v2094 = vadd.f32 %v450, %v2093
    %v2095 = vpop.f32.mrb[0].mxu0
    %v2096 = vadd.f32 %v446, %v2095
    %v2097 = vpop.f32.mrb[0].mxu0
    %v2098 = vadd.f32 %v450, %v2097
    %2099 = vmatprep.mubr.bf16.mxu0 %v182
    %2100 = vmatmul.mubr.bf16.gmra.mrb[0].mxu0 %v181
    %v2101 = vpop.f32.mrb[0].mxu0
    %v2102 = vadd.f32 %v446, %v2101
    %v2103 = vpop.f32.mrb[0].mxu0
    %v2104 = vadd.f32 %v450, %v2103
    %v2105 = vpop.f32.mrb[0].mxu0
    %v2106 = vadd.f32 %v446, %v2105
    %v2107 = vpop.f32.mrb[0].mxu0
    %v2108 = vadd.f32 %v450, %v2107
    %2109 = vmatprep.mubr.bf16.mxu0 %v189
    %2110 = vmatmul.mubr.bf16.gmra.mrb[0].mxu0 %v188
    %v2111 = vpop.f32.mrb[0].mxu0
    %v2112 = vadd.f32 %v446, %v2111
    %v2113 = vpop.f32.mrb[0].mxu0
    %v2114 = vadd.f32 %v450, %v2113
    %v2115 = vpop.f32.mrb[0].mxu0
    %v2116 = vadd.f32 %v446, %v2115
    %v2117 = vpop.f32.mrb[0].mxu0
    %v2118 = vadd.f32 %v450, %v2117
    %2119 = vmatprep.mubr.bf16.mxu0 %v196
    %2120 = vmatmul.mubr.bf16.gmra.mrb[0].mxu0 %v195
    %v2121 = vpop.f32.mrb[0].mxu0
    %v2122 = vadd.f32 %v446, %v2121
    %v2123 = vpop.f32.mrb[0].mxu0
    %v2124 = vadd.f32 %v450, %v2123
    %v2125 = vpop.f32.mrb[0].mxu0
    %v2126 = vadd.f32 %v446, %v2125
    %v2127 = vpop.f32.mrb[0].mxu0
    %v2128 = vadd.f32 %v450, %v2127
    %2129 = vmatprep.mubr.bf16.mxu0 %v203
    %2130 = vmatmul.mubr.bf16.gmra.mrb[0].mxu0 %v202
    %v2131 = vpop.f32.mrb[0].mxu0
    %v2132 = vadd.f32 %v446, %v2131
    %v2133 = vpop.f32.mrb[0].mxu0
    %v2134 = vadd.f32 %v450, %v2133
    %v2135 = vpop.f32.mrb[0].mxu0
    %v2136 = vadd.f32 %v446, %v2135
    %v2137 = vpop.f32.mrb[0].mxu0
    %v2138 = vadd.f32 %v450, %v2137
    %2139 = vdwg.mxu0
    %2140 = vmatprep.subr.bf16.mxu0 %v1194
    %2141 = vmatpush1.bf16.msra.mxu0 %v1193
    %2142 = vmatprep.subr.bf16.mxu0 %v1198
    %2143 = vmatpush1.bf16.msra.mxu0 %v1197
    %2144 = vmatprep.subr.bf16.mxu0 %v1202
    %2145 = vmatpush1.bf16.msra.mxu0 %v1201
    %2146 = vmatprep.subr.bf16.mxu0 %v1206
    %2147 = vmatpush1.bf16.msra.mxu0 %v1205
    %2148 = vmatprep.subr.bf16.mxu0 %v1210
    %2149 = vmatpush1.bf16.msra.mxu0 %v1209
    %2150 = vmatprep.subr.bf16.mxu0 %v1214
    %2151 = vmatpush1.bf16.msra.mxu0 %v1213
    %2152 = vmatprep.subr.bf16.mxu0 %v1218
    %2153 = vmatpush1.bf16.msra.mxu0 %v1217
    %2154 = vmatprep.subr.bf16.mxu0 %v1222
    %2155 = vmatpush1.bf16.msra.mxu0 %v1221
    %2156 = vmatprep.subr.bf16.mxu0 %v1226
    %2157 = vmatpush1.bf16.msra.mxu0 %v1225
    %2158 = vmatprep.subr.bf16.mxu0 %v1230
    %2159 = vmatpush1.bf16.msra.mxu0 %v1229
    %2160 = vmatprep.subr.bf16.mxu0 %v1234
    %2161 = vmatpush1.bf16.msra.mxu0 %v1233
    %2162 = vmatprep.subr.bf16.mxu0 %v1238
    %2163 = vmatpush1.bf16.msra.mxu0 %v1237
    %2164 = vmatprep.subr.bf16.mxu0 %v1242
    %2165 = vmatpush1.bf16.msra.mxu0 %v1241
    %2166 = vmatprep.subr.bf16.mxu0 %v1246
    %2167 = vmatpush1.bf16.msra.mxu0 %v1245
    %2168 = vmatprep.subr.bf16.mxu0 %v1250
    %2169 = vmatpush1.bf16.msra.mxu0 %v1249
    %2170 = vmatprep.subr.bf16.mxu0 %v1254
    %2171 = vmatpush1.bf16.msra.mxu0 %v1253
    %2172 = vmatprep.mubr.bf16.mxu0 %v156
    %2173 = vmatmul.mubr.bf16.gmra.mrb[0].mxu0 %v155
    %v2174 = vpop.f32.mrb[0].mxu0
    %v2175 = vadd.f32 %v2062, %v2174
    %v2176 = vpop.f32.mrb[0].mxu0
    %v2177 = vadd.f32 %v2064, %v2176
    %v2178 = vpop.f32.mrb[0].mxu0
    %v2179 = vadd.f32 %v2066, %v2178
    %v2180 = vpop.f32.mrb[0].mxu0
    %v2181 = vadd.f32 %v2068, %v2180
    %2182 = vmatprep.mubr.bf16.mxu0 %v163
    %2183 = vmatmul.mubr.bf16.gmra.mrb[0].mxu0 %v162
    %v2184 = vpop.f32.mrb[0].mxu0
    %v2185 = vadd.f32 %v2072, %v2184
    %v2186 = vpop.f32.mrb[0].mxu0
    %v2187 = vadd.f32 %v2074, %v2186
    %v2188 = vpop.f32.mrb[0].mxu0
    %v2189 = vadd.f32 %v2076, %v2188
    %v2190 = vpop.f32.mrb[0].mxu0
    %v2191 = vadd.f32 %v2078, %v2190
    %2192 = vmatprep.mubr.bf16.mxu0 %v170
    %2193 = vmatmul.mubr.bf16.gmra.mrb[0].mxu0 %v169
    %v2194 = vpop.f32.mrb[0].mxu0
    %v2195 = vadd.f32 %v2082, %v2194
    %v2196 = vpop.f32.mrb[0].mxu0
    %v2197 = vadd.f32 %v2084, %v2196
    %v2198 = vpop.f32.mrb[0].mxu0
    %v2199 = vadd.f32 %v2086, %v2198
    %v2200 = vpop.f32.mrb[0].mxu0
    %v2201 = vadd.f32 %v2088, %v2200
    %2202 = vmatprep.mubr.bf16.mxu0 %v177
    %2203 = vmatmul.mubr.bf16.gmra.mrb[0].mxu0 %v176
    %v2204 = vpop.f32.mrb[0].mxu0
    %v2205 = vadd.f32 %v2092, %v2204
    %v2206 = vpop.f32.mrb[0].mxu0
    %v2207 = vadd.f32 %v2094, %v2206
    %v2208 = vpop.f32.mrb[0].mxu0
    %v2209 = vadd.f32 %v2096, %v2208
    %v2210 = vpop.f32.mrb[0].mxu0
    %v2211 = vadd.f32 %v2098, %v2210
    %2212 = vmatprep.mubr.bf16.mxu0 %v184
    %2213 = vmatmul.mubr.bf16.gmra.mrb[0].mxu0 %v183
    %v2214 = vpop.f32.mrb[0].mxu0
    %v2215 = vadd.f32 %v2102, %v2214
    %v2216 = vpop.f32.mrb[0].mxu0
    %v2217 = vadd.f32 %v2104, %v2216
    %v2218 = vpop.f32.mrb[0].mxu0
    %v2219 = vadd.f32 %v2106, %v2218
    %v2220 = vpop.f32.mrb[0].mxu0
    %v2221 = vadd.f32 %v2108, %v2220
    %2222 = vmatprep.mubr.bf16.mxu0 %v191
    %2223 = vmatmul.mubr.bf16.gmra.mrb[0].mxu0 %v190
    %v2224 = vpop.f32.mrb[0].mxu0
    %v2225 = vadd.f32 %v2112, %v2224
    %v2226 = vpop.f32.mrb[0].mxu0
    %v2227 = vadd.f32 %v2114, %v2226
    %v2228 = vpop.f32.mrb[0].mxu0
    %v2229 = vadd.f32 %v2116, %v2228
    %v2230 = vpop.f32.mrb[0].mxu0
    %v2231 = vadd.f32 %v2118, %v2230
    %2232 = vmatprep.mubr.bf16.mxu0 %v198
    %2233 = vmatmul.mubr.bf16.gmra.mrb[0].mxu0 %v197
    %v2234 = vpop.f32.mrb[0].mxu0
    %v2235 = vadd.f32 %v2122, %v2234
    %v2236 = vpop.f32.mrb[0].mxu0
    %v2237 = vadd.f32 %v2124, %v2236
    %v2238 = vpop.f32.mrb[0].mxu0
    %v2239 = vadd.f32 %v2126, %v2238
    %v2240 = vpop.f32.mrb[0].mxu0
    %v2241 = vadd.f32 %v2128, %v2240
    %2242 = vmatprep.mubr.bf16.mxu0 %v205
    %2243 = vmatmul.mubr.bf16.gmra.mrb[0].mxu0 %v204
    %v2244 = vpop.f32.mrb[0].mxu0
    %v2245 = vadd.f32 %v2132, %v2244
    %v2246 = vpop.f32.mrb[0].mxu0
    %v2247 = vadd.f32 %v2134, %v2246
    %v2248 = vpop.f32.mrb[0].mxu0
    %v2249 = vadd.f32 %v2136, %v2248
    %v2250 = vpop.f32.mrb[0].mxu0
    %v2251 = vadd.f32 %v2138, %v2250
    %2252 = vdwg.mxu0
    %2253 = vmatprep.subr.bf16.mxu0 %v1258
    %2254 = vmatpush1.bf16.msra.mxu0 %v1257
    %2255 = vmatprep.subr.bf16.mxu0 %v1262
    %2256 = vmatpush1.bf16.msra.mxu0 %v1261
    %2257 = vmatprep.subr.bf16.mxu0 %v1266
    %2258 = vmatpush1.bf16.msra.mxu0 %v1265
    %2259 = vmatprep.subr.bf16.mxu0 %v1270
    %2260 = vmatpush1.bf16.msra.mxu0 %v1269
    %2261 = vmatprep.subr.bf16.mxu0 %v1274
    %2262 = vmatpush1.bf16.msra.mxu0 %v1273
    %2263 = vmatprep.subr.bf16.mxu0 %v1278
    %2264 = vmatpush1.bf16.msra.mxu0 %v1277
    %2265 = vmatprep.subr.bf16.mxu0 %v1282
    %2266 = vmatpush1.bf16.msra.mxu0 %v1281
    %2267 = vmatprep.subr.bf16.mxu0 %v1286
    %2268 = vmatpush1.bf16.msra.mxu0 %v1285
    %2269 = vmatprep.subr.bf16.mxu0 %v1290
    %2270 = vmatpush1.bf16.msra.mxu0 %v1289
    %2271 = vmatprep.subr.bf16.mxu0 %v1294
    %2272 = vmatpush1.bf16.msra.mxu0 %v1293
    %2273 = vmatprep.subr.bf16.mxu0 %v1298
    %2274 = vmatpush1.bf16.msra.mxu0 %v1297
    %2275 = vmatprep.subr.bf16.mxu0 %v1302
    %2276 = vmatpush1.bf16.msra.mxu0 %v1301
    %2277 = vmatprep.subr.bf16.mxu0 %v1306
    %2278 = vmatpush1.bf16.msra.mxu0 %v1305
    %2279 = vmatprep.subr.bf16.mxu0 %v1310
    %2280 = vmatpush1.bf16.msra.mxu0 %v1309
    %2281 = vmatprep.subr.bf16.mxu0 %v1314
    %2282 = vmatpush1.bf16.msra.mxu0 %v1313
    %2283 = vmatprep.subr.bf16.mxu0 %v1318
    %2284 = vmatpush1.bf16.msra.mxu0 %v1317
    %2285 = vmatprep.mubr.bf16.mxu0 %v158
    %2286 = vmatmul.mubr.bf16.gmra.mrb[0].mxu0 %v157
    %v2287 = vpop.f32.mrb[0].mxu0
    %v2288 = vadd.f32 %v2175, %v2287
    %v2289 = vpop.f32.mrb[0].mxu0
    %v2290 = vadd.f32 %v2177, %v2289
    %v2291 = vpop.f32.mrb[0].mxu0
    %v2292 = vadd.f32 %v2179, %v2291
    %v2293 = vpop.f32.mrb[0].mxu0
    %v2294 = vadd.f32 %v2181, %v2293
    %2295 = vmatprep.mubr.bf16.mxu0 %v165
    %2296 = vmatmul.mubr.bf16.gmra.mrb[0].mxu0 %v164
    %v2297 = vpop.f32.mrb[0].mxu0
    %v2298 = vadd.f32 %v2185, %v2297
    %v2299 = vpop.f32.mrb[0].mxu0
    %v2300 = vadd.f32 %v2187, %v2299
    %v2301 = vpop.f32.mrb[0].mxu0
    %v2302 = vadd.f32 %v2189, %v2301
    %v2303 = vpop.f32.mrb[0].mxu0
    %v2304 = vadd.f32 %v2191, %v2303
    %2305 = vmatprep.mubr.bf16.mxu0 %v172
    %2306 = vmatmul.mubr.bf16.gmra.mrb[0].mxu0 %v171
    %v2307 = vpop.f32.mrb[0].mxu0
    %v2308 = vadd.f32 %v2195, %v2307
    %v2309 = vpop.f32.mrb[0].mxu0
    %v2310 = vadd.f32 %v2197, %v2309
    %v2311 = vpop.f32.mrb[0].mxu0
    %v2312 = vadd.f32 %v2199, %v2311
    %v2313 = vpop.f32.mrb[0].mxu0
    %v2314 = vadd.f32 %v2201, %v2313
    %2315 = vmatprep.mubr.bf16.mxu0 %v179
    %2316 = vmatmul.mubr.bf16.gmra.mrb[0].mxu0 %v178
    %v2317 = vpop.f32.mrb[0].mxu0
    %v2318 = vadd.f32 %v2205, %v2317
    %v2319 = vpop.f32.mrb[0].mxu0
    %v2320 = vadd.f32 %v2207, %v2319
    %v2321 = vpop.f32.mrb[0].mxu0
    %v2322 = vadd.f32 %v2209, %v2321
    %v2323 = vpop.f32.mrb[0].mxu0
    %v2324 = vadd.f32 %v2211, %v2323
    %2325 = vmatprep.mubr.bf16.mxu0 %v186
    %2326 = vmatmul.mubr.bf16.gmra.mrb[0].mxu0 %v185
    %v2327 = vpop.f32.mrb[0].mxu0
    %v2328 = vadd.f32 %v2215, %v2327
    %v2329 = vpop.f32.mrb[0].mxu0
    %v2330 = vadd.f32 %v2217, %v2329
    %v2331 = vpop.f32.mrb[0].mxu0
    %v2332 = vadd.f32 %v2219, %v2331
    %v2333 = vpop.f32.mrb[0].mxu0
    %v2334 = vadd.f32 %v2221, %v2333
    %2335 = vmatprep.mubr.bf16.mxu0 %v193
    %2336 = vmatmul.mubr.bf16.gmra.mrb[0].mxu0 %v192
    %v2337 = vpop.f32.mrb[0].mxu0
    %v2338 = vadd.f32 %v2225, %v2337
    %v2339 = vpop.f32.mrb[0].mxu0
    %v2340 = vadd.f32 %v2227, %v2339
    %v2341 = vpop.f32.mrb[0].mxu0
    %v2342 = vadd.f32 %v2229, %v2341
    %v2343 = vpop.f32.mrb[0].mxu0
    %v2344 = vadd.f32 %v2231, %v2343
    %2345 = vmatprep.mubr.bf16.mxu0 %v200
    %2346 = vmatmul.mubr.bf16.gmra.mrb[0].mxu0 %v199
    %v2347 = vpop.f32.mrb[0].mxu0
    %v2348 = vadd.f32 %v2235, %v2347
    %v2349 = vpop.f32.mrb[0].mxu0
    %v2350 = vadd.f32 %v2237, %v2349
    %v2351 = vpop.f32.mrb[0].mxu0
    %v2352 = vadd.f32 %v2239, %v2351
    %v2353 = vpop.f32.mrb[0].mxu0
    %v2354 = vadd.f32 %v2241, %v2353
    %2355 = vmatprep.mubr.bf16.mxu0 %v207
    %2356 = vmatmul.mubr.bf16.gmra.mrb[0].mxu0 %v206
    %v2357 = vpop.f32.mrb[0].mxu0
    %v2358 = vadd.f32 %v2245, %v2357
    %v2359 = vpop.f32.mrb[0].mxu0
    %v2360 = vadd.f32 %v2247, %v2359
    %v2361 = vpop.f32.mrb[0].mxu0
    %v2362 = vadd.f32 %v2249, %v2361
    %v2363 = vpop.f32.mrb[0].mxu0
    %v2364 = vadd.f32 %v2251, %v2363
    %2365 = vdwg.mxu0
    %2366 = vmatprep.subr.bf16.mxu0 %v1322
    %2367 = vmatpush1.bf16.msra.mxu0 %v1321
    %2368 = vmatprep.subr.bf16.mxu0 %v1326
    %2369 = vmatpush1.bf16.msra.mxu0 %v1325
    %2370 = vmatprep.subr.bf16.mxu0 %v1330
    %2371 = vmatpush1.bf16.msra.mxu0 %v1329
    %2372 = vmatprep.subr.bf16.mxu0 %v1334
    %2373 = vmatpush1.bf16.msra.mxu0 %v1333
    %2374 = vmatprep.subr.bf16.mxu0 %v1338
    %2375 = vmatpush1.bf16.msra.mxu0 %v1337
    %2376 = vmatprep.subr.bf16.mxu0 %v1342
    %2377 = vmatpush1.bf16.msra.mxu0 %v1341
    %2378 = vmatprep.subr.bf16.mxu0 %v1346
    %2379 = vmatpush1.bf16.msra.mxu0 %v1345
    %2380 = vmatprep.subr.bf16.mxu0 %v1350
    %2381 = vmatpush1.bf16.msra.mxu0 %v1349
    %2382 = vmatprep.subr.bf16.mxu0 0
    %2383 = vmatpush1.bf16.msra.mxu0 0
    %2384 = vmatprep.subr.bf16.mxu0 0
    %2385 = vmatpush1.bf16.msra.mxu0 0
    %2386 = vmatprep.subr.bf16.mxu0 0
    %2387 = vmatpush1.bf16.msra.mxu0 0
    %2388 = vmatprep.subr.bf16.mxu0 0
    %2389 = vmatpush1.bf16.msra.mxu0 0
    %2390 = vmatprep.subr.bf16.mxu0 0
    %2391 = vmatpush1.bf16.msra.mxu0 0
    %2392 = vmatprep.subr.bf16.mxu0 0
    %2393 = vmatpush1.bf16.msra.mxu0 0
    %2394 = vmatprep.subr.bf16.mxu0 0
    %2395 = vmatpush1.bf16.msra.mxu0 0
    %2396 = vmatprep.subr.bf16.mxu0 0
    %2397 = vmatpush1.bf16.msra.mxu0 0
    %2398 = vmatprep.mubr.bf16.mxu0 0
    %2399 = vmatmul.mubr.bf16.gmra.mrb[0].mxu0 %v159
    %v2400 = vpop.f32.mrb[0].mxu0
    %v2401 = vadd.f32 %v2288, %v2400
    %v2402 = vpop.f32.mrb[0].mxu0
    %v2403 = vadd.f32 %v2290, %v2402
    %v2404 = vpop.f32.mrb[0].mxu0
    %v2405 = vadd.f32 %v2292, %v2404
    %v2406 = vpop.f32.mrb[0].mxu0
    %v2407 = vadd.f32 %v2294, %v2406
    %2408 = vmatprep.mubr.bf16.mxu0 0
    %2409 = vmatmul.mubr.bf16.gmra.mrb[0].mxu0 %v166
    %v2410 = vpop.f32.mrb[0].mxu0
    %v2411 = vadd.f32 %v2298, %v2410
    %v2412 = vpop.f32.mrb[0].mxu0
    %v2413 = vadd.f32 %v2300, %v2412
    %v2414 = vpop.f32.mrb[0].mxu0
    %v2415 = vadd.f32 %v2302, %v2414
    %v2416 = vpop.f32.mrb[0].mxu0
    %v2417 = vadd.f32 %v2304, %v2416
    %2418 = vmatprep.mubr.bf16.mxu0 0
    %2419 = vmatmul.mubr.bf16.gmra.mrb[0].mxu0 %v173
    %v2420 = vpop.f32.mrb[0].mxu0
    %v2421 = vadd.f32 %v2308, %v2420
    %v2422 = vpop.f32.mrb[0].mxu0
    %v2423 = vadd.f32 %v2310, %v2422
    %v2424 = vpop.f32.mrb[0].mxu0
    %v2425 = vadd.f32 %v2312, %v2424
    %v2426 = vpop.f32.mrb[0].mxu0
    %v2427 = vadd.f32 %v2314, %v2426
    %2428 = vmatprep.mubr.bf16.mxu0 0
    %2429 = vmatmul.mubr.bf16.gmra.mrb[0].mxu0 %v180
    %v2430 = vpop.f32.mrb[0].mxu0
    %v2431 = vadd.f32 %v2318, %v2430
    %v2432 = vpop.f32.mrb[0].mxu0
    %v2433 = vadd.f32 %v2320, %v2432
    %v2434 = vpop.f32.mrb[0].mxu0
    %v2435 = vadd.f32 %v2322, %v2434
    %v2436 = vpop.f32.mrb[0].mxu0
    %v2437 = vadd.f32 %v2324, %v2436
    %2438 = vmatprep.mubr.bf16.mxu0 0
    %2439 = vmatmul.mubr.bf16.gmra.mrb[0].mxu0 %v187
    %v2440 = vpop.f32.mrb[0].mxu0
    %v2441 = vadd.f32 %v2328, %v2440
    %v2442 = vpop.f32.mrb[0].mxu0
    %v2443 = vadd.f32 %v2330, %v2442
    %v2444 = vpop.f32.mrb[0].mxu0
    %v2445 = vadd.f32 %v2332, %v2444
    %v2446 = vpop.f32.mrb[0].mxu0
    %v2447 = vadd.f32 %v2334, %v2446
    %2448 = vmatprep.mubr.bf16.mxu0 0
    %2449 = vmatmul.mubr.bf16.gmra.mrb[0].mxu0 %v194
    %v2450 = vpop.f32.mrb[0].mxu0
    %v2451 = vadd.f32 %v2338, %v2450
    %v2452 = vpop.f32.mrb[0].mxu0
    %v2453 = vadd.f32 %v2340, %v2452
    %v2454 = vpop.f32.mrb[0].mxu0
    %v2455 = vadd.f32 %v2342, %v2454
    %v2456 = vpop.f32.mrb[0].mxu0
    %v2457 = vadd.f32 %v2344, %v2456
    %2458 = vmatprep.mubr.bf16.mxu0 0
    %2459 = vmatmul.mubr.bf16.gmra.mrb[0].mxu0 %v201
    %v2460 = vpop.f32.mrb[0].mxu0
    %v2461 = vadd.f32 %v2348, %v2460
    %v2462 = vpop.f32.mrb[0].mxu0
    %v2463 = vadd.f32 %v2350, %v2462
    %v2464 = vpop.f32.mrb[0].mxu0
    %v2465 = vadd.f32 %v2352, %v2464
    %v2466 = vpop.f32.mrb[0].mxu0
    %v2467 = vadd.f32 %v2354, %v2466
    %2468 = vmatprep.mubr.bf16.mxu0 0
    %2469 = vmatmul.mubr.bf16.gmra.mrb[0].mxu0 %v208
    %v2470 = vpop.f32.mrb[0].mxu0
    %v2471 = vadd.f32 %v2358, %v2470
    %v2472 = vpop.f32.mrb[0].mxu0
    %v2473 = vadd.f32 %v2360, %v2472
    %v2474 = vpop.f32.mrb[0].mxu0
    %v2475 = vadd.f32 %v2362, %v2474
    %v2476 = vpop.f32.mrb[0].mxu0
    %v2477 = vadd.f32 %v2364, %v2476
    %2478 = vdwg.mxu0
    %v2479 = vmax.f32 %v1949, 0.0
    %v2480 = vmax.f32 %v1951, 0.0
    %v2481 = vmax.f32 %v2401, 0.0
    %v2482 = vmax.f32 %v2403, 0.0
    %v2483 = vmax.f32 %v1953, 0.0
    %v2484 = vmax.f32 %v1955, 0.0
    %v2485 = vmax.f32 %v2405, 0.0
    %v2486 = vmax.f32 %v2407, 0.0
    %v2487 = vmax.f32 %v1959, 0.0
    %v2488 = vmax.f32 %v1961, 0.0
    %v2489 = vmax.f32 %v2411, 0.0
    %v2490 = vmax.f32 %v2413, 0.0
    %v2491 = vmax.f32 %v1963, 0.0
    %v2492 = vmax.f32 %v1965, 0.0
    %v2493 = vmax.f32 %v2415, 0.0
    %v2494 = vmax.f32 %v2417, 0.0
    %v2495 = vmax.f32 %v1969, 0.0
    %v2496 = vmax.f32 %v1971, 0.0
    %v2497 = vmax.f32 %v2421, 0.0
    %v2498 = vmax.f32 %v2423, 0.0
    %v2499 = vmax.f32 %v1973, 0.0
    %v2500 = vmax.f32 %v1975, 0.0
    %v2501 = vmax.f32 %v2425, 0.0
    %v2502 = vmax.f32 %v2427, 0.0
    %v2503 = vmax.f32 %v1979, 0.0
    %v2504 = vmax.f32 %v1981, 0.0
    %v2505 = vmax.f32 %v2431, 0.0
    %v2506 = vmax.f32 %v2433, 0.0
    %v2507 = vmax.f32 %v1983, 0.0
    %v2508 = vmax.f32 %v1985, 0.0
    %v2509 = vmax.f32 %v2435, 0.0
    %v2510 = vmax.f32 %v2437, 0.0
    %v2511 = vmax.f32 %v1989, 0.0
    %v2512 = vmax.f32 %v1991, 0.0
    %v2513 = vmax.f32 %v2441, 0.0
    %v2514 = vmax.f32 %v2443, 0.0
    %v2515 = vmax.f32 %v1993, 0.0
    %v2516 = vmax.f32 %v1995, 0.0
    %v2517 = vmax.f32 %v2445, 0.0
    %v2518 = vmax.f32 %v2447, 0.0
    %v2519 = vmax.f32 %v1999, 0.0
    %v2520 = vmax.f32 %v2001, 0.0
    %v2521 = vmax.f32 %v2451, 0.0
    %v2522 = vmax.f32 %v2453, 0.0
    %v2523 = vmax.f32 %v2003, 0.0
    %v2524 = vmax.f32 %v2005, 0.0
    %v2525 = vmax.f32 %v2455, 0.0
    %v2526 = vmax.f32 %v2457, 0.0
    %v2527 = vmax.f32 %v2009, 0.0
    %v2528 = vmax.f32 %v2011, 0.0
    %v2529 = vmax.f32 %v2461, 0.0
    %v2530 = vmax.f32 %v2463, 0.0
    %v2531 = vmax.f32 %v2013, 0.0
    %v2532 = vmax.f32 %v2015, 0.0
    %v2533 = vmax.f32 %v2465, 0.0
    %v2534 = vmax.f32 %v2467, 0.0
    %v2535 = vmax.f32 %v2019, 0.0
    %v2536 = vmax.f32 %v2021, 0.0
    %v2537 = vmax.f32 %v2471, 0.0
    %v2538 = vmax.f32 %v2473, 0.0
    %v2539 = vmax.f32 %v2023, 0.0
    %v2540 = vmax.f32 %v2025, 0.0
    %v2541 = vmax.f32 %v2475, 0.0
    %v2542 = vmax.f32 %v2477, 0.0
    %v2543 = vpack.c.bf16 %v2483, %v2479
    %v2544 = vpack.c.bf16 %v2484, %v2480
    %v2545 = vpack.c.bf16 %v2485, %v2481
    %v2546 = vpack.c.bf16 %v2486, %v2482
    %v2547 = vpack.c.bf16 %v2491, %v2487
    %v2548 = vpack.c.bf16 %v2492, %v2488
    %v2549 = vpack.c.bf16 %v2493, %v2489
    %v2550 = vpack.c.bf16 %v2494, %v2490
    %v2551 = vpack.c.bf16 %v2499, %v2495
    %v2552 = vpack.c.bf16 %v2500, %v2496
    %v2553 = vpack.c.bf16 %v2501, %v2497
    %v2554 = vpack.c.bf16 %v2502, %v2498
    %v2555 = vpack.c.bf16 %v2507, %v2503
    %v2556 = vpack.c.bf16 %v2508, %v2504
    %v2557 = vpack.c.bf16 %v2509, %v2505
    %v2558 = vpack.c.bf16 %v2510, %v2506
    %v2559 = vpack.c.bf16 %v2515, %v2511
    %v2560 = vpack.c.bf16 %v2516, %v2512
    %v2561 = vpack.c.bf16 %v2517, %v2513
    %v2562 = vpack.c.bf16 %v2518, %v2514
    %v2563 = vpack.c.bf16 %v2523, %v2519
    %v2564 = vpack.c.bf16 %v2524, %v2520
    %v2565 = vpack.c.bf16 %v2525, %v2521
    %v2566 = vpack.c.bf16 %v2526, %v2522
    %v2567 = vpack.c.bf16 %v2531, %v2527
    %v2568 = vpack.c.bf16 %v2532, %v2528
    %v2569 = vpack.c.bf16 %v2533, %v2529
    %v2570 = vpack.c.bf16 %v2534, %v2530
    %v2571 = vpack.c.bf16 %v2539, %v2535
    %v2572 = vpack.c.bf16 %v2540, %v2536
    %v2573 = vpack.c.bf16 %v2541, %v2537
    %v2574 = vpack.c.bf16 %v2542, %v2538
    %v2575 = vld [vmem:[%s3] sm:$0xff]
    %v2576 = vld [vmem:[%s3 + $0x8] sm:$0xff]
    %v2577 = vld [vmem:[%s3 + $0x10] sm:$0xff]
    %v2578 = vld [vmem:[%s3 + $0x18] sm:$0xff]
    %v2579 = vld [vmem:[%s3 + $0x20] sm:$0xff]
    %v2580 = vld [vmem:[%s3 + $0x28] sm:$0xff]
    %v2581 = vld [vmem:[%s3 + $0x30] sm:$0xff]
    %v2582 = vld [vmem:[%s3 + $0x38] sm:$0xff]
    %v2583 = vld [vmem:[%s3 + $0x40] sm:$0xff]
    %v2584 = vld [vmem:[%s3 + $0x48] sm:$0xff]
    %v2585 = vld [vmem:[%s3 + $0x50] sm:$0xff]
    %v2586 = vld [vmem:[%s3 + $0x58] sm:$0xff]
    %v2587 = vld [vmem:[%s3 + $0x60] sm:$0xff]
    %v2588 = vld [vmem:[%s3 + $0x68] sm:$0xff]
    %v2589 = vld [vmem:[%s3 + $0x70] sm:$0xff]
    %v2590 = vld [vmem:[%s3 + $0x78] sm:$0xff]
    %v2591 = vld [vmem:[%s3 + $0x80] sm:$0xff]
    %v2592 = vld [vmem:[%s3 + $0x88] sm:$0xff]
    %v2593 = vld [vmem:[%s3 + $0x90] sm:$0xff]
    %v2594 = vld [vmem:[%s3 + $0x98] sm:$0xff]
    %v2595 = vld [vmem:[%s3 + $0xa0] sm:$0xff]
    %v2596 = vld [vmem:[%s3 + $0xa8] sm:$0xff]
    %v2597 = vld [vmem:[%s3 + $0xb0] sm:$0xff]
    %v2598 = vld [vmem:[%s3 + $0xb8] sm:$0xff]
    %v2599 = vld [vmem:[%s3 + $0xc0] sm:$0xff]
    %v2600 = vld [vmem:[%s3 + $0xc8] sm:$0xff]
    %v2601 = vld [vmem:[%s3 + $0xd0] sm:$0xff]
    %v2602 = vld [vmem:[%s3 + $0xd8] sm:$0xff]
    %v2603 = vld [vmem:[%s3 + $0xe0] sm:$0xff]
    %v2604 = vld [vmem:[%s3 + $0xe8] sm:$0xff]
    %v2605 = vld [vmem:[%s3 + $0xf0] sm:$0xff]
    %v2606 = vld [vmem:[%s3 + $0xf8] sm:$0xff]
    %v2607 = vld [vmem:[%s3 + $0x100] sm:$0xff]
    %v2608 = vld [vmem:[%s3 + $0x108] sm:$0xff]
    %v2609 = vld [vmem:[%s3 + $0x110] sm:$0xff]
    %v2610 = vld [vmem:[%s3 + $0x118] sm:$0xff]
    %v2611 = vld [vmem:[%s3 + $0x120] sm:$0xff]
    %v2612 = vld [vmem:[%s3 + $0x128] sm:$0xff]
    %v2613 = vld [vmem:[%s3 + $0x130] sm:$0xff]
    %v2614 = vld [vmem:[%s3 + $0x138] sm:$0xff]
    %v2615 = vld [vmem:[%s3 + $0x140] sm:$0xff]
    %v2616 = vld [vmem:[%s3 + $0x148] sm:$0xff]
    %v2617 = vld [vmem:[%s3 + $0x150] sm:$0xff]
    %v2618 = vld [vmem:[%s3 + $0x158] sm:$0xff]
    %v2619 = vld [vmem:[%s3 + $0x160] sm:$0xff]
    %v2620 = vld [vmem:[%s3 + $0x168] sm:$0xff]
    %v2621 = vld [vmem:[%s3 + $0x170] sm:$0xff]
    %v2622 = vld [vmem:[%s3 + $0x178] sm:$0xff]
    %v2623 = vld [vmem:[%s3 + $0x180] sm:$0xff]
    %v2624 = vld [vmem:[%s3 + $0x188] sm:$0xff]
    %v2625 = vld [vmem:[%s3 + $0x190] sm:$0xff]
    %v2626 = vld [vmem:[%s3 + $0x198] sm:$0xff]
    %v2627 = vld [vmem:[%s3 + $0x1a0] sm:$0xff]
    %v2628 = vld [vmem:[%s3 + $0x1a8] sm:$0xff]
    %v2629 = vld [vmem:[%s3 + $0x1b0] sm:$0xff]
    %v2630 = vld [vmem:[%s3 + $0x1b8] sm:$0xff]
    %v2631 = vld [vmem:[%s3 + $0x1c0] sm:$0xff]
    %v2632 = vld [vmem:[%s3 + $0x1c8] sm:$0xff]
    %v2633 = vld [vmem:[%s3 + $0x1d0] sm:$0xff]
    %v2634 = vld [vmem:[%s3 + $0x1d8] sm:$0xff]
    %v2635 = vld [vmem:[%s3 + $0x1e0] sm:$0xff]
    %v2636 = vld [vmem:[%s3 + $0x1e8] sm:$0xff]
    %v2637 = vld [vmem:[%s3 + $0x1f0] sm:$0xff]
    %v2638 = vld [vmem:[%s3 + $0x1f8] sm:$0xff]
    %v2639 = vld [vmem:[%s4] sm:$0x3]
    %v2641 = vlaneseq
    %v2642 = vshrl.u32 %v2641, 7
    %v2643 = vsub.s32 0, %v2642
    %v2644 = vrot.slane %v2639, %v2643
    %v2645 = vlaneseq
    %v2646 = vshrl.u32 %v2645, 7
    %v2647 = vsub.s32 1, %v2646
    %v2648 = vrot.slane %v2639, %v2647
    %v2715 = vunpack.c.l.b16 %v2575
    %v2716 = vunpack.c.h.b16 %v2575
    %v2717 = vunpack.c.l.b16 %v2576
    %v2718 = vunpack.c.h.b16 %v2576
    %v2719 = vunpack.c.l.b16 %v2577
    %v2720 = vunpack.c.h.b16 %v2577
    %v2721 = vunpack.c.l.b16 %v2578
    %v2722 = vunpack.c.h.b16 %v2578
    %v2723 = vunpack.c.l.b16 %v2579
    %v2724 = vunpack.c.h.b16 %v2579
    %v2725 = vunpack.c.l.b16 %v2580
    %v2726 = vunpack.c.h.b16 %v2580
    %v2727 = vunpack.c.l.b16 %v2581
    %v2728 = vunpack.c.h.b16 %v2581
    %v2729 = vunpack.c.l.b16 %v2582
    %v2730 = vunpack.c.h.b16 %v2582
    %v2731 = vunpack.c.l.b16 %v2583
    %v2732 = vunpack.c.h.b16 %v2583
    %v2733 = vunpack.c.l.b16 %v2584
    %v2734 = vunpack.c.h.b16 %v2584
    %v2735 = vunpack.c.l.b16 %v2585
    %v2736 = vunpack.c.h.b16 %v2585
    %v2737 = vunpack.c.l.b16 %v2586
    %v2738 = vunpack.c.h.b16 %v2586
    %v2739 = vunpack.c.l.b16 %v2587
    %v2740 = vunpack.c.h.b16 %v2587
    %v2741 = vunpack.c.l.b16 %v2588
    %v2742 = vunpack.c.h.b16 %v2588
    %v2743 = vunpack.c.l.b16 %v2589
    %v2744 = vunpack.c.h.b16 %v2589
    %v2745 = vunpack.c.l.b16 %v2590
    %v2746 = vunpack.c.h.b16 %v2590
    %v2747 = vunpack.c.l.b16 %v2591
    %v2748 = vunpack.c.h.b16 %v2591
    %v2749 = vunpack.c.l.b16 %v2592
    %v2750 = vunpack.c.h.b16 %v2592
    %v2751 = vunpack.c.l.b16 %v2593
    %v2752 = vunpack.c.h.b16 %v2593
    %v2753 = vunpack.c.l.b16 %v2594
    %v2754 = vunpack.c.h.b16 %v2594
    %v2755 = vunpack.c.l.b16 %v2595
    %v2756 = vunpack.c.h.b16 %v2595
    %v2757 = vunpack.c.l.b16 %v2596
    %v2758 = vunpack.c.h.b16 %v2596
    %v2759 = vunpack.c.l.b16 %v2597
    %v2760 = vunpack.c.h.b16 %v2597
    %v2761 = vunpack.c.l.b16 %v2598
    %v2762 = vunpack.c.h.b16 %v2598
    %v2763 = vunpack.c.l.b16 %v2599
    %v2764 = vunpack.c.h.b16 %v2599
    %v2765 = vunpack.c.l.b16 %v2600
    %v2766 = vunpack.c.h.b16 %v2600
    %v2767 = vunpack.c.l.b16 %v2601
    %v2768 = vunpack.c.h.b16 %v2601
    %v2769 = vunpack.c.l.b16 %v2602
    %v2770 = vunpack.c.h.b16 %v2602
    %v2771 = vunpack.c.l.b16 %v2603
    %v2772 = vunpack.c.h.b16 %v2603
    %v2773 = vunpack.c.l.b16 %v2604
    %v2774 = vunpack.c.h.b16 %v2604
    %v2775 = vunpack.c.l.b16 %v2605
    %v2776 = vunpack.c.h.b16 %v2605
    %v2777 = vunpack.c.l.b16 %v2606
    %v2778 = vunpack.c.h.b16 %v2606
    %v2779 = vunpack.c.l.b16 %v2607
    %v2780 = vunpack.c.h.b16 %v2607
    %v2781 = vunpack.c.l.b16 %v2608
    %v2782 = vunpack.c.h.b16 %v2608
    %v2783 = vunpack.c.l.b16 %v2609
    %v2784 = vunpack.c.h.b16 %v2609
    %v2785 = vunpack.c.l.b16 %v2610
    %v2786 = vunpack.c.h.b16 %v2610
    %v2787 = vunpack.c.l.b16 %v2611
    %v2788 = vunpack.c.h.b16 %v2611
    %v2789 = vunpack.c.l.b16 %v2612
    %v2790 = vunpack.c.h.b16 %v2612
    %v2791 = vunpack.c.l.b16 %v2613
    %v2792 = vunpack.c.h.b16 %v2613
    %v2793 = vunpack.c.l.b16 %v2614
    %v2794 = vunpack.c.h.b16 %v2614
    %v2795 = vunpack.c.l.b16 %v2615
    %v2796 = vunpack.c.h.b16 %v2615
    %v2797 = vunpack.c.l.b16 %v2616
    %v2798 = vunpack.c.h.b16 %v2616
    %v2799 = vunpack.c.l.b16 %v2617
    %v2800 = vunpack.c.h.b16 %v2617
    %v2801 = vunpack.c.l.b16 %v2618
    %v2802 = vunpack.c.h.b16 %v2618
    %v2803 = vunpack.c.l.b16 %v2619
    %v2804 = vunpack.c.h.b16 %v2619
    %v2805 = vunpack.c.l.b16 %v2620
    %v2806 = vunpack.c.h.b16 %v2620
    %v2807 = vunpack.c.l.b16 %v2621
    %v2808 = vunpack.c.h.b16 %v2621
    %v2809 = vunpack.c.l.b16 %v2622
    %v2810 = vunpack.c.h.b16 %v2622
    %v2811 = vunpack.c.l.b16 %v2623
    %v2812 = vunpack.c.h.b16 %v2623
    %v2813 = vunpack.c.l.b16 %v2624
    %v2814 = vunpack.c.h.b16 %v2624
    %v2815 = vunpack.c.l.b16 %v2625
    %v2816 = vunpack.c.h.b16 %v2625
    %v2817 = vunpack.c.l.b16 %v2626
    %v2818 = vunpack.c.h.b16 %v2626
    %v2819 = vunpack.c.l.b16 %v2627
    %v2820 = vunpack.c.h.b16 %v2627
    %v2821 = vunpack.c.l.b16 %v2628
    %v2822 = vunpack.c.h.b16 %v2628
    %v2823 = vunpack.c.l.b16 %v2629
    %v2824 = vunpack.c.h.b16 %v2629
    %v2825 = vunpack.c.l.b16 %v2630
    %v2826 = vunpack.c.h.b16 %v2630
    %v2827 = vunpack.c.l.b16 %v2631
    %v2828 = vunpack.c.h.b16 %v2631
    %v2829 = vunpack.c.l.b16 %v2632
    %v2830 = vunpack.c.h.b16 %v2632
    %v2831 = vunpack.c.l.b16 %v2633
    %v2832 = vunpack.c.h.b16 %v2633
    %v2833 = vunpack.c.l.b16 %v2634
    %v2834 = vunpack.c.h.b16 %v2634
    %v2835 = vunpack.c.l.b16 %v2635
    %v2836 = vunpack.c.h.b16 %v2635
    %v2837 = vunpack.c.l.b16 %v2636
    %v2838 = vunpack.c.h.b16 %v2636
    %v2839 = vunpack.c.l.b16 %v2637
    %v2840 = vunpack.c.h.b16 %v2637
    %v2841 = vunpack.c.l.b16 %v2638
    %v2842 = vunpack.c.h.b16 %v2638
    %v2843 = vpack.c.b16 %v2717, %v2715
    %v2844 = vpack.c.b16 %v2718, %v2716
    %v2845 = vpack.c.b16 %v2721, %v2719
    %v2846 = vpack.c.b16 %v2722, %v2720
    %v2847 = vpack.c.b16 %v2725, %v2723
    %v2848 = vpack.c.b16 %v2726, %v2724
    %v2849 = vpack.c.b16 %v2729, %v2727
    %v2850 = vpack.c.b16 %v2730, %v2728
    %v2851 = vpack.c.b16 %v2733, %v2731
    %v2852 = vpack.c.b16 %v2734, %v2732
    %v2853 = vpack.c.b16 %v2737, %v2735
    %v2854 = vpack.c.b16 %v2738, %v2736
    %v2855 = vpack.c.b16 %v2741, %v2739
    %v2856 = vpack.c.b16 %v2742, %v2740
    %v2857 = vpack.c.b16 %v2745, %v2743
    %v2858 = vpack.c.b16 %v2746, %v2744
    %v2859 = vpack.c.b16 %v2749, %v2747
    %v2860 = vpack.c.b16 %v2750, %v2748
    %v2861 = vpack.c.b16 %v2753, %v2751
    %v2862 = vpack.c.b16 %v2754, %v2752
    %v2863 = vpack.c.b16 %v2757, %v2755
    %v2864 = vpack.c.b16 %v2758, %v2756
    %v2865 = vpack.c.b16 %v2761, %v2759
    %v2866 = vpack.c.b16 %v2762, %v2760
    %v2867 = vpack.c.b16 %v2765, %v2763
    %v2868 = vpack.c.b16 %v2766, %v2764
    %v2869 = vpack.c.b16 %v2769, %v2767
    %v2870 = vpack.c.b16 %v2770, %v2768
    %v2871 = vpack.c.b16 %v2773, %v2771
    %v2872 = vpack.c.b16 %v2774, %v2772
    %v2873 = vpack.c.b16 %v2777, %v2775
    %v2874 = vpack.c.b16 %v2778, %v2776
    %v2875 = vpack.c.b16 %v2781, %v2779
    %v2876 = vpack.c.b16 %v2782, %v2780
    %v2877 = vpack.c.b16 %v2785, %v2783
    %v2878 = vpack.c.b16 %v2786, %v2784
    %v2879 = vpack.c.b16 %v2789, %v2787
    %v2880 = vpack.c.b16 %v2790, %v2788
    %v2881 = vpack.c.b16 %v2793, %v2791
    %v2882 = vpack.c.b16 %v2794, %v2792
    %v2883 = vpack.c.b16 %v2797, %v2795
    %v2884 = vpack.c.b16 %v2798, %v2796
    %v2885 = vpack.c.b16 %v2801, %v2799
    %v2886 = vpack.c.b16 %v2802, %v2800
    %v2887 = vpack.c.b16 %v2805, %v2803
    %v2888 = vpack.c.b16 %v2806, %v2804
    %v2889 = vpack.c.b16 %v2809, %v2807
    %v2890 = vpack.c.b16 %v2810, %v2808
    %v2891 = vpack.c.b16 %v2813, %v2811
    %v2892 = vpack.c.b16 %v2814, %v2812
    %v2893 = vpack.c.b16 %v2817, %v2815
    %v2894 = vpack.c.b16 %v2818, %v2816
    %v2895 = vpack.c.b16 %v2821, %v2819
    %v2896 = vpack.c.b16 %v2822, %v2820
    %v2897 = vpack.c.b16 %v2825, %v2823
    %v2898 = vpack.c.b16 %v2826, %v2824
    %v2899 = vpack.c.b16 %v2829, %v2827
    %v2900 = vpack.c.b16 %v2830, %v2828
    %v2901 = vpack.c.b16 %v2833, %v2831
    %v2902 = vpack.c.b16 %v2834, %v2832
    %v2903 = vpack.c.b16 %v2837, %v2835
    %v2904 = vpack.c.b16 %v2838, %v2836
    %v2905 = vpack.c.b16 %v2841, %v2839
    %v2906 = vpack.c.b16 %v2842, %v2840
    %2971 = vmatprep.subr.bf16.mxu0 %v2844
    %2972 = vmatpush1.bf16.msra.mxu0 %v2843
    %2973 = vmatprep.subr.bf16.mxu0 %v2846
    %2974 = vmatpush1.bf16.msra.mxu0 %v2845
    %2975 = vmatprep.subr.bf16.mxu0 %v2848
    %2976 = vmatpush1.bf16.msra.mxu0 %v2847
    %2977 = vmatprep.subr.bf16.mxu0 %v2850
    %2978 = vmatpush1.bf16.msra.mxu0 %v2849
    %2979 = vmatprep.subr.bf16.mxu0 %v2852
    %2980 = vmatpush1.bf16.msra.mxu0 %v2851
    %2981 = vmatprep.subr.bf16.mxu0 %v2854
    %2982 = vmatpush1.bf16.msra.mxu0 %v2853
    %2983 = vmatprep.subr.bf16.mxu0 %v2856
    %2984 = vmatpush1.bf16.msra.mxu0 %v2855
    %2985 = vmatprep.subr.bf16.mxu0 %v2858
    %2986 = vmatpush1.bf16.msra.mxu0 %v2857
    %2987 = vmatprep.subr.bf16.mxu0 %v2860
    %2988 = vmatpush1.bf16.msra.mxu0 %v2859
    %2989 = vmatprep.subr.bf16.mxu0 %v2862
    %2990 = vmatpush1.bf16.msra.mxu0 %v2861
    %2991 = vmatprep.subr.bf16.mxu0 %v2864
    %2992 = vmatpush1.bf16.msra.mxu0 %v2863
    %2993 = vmatprep.subr.bf16.mxu0 %v2866
    %2994 = vmatpush1.bf16.msra.mxu0 %v2865
    %2995 = vmatprep.subr.bf16.mxu0 %v2868
    %2996 = vmatpush1.bf16.msra.mxu0 %v2867
    %2997 = vmatprep.subr.bf16.mxu0 %v2870
    %2998 = vmatpush1.bf16.msra.mxu0 %v2869
    %2999 = vmatprep.subr.bf16.mxu0 %v2872
    %3000 = vmatpush1.bf16.msra.mxu0 %v2871
    %3001 = vmatprep.subr.bf16.mxu0 %v2874
    %3002 = vmatpush1.bf16.msra.mxu0 %v2873
    %3003 = vmatprep.mubr.bf16.mxu0 %v2544
    %3004 = vmatmul.mubr.bf16.gmra.mrb[0].mxu0 %v2543
    %v3005 = vpop.f32.mrb[0].mxu0
    %v3006 = vadd.f32 %v2644, %v3005
    %v3007 = vpop.f32.mrb[0].mxu0
    %v3008 = vadd.f32 %v2648, %v3007
    %v3009 = vpop.f32.mrb[0].mxu0
    %v3010 = vadd.f32 %v2644, %v3009
    %v3011 = vpop.f32.mrb[0].mxu0
    %v3012 = vadd.f32 %v2648, %v3011
    %3013 = vmatprep.mubr.bf16.mxu0 %v2548
    %3014 = vmatmul.mubr.bf16.gmra.mrb[0].mxu0 %v2547
    %v3015 = vpop.f32.mrb[0].mxu0
    %v3016 = vadd.f32 %v2644, %v3015
    %v3017 = vpop.f32.mrb[0].mxu0
    %v3018 = vadd.f32 %v2648, %v3017
    %v3019 = vpop.f32.mrb[0].mxu0
    %v3020 = vadd.f32 %v2644, %v3019
    %v3021 = vpop.f32.mrb[0].mxu0
    %v3022 = vadd.f32 %v2648, %v3021
    %3023 = vmatprep.mubr.bf16.mxu0 %v2552
    %3024 = vmatmul.mubr.bf16.gmra.mrb[0].mxu0 %v2551
    %v3025 = vpop.f32.mrb[0].mxu0
    %v3026 = vadd.f32 %v2644, %v3025
    %v3027 = vpop.f32.mrb[0].mxu0
    %v3028 = vadd.f32 %v2648, %v3027
    %v3029 = vpop.f32.mrb[0].mxu0
    %v3030 = vadd.f32 %v2644, %v3029
    %v3031 = vpop.f32.mrb[0].mxu0
    %v3032 = vadd.f32 %v2648, %v3031
    %3033 = vmatprep.mubr.bf16.mxu0 %v2556
    %3034 = vmatmul.mubr.bf16.gmra.mrb[0].mxu0 %v2555
    %v3035 = vpop.f32.mrb[0].mxu0
    %v3036 = vadd.f32 %v2644, %v3035
    %v3037 = vpop.f32.mrb[0].mxu0
    %v3038 = vadd.f32 %v2648, %v3037
    %v3039 = vpop.f32.mrb[0].mxu0
    %v3040 = vadd.f32 %v2644, %v3039
    %v3041 = vpop.f32.mrb[0].mxu0
    %v3042 = vadd.f32 %v2648, %v3041
    %3043 = vmatprep.mubr.bf16.mxu0 %v2560
    %3044 = vmatmul.mubr.bf16.gmra.mrb[0].mxu0 %v2559
    %v3045 = vpop.f32.mrb[0].mxu0
    %v3046 = vadd.f32 %v2644, %v3045
    %v3047 = vpop.f32.mrb[0].mxu0
    %v3048 = vadd.f32 %v2648, %v3047
    %v3049 = vpop.f32.mrb[0].mxu0
    %v3050 = vadd.f32 %v2644, %v3049
    %v3051 = vpop.f32.mrb[0].mxu0
    %v3052 = vadd.f32 %v2648, %v3051
    %3053 = vmatprep.mubr.bf16.mxu0 %v2564
    %3054 = vmatmul.mubr.bf16.gmra.mrb[0].mxu0 %v2563
    %v3055 = vpop.f32.mrb[0].mxu0
    %v3056 = vadd.f32 %v2644, %v3055
    %v3057 = vpop.f32.mrb[0].mxu0
    %v3058 = vadd.f32 %v2648, %v3057
    %v3059 = vpop.f32.mrb[0].mxu0
    %v3060 = vadd.f32 %v2644, %v3059
    %v3061 = vpop.f32.mrb[0].mxu0
    %v3062 = vadd.f32 %v2648, %v3061
    %3063 = vmatprep.mubr.bf16.mxu0 %v2568
    %3064 = vmatmul.mubr.bf16.gmra.mrb[0].mxu0 %v2567
    %v3065 = vpop.f32.mrb[0].mxu0
    %v3066 = vadd.f32 %v2644, %v3065
    %v3067 = vpop.f32.mrb[0].mxu0
    %v3068 = vadd.f32 %v2648, %v3067
    %v3069 = vpop.f32.mrb[0].mxu0
    %v3070 = vadd.f32 %v2644, %v3069
    %v3071 = vpop.f32.mrb[0].mxu0
    %v3072 = vadd.f32 %v2648, %v3071
    %3073 = vmatprep.mubr.bf16.mxu0 %v2572
    %3074 = vmatmul.mubr.bf16.gmra.mrb[0].mxu0 %v2571
    %v3075 = vpop.f32.mrb[0].mxu0
    %v3076 = vadd.f32 %v2644, %v3075
    %v3077 = vpop.f32.mrb[0].mxu0
    %v3078 = vadd.f32 %v2648, %v3077
    %v3079 = vpop.f32.mrb[0].mxu0
    %v3080 = vadd.f32 %v2644, %v3079
    %v3081 = vpop.f32.mrb[0].mxu0
    %v3082 = vadd.f32 %v2648, %v3081
    %3083 = vdwg.mxu0
    %3084 = vmatprep.subr.bf16.mxu0 %v2876
    %3085 = vmatpush1.bf16.msra.mxu0 %v2875
    %3086 = vmatprep.subr.bf16.mxu0 %v2878
    %3087 = vmatpush1.bf16.msra.mxu0 %v2877
    %3088 = vmatprep.subr.bf16.mxu0 %v2880
    %3089 = vmatpush1.bf16.msra.mxu0 %v2879
    %3090 = vmatprep.subr.bf16.mxu0 %v2882
    %3091 = vmatpush1.bf16.msra.mxu0 %v2881
    %3092 = vmatprep.subr.bf16.mxu0 %v2884
    %3093 = vmatpush1.bf16.msra.mxu0 %v2883
    %3094 = vmatprep.subr.bf16.mxu0 %v2886
    %3095 = vmatpush1.bf16.msra.mxu0 %v2885
    %3096 = vmatprep.subr.bf16.mxu0 %v2888
    %3097 = vmatpush1.bf16.msra.mxu0 %v2887
    %3098 = vmatprep.subr.bf16.mxu0 %v2890
    %3099 = vmatpush1.bf16.msra.mxu0 %v2889
    %3100 = vmatprep.subr.bf16.mxu0 %v2892
    %3101 = vmatpush1.bf16.msra.mxu0 %v2891
    %3102 = vmatprep.subr.bf16.mxu0 %v2894
    %3103 = vmatpush1.bf16.msra.mxu0 %v2893
    %3104 = vmatprep.subr.bf16.mxu0 %v2896
    %3105 = vmatpush1.bf16.msra.mxu0 %v2895
    %3106 = vmatprep.subr.bf16.mxu0 %v2898
    %3107 = vmatpush1.bf16.msra.mxu0 %v2897
    %3108 = vmatprep.subr.bf16.mxu0 %v2900
    %3109 = vmatpush1.bf16.msra.mxu0 %v2899
    %3110 = vmatprep.subr.bf16.mxu0 %v2902
    %3111 = vmatpush1.bf16.msra.mxu0 %v2901
    %3112 = vmatprep.subr.bf16.mxu0 %v2904
    %3113 = vmatpush1.bf16.msra.mxu0 %v2903
    %3114 = vmatprep.subr.bf16.mxu0 %v2906
    %3115 = vmatpush1.bf16.msra.mxu0 %v2905
    %3116 = vmatprep.mubr.bf16.mxu0 %v2546
    %3117 = vmatmul.mubr.bf16.gmra.mrb[0].mxu0 %v2545
    %v3118 = vpop.f32.mrb[0].mxu0
    %v3119 = vadd.f32 %v3006, %v3118
    %v3120 = vpop.f32.mrb[0].mxu0
    %v3121 = vadd.f32 %v3008, %v3120
    %v3122 = vpop.f32.mrb[0].mxu0
    %v3123 = vadd.f32 %v3010, %v3122
    %v3124 = vpop.f32.mrb[0].mxu0
    %v3125 = vadd.f32 %v3012, %v3124
    %3126 = vmatprep.mubr.bf16.mxu0 %v2550
    %3127 = vmatmul.mubr.bf16.gmra.mrb[0].mxu0 %v2549
    %v3128 = vpop.f32.mrb[0].mxu0
    %v3129 = vadd.f32 %v3016, %v3128
    %v3130 = vpop.f32.mrb[0].mxu0
    %v3131 = vadd.f32 %v3018, %v3130
    %v3132 = vpop.f32.mrb[0].mxu0
    %v3133 = vadd.f32 %v3020, %v3132
    %v3134 = vpop.f32.mrb[0].mxu0
    %v3135 = vadd.f32 %v3022, %v3134
    %3136 = vmatprep.mubr.bf16.mxu0 %v2554
    %3137 = vmatmul.mubr.bf16.gmra.mrb[0].mxu0 %v2553
    %v3138 = vpop.f32.mrb[0].mxu0
    %v3139 = vadd.f32 %v3026, %v3138
    %v3140 = vpop.f32.mrb[0].mxu0
    %v3141 = vadd.f32 %v3028, %v3140
    %v3142 = vpop.f32.mrb[0].mxu0
    %v3143 = vadd.f32 %v3030, %v3142
    %v3144 = vpop.f32.mrb[0].mxu0
    %v3145 = vadd.f32 %v3032, %v3144
    %3146 = vmatprep.mubr.bf16.mxu0 %v2558
    %3147 = vmatmul.mubr.bf16.gmra.mrb[0].mxu0 %v2557
    %v3148 = vpop.f32.mrb[0].mxu0
    %v3149 = vadd.f32 %v3036, %v3148
    %v3150 = vpop.f32.mrb[0].mxu0
    %v3151 = vadd.f32 %v3038, %v3150
    %v3152 = vpop.f32.mrb[0].mxu0
    %v3153 = vadd.f32 %v3040, %v3152
    %v3154 = vpop.f32.mrb[0].mxu0
    %v3155 = vadd.f32 %v3042, %v3154
    %3156 = vmatprep.mubr.bf16.mxu0 %v2562
    %3157 = vmatmul.mubr.bf16.gmra.mrb[0].mxu0 %v2561
    %v3158 = vpop.f32.mrb[0].mxu0
    %v3159 = vadd.f32 %v3046, %v3158
    %v3160 = vpop.f32.mrb[0].mxu0
    %v3161 = vadd.f32 %v3048, %v3160
    %v3162 = vpop.f32.mrb[0].mxu0
    %v3163 = vadd.f32 %v3050, %v3162
    %v3164 = vpop.f32.mrb[0].mxu0
    %v3165 = vadd.f32 %v3052, %v3164
    %3166 = vmatprep.mubr.bf16.mxu0 %v2566
    %3167 = vmatmul.mubr.bf16.gmra.mrb[0].mxu0 %v2565
    %v3168 = vpop.f32.mrb[0].mxu0
    %v3169 = vadd.f32 %v3056, %v3168
    %v3170 = vpop.f32.mrb[0].mxu0
    %v3171 = vadd.f32 %v3058, %v3170
    %v3172 = vpop.f32.mrb[0].mxu0
    %v3173 = vadd.f32 %v3060, %v3172
    %v3174 = vpop.f32.mrb[0].mxu0
    %v3175 = vadd.f32 %v3062, %v3174
    %3176 = vmatprep.mubr.bf16.mxu0 %v2570
    %3177 = vmatmul.mubr.bf16.gmra.mrb[0].mxu0 %v2569
    %v3178 = vpop.f32.mrb[0].mxu0
    %v3179 = vadd.f32 %v3066, %v3178
    %v3180 = vpop.f32.mrb[0].mxu0
    %v3181 = vadd.f32 %v3068, %v3180
    %v3182 = vpop.f32.mrb[0].mxu0
    %v3183 = vadd.f32 %v3070, %v3182
    %v3184 = vpop.f32.mrb[0].mxu0
    %v3185 = vadd.f32 %v3072, %v3184
    %3186 = vmatprep.mubr.bf16.mxu0 %v2574
    %3187 = vmatmul.mubr.bf16.gmra.mrb[0].mxu0 %v2573
    %v3188 = vpop.f32.mrb[0].mxu0
    %v3189 = vadd.f32 %v3076, %v3188
    %v3190 = vpop.f32.mrb[0].mxu0
    %v3191 = vadd.f32 %v3078, %v3190
    %v3192 = vpop.f32.mrb[0].mxu0
    %v3193 = vadd.f32 %v3080, %v3192
    %v3194 = vpop.f32.mrb[0].mxu0
    %v3195 = vadd.f32 %v3082, %v3194
    %3196 = vdwg.mxu0
    %v3197 = vmax.f32 %v3119, 0.0
    %v3198 = vmax.f32 %v3121, 0.0
    %v3199 = vmax.f32 %v3123, 0.0
    %v3200 = vmax.f32 %v3125, 0.0
    %v3201 = vmax.f32 %v3129, 0.0
    %v3202 = vmax.f32 %v3131, 0.0
    %v3203 = vmax.f32 %v3133, 0.0
    %v3204 = vmax.f32 %v3135, 0.0
    %v3205 = vmax.f32 %v3139, 0.0
    %v3206 = vmax.f32 %v3141, 0.0
    %v3207 = vmax.f32 %v3143, 0.0
    %v3208 = vmax.f32 %v3145, 0.0
    %v3209 = vmax.f32 %v3149, 0.0
    %v3210 = vmax.f32 %v3151, 0.0
    %v3211 = vmax.f32 %v3153, 0.0
    %v3212 = vmax.f32 %v3155, 0.0
    %v3213 = vmax.f32 %v3159, 0.0
    %v3214 = vmax.f32 %v3161, 0.0
    %v3215 = vmax.f32 %v3163, 0.0
    %v3216 = vmax.f32 %v3165, 0.0
    %v3217 = vmax.f32 %v3169, 0.0
    %v3218 = vmax.f32 %v3171, 0.0
    %v3219 = vmax.f32 %v3173, 0.0
    %v3220 = vmax.f32 %v3175, 0.0
    %v3221 = vmax.f32 %v3179, 0.0
    %v3222 = vmax.f32 %v3181, 0.0
    %v3223 = vmax.f32 %v3183, 0.0
    %v3224 = vmax.f32 %v3185, 0.0
    %v3225 = vmax.f32 %v3189, 0.0
    %v3226 = vmax.f32 %v3191, 0.0
    %v3227 = vmax.f32 %v3193, 0.0
    %v3228 = vmax.f32 %v3195, 0.0
    %v3229 = vpack.c.bf16 %v3199, %v3197
    %v3230 = vpack.c.bf16 %v3200, %v3198
    %v3231 = vpack.c.bf16 %v3203, %v3201
    %v3232 = vpack.c.bf16 %v3204, %v3202
    %v3233 = vpack.c.bf16 %v3207, %v3205
    %v3234 = vpack.c.bf16 %v3208, %v3206
    %v3235 = vpack.c.bf16 %v3211, %v3209
    %v3236 = vpack.c.bf16 %v3212, %v3210
    %v3237 = vpack.c.bf16 %v3215, %v3213
    %v3238 = vpack.c.bf16 %v3216, %v3214
    %v3239 = vpack.c.bf16 %v3219, %v3217
    %v3240 = vpack.c.bf16 %v3220, %v3218
    %v3241 = vpack.c.bf16 %v3223, %v3221
    %v3242 = vpack.c.bf16 %v3224, %v3222
    %v3243 = vpack.c.bf16 %v3227, %v3225
    %v3244 = vpack.c.bf16 %v3228, %v3226
    %v3245 = vld [vmem:[%s5] sm:$0xf]
    %v3246 = vld [vmem:[%s5 + $0x4] sm:$0xf]
    %v3247 = vld [vmem:[%s5 + $0x8] sm:$0xf]
    %v3248 = vld [vmem:[%s5 + $0xc] sm:$0xf]
    %v3249 = vld [vmem:[%s5 + $0x10] sm:$0xf]
    %v3250 = vld [vmem:[%s5 + $0x14] sm:$0xf]
    %v3251 = vld [vmem:[%s5 + $0x18] sm:$0xf]
    %v3252 = vld [vmem:[%s5 + $0x1c] sm:$0xf]
    %v3253 = vld [vmem:[%s5 + $0x20] sm:$0xf]
    %v3254 = vld [vmem:[%s5 + $0x24] sm:$0xf]
    %v3255 = vld [vmem:[%s5 + $0x28] sm:$0xf]
    %v3256 = vld [vmem:[%s5 + $0x2c] sm:$0xf]
    %v3257 = vld [vmem:[%s5 + $0x30] sm:$0xf]
    %v3258 = vld [vmem:[%s5 + $0x34] sm:$0xf]
    %v3259 = vld [vmem:[%s5 + $0x38] sm:$0xf]
    %v3260 = vld [vmem:[%s5 + $0x3c] sm:$0xf]
    %v3261 = vld [vmem:[%s5 + $0x40] sm:$0xf]
    %v3262 = vld [vmem:[%s5 + $0x44] sm:$0xf]
    %v3263 = vld [vmem:[%s5 + $0x48] sm:$0xf]
    %v3264 = vld [vmem:[%s5 + $0x4c] sm:$0xf]
    %v3265 = vld [vmem:[%s5 + $0x50] sm:$0xf]
    %v3266 = vld [vmem:[%s5 + $0x54] sm:$0xf]
    %v3267 = vld [vmem:[%s5 + $0x58] sm:$0xf]
    %v3268 = vld [vmem:[%s5 + $0x5c] sm:$0xf]
    %v3269 = vld [vmem:[%s5 + $0x60] sm:$0xf]
    %v3270 = vld [vmem:[%s5 + $0x64] sm:$0xf]
    %v3271 = vld [vmem:[%s5 + $0x68] sm:$0xf]
    %v3272 = vld [vmem:[%s5 + $0x6c] sm:$0xf]
    %v3273 = vld [vmem:[%s5 + $0x70] sm:$0xf]
    %v3274 = vld [vmem:[%s5 + $0x74] sm:$0xf]
    %v3275 = vld [vmem:[%s5 + $0x78] sm:$0xf]
    %v3276 = vld [vmem:[%s5 + $0x7c] sm:$0xf]
    %v3277 = vld [vmem:[%s6] sm:$0x1]
    %v3279 = vlaneseq
    %v3280 = vshrl.u32 %v3279, 7
    %v3281 = vsub.s32 0, %v3280
    %v3282 = vrot.slane %v3277, %v3281
    %v3316 = vunpack.c.l.b16 %v3245
    %v3317 = vunpack.c.l.b16 %v3246
    %v3318 = vunpack.c.l.b16 %v3247
    %v3319 = vunpack.c.l.b16 %v3248
    %v3320 = vunpack.c.l.b16 %v3249
    %v3321 = vunpack.c.l.b16 %v3250
    %v3322 = vunpack.c.l.b16 %v3251
    %v3323 = vunpack.c.l.b16 %v3252
    %v3324 = vunpack.c.l.b16 %v3253
    %v3325 = vunpack.c.l.b16 %v3254
    %v3326 = vunpack.c.l.b16 %v3255
    %v3327 = vunpack.c.l.b16 %v3256
    %v3328 = vunpack.c.l.b16 %v3257
    %v3329 = vunpack.c.l.b16 %v3258
    %v3330 = vunpack.c.l.b16 %v3259
    %v3331 = vunpack.c.l.b16 %v3260
    %v3332 = vunpack.c.l.b16 %v3261
    %v3333 = vunpack.c.l.b16 %v3262
    %v3334 = vunpack.c.l.b16 %v3263
    %v3335 = vunpack.c.l.b16 %v3264
    %v3336 = vunpack.c.l.b16 %v3265
    %v3337 = vunpack.c.l.b16 %v3266
    %v3338 = vunpack.c.l.b16 %v3267
    %v3339 = vunpack.c.l.b16 %v3268
    %v3340 = vunpack.c.l.b16 %v3269
    %v3341 = vunpack.c.l.b16 %v3270
    %v3342 = vunpack.c.l.b16 %v3271
    %v3343 = vunpack.c.l.b16 %v3272
    %v3344 = vunpack.c.l.b16 %v3273
    %v3345 = vunpack.c.l.b16 %v3274
    %v3346 = vunpack.c.l.b16 %v3275
    %v3347 = vunpack.c.l.b16 %v3276
    %v3348 = vpack.c.b16 %v3317, %v3316
    %v3349 = vpack.c.b16 %v3319, %v3318
    %v3350 = vpack.c.b16 %v3321, %v3320
    %v3351 = vpack.c.b16 %v3323, %v3322
    %v3352 = vpack.c.b16 %v3325, %v3324
    %v3353 = vpack.c.b16 %v3327, %v3326
    %v3354 = vpack.c.b16 %v3329, %v3328
    %v3355 = vpack.c.b16 %v3331, %v3330
    %v3356 = vpack.c.b16 %v3333, %v3332
    %v3357 = vpack.c.b16 %v3335, %v3334
    %v3358 = vpack.c.b16 %v3337, %v3336
    %v3359 = vpack.c.b16 %v3339, %v3338
    %v3360 = vpack.c.b16 %v3341, %v3340
    %v3361 = vpack.c.b16 %v3343, %v3342
    %v3362 = vpack.c.b16 %v3345, %v3344
    %v3363 = vpack.c.b16 %v3347, %v3346
    %3380 = vmatprep.subr.bf16.mxu0 0
    %3381 = vmatpush1.bf16.msra.mxu0 %v3348
    %3382 = vmatprep.subr.bf16.mxu0 0
    %3383 = vmatpush1.bf16.msra.mxu0 %v3349
    %3384 = vmatprep.subr.bf16.mxu0 0
    %3385 = vmatpush1.bf16.msra.mxu0 %v3350
    %3386 = vmatprep.subr.bf16.mxu0 0
    %3387 = vmatpush1.bf16.msra.mxu0 %v3351
    %3388 = vmatprep.subr.bf16.mxu0 0
    %3389 = vmatpush1.bf16.msra.mxu0 %v3352
    %3390 = vmatprep.subr.bf16.mxu0 0
    %3391 = vmatpush1.bf16.msra.mxu0 %v3353
    %3392 = vmatprep.subr.bf16.mxu0 0
    %3393 = vmatpush1.bf16.msra.mxu0 %v3354
    %3394 = vmatprep.subr.bf16.mxu0 0
    %3395 = vmatpush1.bf16.msra.mxu0 %v3355
    %3396 = vmatprep.subr.bf16.mxu0 0
    %3397 = vmatpush1.bf16.msra.mxu0 %v3356
    %3398 = vmatprep.subr.bf16.mxu0 0
    %3399 = vmatpush1.bf16.msra.mxu0 %v3357
    %3400 = vmatprep.subr.bf16.mxu0 0
    %3401 = vmatpush1.bf16.msra.mxu0 %v3358
    %3402 = vmatprep.subr.bf16.mxu0 0
    %3403 = vmatpush1.bf16.msra.mxu0 %v3359
    %3404 = vmatprep.subr.bf16.mxu0 0
    %3405 = vmatpush1.bf16.msra.mxu0 %v3360
    %3406 = vmatprep.subr.bf16.mxu0 0
    %3407 = vmatpush1.bf16.msra.mxu0 %v3361
    %3408 = vmatprep.subr.bf16.mxu0 0
    %3409 = vmatpush1.bf16.msra.mxu0 %v3362
    %3410 = vmatprep.subr.bf16.mxu0 0
    %3411 = vmatpush1.bf16.msra.mxu0 %v3363
    %3412 = vmatprep.mubr.bf16.mxu0 %v3230
    %3413 = vmatmul.mubr.bf16.gmra.mrb[0].mxu0 %v3229
    %v3414 = vpop.f32.mrb[0].mxu0
    %v3415 = vadd.f32 %v3282, %v3414
    %v3416 = vpop.f32.mrb[0].mxu0
    %v3417 = vpop.f32.mrb[0].mxu0
    %v3418 = vadd.f32 %v3282, %v3417
    %v3419 = vpop.f32.mrb[0].mxu0
    %3420 = vmatprep.mubr.bf16.mxu0 %v3232
    %3421 = vmatmul.mubr.bf16.gmra.mrb[0].mxu0 %v3231
    %v3422 = vpop.f32.mrb[0].mxu0
    %v3423 = vadd.f32 %v3282, %v3422
    %v3424 = vpop.f32.mrb[0].mxu0
    %v3425 = vpop.f32.mrb[0].mxu0
    %v3426 = vadd.f32 %v3282, %v3425
    %v3427 = vpop.f32.mrb[0].mxu0
    %3428 = vmatprep.mubr.bf16.mxu0 %v3234
    %3429 = vmatmul.mubr.bf16.gmra.mrb[0].mxu0 %v3233
    %v3430 = vpop.f32.mrb[0].mxu0
    %v3431 = vadd.f32 %v3282, %v3430
    %v3432 = vpop.f32.mrb[0].mxu0
    %v3433 = vpop.f32.mrb[0].mxu0
    %v3434 = vadd.f32 %v3282, %v3433
    %v3435 = vpop.f32.mrb[0].mxu0
    %3436 = vmatprep.mubr.bf16.mxu0 %v3236
    %3437 = vmatmul.mubr.bf16.gmra.mrb[0].mxu0 %v3235
    %v3438 = vpop.f32.mrb[0].mxu0
    %v3439 = vadd.f32 %v3282, %v3438
    %v3440 = vpop.f32.mrb[0].mxu0
    %v3441 = vpop.f32.mrb[0].mxu0
    %v3442 = vadd.f32 %v3282, %v3441
    %v3443 = vpop.f32.mrb[0].mxu0
    %3444 = vmatprep.mubr.bf16.mxu0 %v3238
    %3445 = vmatmul.mubr.bf16.gmra.mrb[0].mxu0 %v3237
    %v3446 = vpop.f32.mrb[0].mxu0
    %v3447 = vadd.f32 %v3282, %v3446
    %v3448 = vpop.f32.mrb[0].mxu0
    %v3449 = vpop.f32.mrb[0].mxu0
    %v3450 = vadd.f32 %v3282, %v3449
    %v3451 = vpop.f32.mrb[0].mxu0
    %3452 = vmatprep.mubr.bf16.mxu0 %v3240
    %3453 = vmatmul.mubr.bf16.gmra.mrb[0].mxu0 %v3239
    %v3454 = vpop.f32.mrb[0].mxu0
    %v3455 = vadd.f32 %v3282, %v3454
    %v3456 = vpop.f32.mrb[0].mxu0
    %v3457 = vpop.f32.mrb[0].mxu0
    %v3458 = vadd.f32 %v3282, %v3457
    %v3459 = vpop.f32.mrb[0].mxu0
    %3460 = vmatprep.mubr.bf16.mxu0 %v3242
    %3461 = vmatmul.mubr.bf16.gmra.mrb[0].mxu0 %v3241
    %v3462 = vpop.f32.mrb[0].mxu0
    %v3463 = vadd.f32 %v3282, %v3462
    %v3464 = vpop.f32.mrb[0].mxu0
    %v3465 = vpop.f32.mrb[0].mxu0
    %v3466 = vadd.f32 %v3282, %v3465
    %v3467 = vpop.f32.mrb[0].mxu0
    %3468 = vmatprep.mubr.bf16.mxu0 %v3244
    %3469 = vmatmul.mubr.bf16.gmra.mrb[0].mxu0 %v3243
    %v3470 = vpop.f32.mrb[0].mxu0
    %v3471 = vadd.f32 %v3282, %v3470
    %v3472 = vpop.f32.mrb[0].mxu0
    %v3473 = vpop.f32.mrb[0].mxu0
    %v3474 = vadd.f32 %v3282, %v3473
    %v3475 = vpop.f32.mrb[0].mxu0
    %3476 = vdwg.mxu0
    %vm3477 = vcmask 80896
    %v3478 = vsel %vm3477, %v3415, -inf
    %3479 = vmax.xlane.f32.xlu0 %v3478
    %v3480 = vpop.xlane.xlu0 %3479
    %v3481 = vsel %vm3477, %v3418, -inf
    %3482 = vmax.xlane.f32.xlu0 %v3481
    %v3483 = vpop.xlane.xlu0 %3482
    %v3484 = vsel %vm3477, %v3423, -inf
    %3485 = vmax.xlane.f32.xlu0 %v3484
    %v3486 = vpop.xlane.xlu0 %3485
    %v3487 = vsel %vm3477, %v3426, -inf
    %3488 = vmax.xlane.f32.xlu0 %v3487
    %v3489 = vpop.xlane.xlu0 %3488
    %v3490 = vsel %vm3477, %v3431, -inf
    %3491 = vmax.xlane.f32.xlu0 %v3490
    %v3492 = vpop.xlane.xlu0 %3491
    %v3493 = vsel %vm3477, %v3434, -inf
    %3494 = vmax.xlane.f32.xlu0 %v3493
    %v3495 = vpop.xlane.xlu0 %3494
    %v3496 = vsel %vm3477, %v3439, -inf
    %3497 = vmax.xlane.f32.xlu0 %v3496
    %v3498 = vpop.xlane.xlu0 %3497
    %v3499 = vsel %vm3477, %v3442, -inf
    %3500 = vmax.xlane.f32.xlu0 %v3499
    %v3501 = vpop.xlane.xlu0 %3500
    %v3502 = vsel %vm3477, %v3447, -inf
    %3503 = vmax.xlane.f32.xlu0 %v3502
    %v3504 = vpop.xlane.xlu0 %3503
    %v3505 = vsel %vm3477, %v3450, -inf
    %3506 = vmax.xlane.f32.xlu0 %v3505
    %v3507 = vpop.xlane.xlu0 %3506
    %v3508 = vsel %vm3477, %v3455, -inf
    %3509 = vmax.xlane.f32.xlu0 %v3508
    %v3510 = vpop.xlane.xlu0 %3509
    %v3511 = vsel %vm3477, %v3458, -inf
    %3512 = vmax.xlane.f32.xlu0 %v3511
    %v3513 = vpop.xlane.xlu0 %3512
    %v3514 = vsel %vm3477, %v3463, -inf
    %3515 = vmax.xlane.f32.xlu0 %v3514
    %v3516 = vpop.xlane.xlu0 %3515
    %v3517 = vsel %vm3477, %v3466, -inf
    %3518 = vmax.xlane.f32.xlu0 %v3517
    %v3519 = vpop.xlane.xlu0 %3518
    %v3520 = vsel %vm3477, %v3471, -inf
    %3521 = vmax.xlane.f32.xlu0 %v3520
    %v3522 = vpop.xlane.xlu0 %3521
    %v3523 = vsel %vm3477, %v3474, -inf
    %3524 = vmax.xlane.f32.xlu0 %v3523
    %v3525 = vpop.xlane.xlu0 %3524
    %v3526 = vsub.f32 %v3415, %v3480
    %v3527 = vsub.f32 %v3418, %v3483
    %v3528 = vsub.f32 %v3423, %v3486
    %v3529 = vsub.f32 %v3426, %v3489
    %v3530 = vsub.f32 %v3431, %v3492
    %v3531 = vsub.f32 %v3434, %v3495
    %v3532 = vsub.f32 %v3439, %v3498
    %v3533 = vsub.f32 %v3442, %v3501
    %v3534 = vsub.f32 %v3447, %v3504
    %v3535 = vsub.f32 %v3450, %v3507
    %v3536 = vsub.f32 %v3455, %v3510
    %v3537 = vsub.f32 %v3458, %v3513
    %v3538 = vsub.f32 %v3463, %v3516
    %v3539 = vsub.f32 %v3466, %v3519
    %v3540 = vsub.f32 %v3471, %v3522
    %v3541 = vsub.f32 %v3474, %v3525
    %v3542 = vmul.f32 %v3526, 1.442695
    %v3543 = vpow.pop %v3542
    %v3544 = vmul.f32 %v3527, 1.442695
    %v3545 = vpow.pop %v3544
    %v3546 = vmul.f32 %v3528, 1.442695
    %v3547 = vpow.pop %v3546
    %v3548 = vmul.f32 %v3529, 1.442695
    %v3549 = vpow.pop %v3548
    %v3550 = vmul.f32 %v3530, 1.442695
    %v3551 = vpow.pop %v3550
    %v3552 = vmul.f32 %v3531, 1.442695
    %v3553 = vpow.pop %v3552
    %v3554 = vmul.f32 %v3532, 1.442695
    %v3555 = vpow.pop %v3554
    %v3556 = vmul.f32 %v3533, 1.442695
    %v3557 = vpow.pop %v3556
    %v3558 = vmul.f32 %v3534, 1.442695
    %v3559 = vpow.pop %v3558
    %v3560 = vmul.f32 %v3535, 1.442695
    %v3561 = vpow.pop %v3560
    %v3562 = vmul.f32 %v3536, 1.442695
    %v3563 = vpow.pop %v3562
    %v3564 = vmul.f32 %v3537, 1.442695
    %v3565 = vpow.pop %v3564
    %v3566 = vmul.f32 %v3538, 1.442695
    %v3567 = vpow.pop %v3566
    %v3568 = vmul.f32 %v3539, 1.442695
    %v3569 = vpow.pop %v3568
    %v3570 = vmul.f32 %v3540, 1.442695
    %v3571 = vpow.pop %v3570
    %v3572 = vmul.f32 %v3541, 1.442695
    %v3573 = vpow.pop %v3572
    %v3574 = vsel %vm3477, %v3543, 0.0
    %3575 = vadd.xlane.f32.xlu0 %v3574
    %v3576 = vpop.xlane.xlu0 %3575
    %v3577 = vsel %vm3477, %v3545, 0.0
    %3578 = vadd.xlane.f32.xlu0 %v3577
    %v3579 = vpop.xlane.xlu0 %3578
    %v3580 = vsel %vm3477, %v3547, 0.0
    %3581 = vadd.xlane.f32.xlu0 %v3580
    %v3582 = vpop.xlane.xlu0 %3581
    %v3583 = vsel %vm3477, %v3549, 0.0
    %3584 = vadd.xlane.f32.xlu0 %v3583
    %v3585 = vpop.xlane.xlu0 %3584
    %v3586 = vsel %vm3477, %v3551, 0.0
    %3587 = vadd.xlane.f32.xlu0 %v3586
    %v3588 = vpop.xlane.xlu0 %3587
    %v3589 = vsel %vm3477, %v3553, 0.0
    %3590 = vadd.xlane.f32.xlu0 %v3589
    %v3591 = vpop.xlane.xlu0 %3590
    %v3592 = vsel %vm3477, %v3555, 0.0
    %3593 = vadd.xlane.f32.xlu0 %v3592
    %v3594 = vpop.xlane.xlu0 %3593
    %v3595 = vsel %vm3477, %v3557, 0.0
    %3596 = vadd.xlane.f32.xlu0 %v3595
    %v3597 = vpop.xlane.xlu0 %3596
    %v3598 = vsel %vm3477, %v3559, 0.0
    %3599 = vadd.xlane.f32.xlu0 %v3598
    %v3600 = vpop.xlane.xlu0 %3599
    %v3601 = vsel %vm3477, %v3561, 0.0
    %3602 = vadd.xlane.f32.xlu0 %v3601
    %v3603 = vpop.xlane.xlu0 %3602
    %v3604 = vsel %vm3477, %v3563, 0.0
    %3605 = vadd.xlane.f32.xlu0 %v3604
    %v3606 = vpop.xlane.xlu0 %3605
    %v3607 = vsel %vm3477, %v3565, 0.0
    %3608 = vadd.xlane.f32.xlu0 %v3607
    %v3609 = vpop.xlane.xlu0 %3608
    %v3610 = vsel %vm3477, %v3567, 0.0
    %3611 = vadd.xlane.f32.xlu0 %v3610
    %v3612 = vpop.xlane.xlu0 %3611
    %v3613 = vsel %vm3477, %v3569, 0.0
    %3614 = vadd.xlane.f32.xlu0 %v3613
    %v3615 = vpop.xlane.xlu0 %3614
    %v3616 = vsel %vm3477, %v3571, 0.0
    %3617 = vadd.xlane.f32.xlu0 %v3616
    %v3618 = vpop.xlane.xlu0 %3617
    %v3619 = vsel %vm3477, %v3573, 0.0
    %3620 = vadd.xlane.f32.xlu0 %v3619
    %v3621 = vpop.xlane.xlu0 %3620
    %v3622 = vlog2.pop %v3576
    %v3623 = vmul.f32 %v3622, 0.6931472
    %v3624 = vlog2.pop %v3579
    %v3625 = vmul.f32 %v3624, 0.6931472
    %v3626 = vlog2.pop %v3582
    %v3627 = vmul.f32 %v3626, 0.6931472
    %v3628 = vlog2.pop %v3585
    %v3629 = vmul.f32 %v3628, 0.6931472
    %v3630 = vlog2.pop %v3588
    %v3631 = vmul.f32 %v3630, 0.6931472
    %v3632 = vlog2.pop %v3591
    %v3633 = vmul.f32 %v3632, 0.6931472
    %v3634 = vlog2.pop %v3594
    %v3635 = vmul.f32 %v3634, 0.6931472
    %v3636 = vlog2.pop %v3597
    %v3637 = vmul.f32 %v3636, 0.6931472
    %v3638 = vlog2.pop %v3600
    %v3639 = vmul.f32 %v3638, 0.6931472
    %v3640 = vlog2.pop %v3603
    %v3641 = vmul.f32 %v3640, 0.6931472
    %v3642 = vlog2.pop %v3606
    %v3643 = vmul.f32 %v3642, 0.6931472
    %v3644 = vlog2.pop %v3609
    %v3645 = vmul.f32 %v3644, 0.6931472
    %v3646 = vlog2.pop %v3612
    %v3647 = vmul.f32 %v3646, 0.6931472
    %v3648 = vlog2.pop %v3615
    %v3649 = vmul.f32 %v3648, 0.6931472
    %v3650 = vlog2.pop %v3618
    %v3651 = vmul.f32 %v3650, 0.6931472
    %v3652 = vlog2.pop %v3621
    %v3653 = vmul.f32 %v3652, 0.6931472
    %v3654 = vsub.f32 %v3526, %v3623
    %v3655 = vsub.f32 %v3527, %v3625
    %v3656 = vsub.f32 %v3528, %v3627
    %v3657 = vsub.f32 %v3529, %v3629
    %v3658 = vsub.f32 %v3530, %v3631
    %v3659 = vsub.f32 %v3531, %v3633
    %v3660 = vsub.f32 %v3532, %v3635
    %v3661 = vsub.f32 %v3533, %v3637
    %v3662 = vsub.f32 %v3534, %v3639
    %v3663 = vsub.f32 %v3535, %v3641
    %v3664 = vsub.f32 %v3536, %v3643
    %v3665 = vsub.f32 %v3537, %v3645
    %v3666 = vsub.f32 %v3538, %v3647
    %v3667 = vsub.f32 %v3539, %v3649
    %v3668 = vsub.f32 %v3540, %v3651
    %v3669 = vsub.f32 %v3541, %v3653
    %3670 = vst.msk [vmem:[%s7] sm:$0xff] %vm3477, %v3654
    %3671 = vst.msk [vmem:[%s7 + $0x8] sm:$0xff] %vm3477, %v3655
    %3672 = vst.msk [vmem:[%s7 + $0x10] sm:$0xff] %vm3477, %v3656
    %3673 = vst.msk [vmem:[%s7 + $0x18] sm:$0xff] %vm3477, %v3657
    %3674 = vst.msk [vmem:[%s7 + $0x20] sm:$0xff] %vm3477, %v3658
    %3675 = vst.msk [vmem:[%s7 + $0x28] sm:$0xff] %vm3477, %v3659
    %3676 = vst.msk [vmem:[%s7 + $0x30] sm:$0xff] %vm3477, %v3660
    %3677 = vst.msk [vmem:[%s7 + $0x38] sm:$0xff] %vm3477, %v3661
    %3678 = vst.msk [vmem:[%s7 + $0x40] sm:$0xff] %vm3477, %v3662
    %3679 = vst.msk [vmem:[%s7 + $0x48] sm:$0xff] %vm3477, %v3663
    %3680 = vst.msk [vmem:[%s7 + $0x50] sm:$0xff] %vm3477, %v3664
    %3681 = vst.msk [vmem:[%s7 + $0x58] sm:$0xff] %vm3477, %v3665
    %3682 = vst.msk [vmem:[%s7 + $0x60] sm:$0xff] %vm3477, %v3666
    %3683 = vst.msk [vmem:[%s7 + $0x68] sm:$0xff] %vm3477, %v3667
    %3684 = vst.msk [vmem:[%s7 + $0x70] sm:$0xff] %vm3477, %v3668
    %3685 = vst.msk [vmem:[%s7 + $0x78] sm:$0xff] %vm3477, %v3669
    // Predicated region
    $region34: #{net_forward.1} parent=1 // pred_check
      _
    $region35: #{net_forward.1} parent=1 // pred_check_branch
      %3687 = sbr.rel (0) target = $region37
    $region36: #{net_forward.1} parent=1 // pred_region
      _
    $region37: #{net_forward.1} parent=1 // pred_fallthru
      _
    // Predicated region
    $region38: #{net_forward.1} parent=1 // pred_check
      _
    $region39: #{net_forward.1} parent=1 // pred_check_branch
      %3689 = sbr.rel (0) target = $region41
    $region40: #{net_forward.1} parent=1 // pred_region
      _
    $region41: #{net_forward.1} parent=1 // pred_fallthru
      _
    %3690 = vsyncpa [#allocation3], 1

</llo_original>
